<compile_context>
chip_gen: v6e
topology: v6e:2x2x1
jax: 0.10.0
libtpu: 0.0.40
codegen_flags: <defaults>
</compile_context>

<pallas_src>
import functools

import jax
import jax.numpy as jnp
from jax import lax
from jax.experimental import pallas as pl
from jax.experimental.pallas import tpu as pltpu

# MXU operand dtype (accumulation is always f32).  Set to jnp.float32 for exactness.
PREC = jnp.bfloat16


# -----------------------------------------------------------------------------
# Fused unetUp kernel.  One grid step = one batch element.
#
# All image tensors are channel-first and flattened to (C, H*W) with a single
# shared row stride `wc` (= W1); a conv tap (ky,kx) is then just a lane-offset
# slice of the flat canvas, and each tap is one (Cout,Cin)@(Cin,L) MXU matmul.
# Garbage columns beyond each stage's valid region never reach valid outputs.
# -----------------------------------------------------------------------------
def _unet_up_kernel(x1_ref, x2_ref, wup_ref, bup_ref, w1s_ref, w1u_ref, b1_ref,
                    w2_ref, b2_ref, o_ref, pad_ref, *,
                    wc, h2, w2, crop, la_up, la1, l_out):
    cout = o_ref.shape[1]
    ku = wup_ref.shape[0]                              # 2 (ConvTranspose2d kernel)
    kc = w1s_ref.shape[0]                              # 3 (unetConv2 kernels)

    # Stage 0 -- embed up_in (= inputs2[:, :C//2]) into a zeroed canvas with row
    # stride `wc`, shifted by (+1,+1).  This IS the zero padding that turns the
    # stride-1 ConvTranspose2d into a VALID conv with the flipped kernel
    # (replaces the XLA-side jnp.pad; copy happens VMEM->VMEM).
    pad_ref[...] = jnp.zeros_like(pad_ref)
    x2 = x2_ref[0]                                     # (Cmid, H2*W2), PREC
    for r in range(h2):
        d = (r + 1) * wc + 1
        pad_ref[:, d:d + w2] = x2[:, r * w2:(r + 1) * w2].astype(pad_ref.dtype)
    padded = pad_ref[...].astype(x2.dtype)             # (Cmid, Lpad)

    # Stage 1 -- outputs2 = ConvTranspose2d(up_in): one full-image matmul per tap,
    # accumulator initialised with the broadcast bias.  Valid region (H2+1, W2+1).
    acc = jnp.broadcast_to(bup_ref[...], (cout, la_up))
    for ky in range(ku):
        for kx in range(ku):
            s = ky * wc + kx
            acc = acc + jnp.dot(wup_ref[ky, kx], padded[:, s:s + la_up],
                                preferred_element_type=jnp.float32)
    up = acc.astype(x2.dtype)                          # (Cout, La_up)

    # Stage 2 -- conv1(3x3 VALID) + ReLU over concat([crop(inputs1), outputs2]).
    # The concat never materialises: the skip half and the up half of w1 both
    # accumulate into the same f32 accumulator.  The centre crop of inputs1 is a
    # constant flat offset into its (C1, H1*W1) view.  Valid region (H2-1, W2-1).
    x1 = x1_ref[0]                                     # (C1, H1*W1), PREC
    acc = jnp.broadcast_to(b1_ref[...], (cout, la1))
    for ky in range(kc):
        for kx in range(kc):
            s = ky * wc + kx
            acc = acc + jnp.dot(w1s_ref[ky, kx], x1[:, crop + s:crop + s + la1],
                                preferred_element_type=jnp.float32)
            acc = acc + jnp.dot(w1u_ref[ky, kx], up[:, s:s + la1],
                                preferred_element_type=jnp.float32)
    h1 = jnp.maximum(acc, 0.0).astype(x2.dtype)        # (Cout, La1)

    # Stage 3 -- conv2(3x3 VALID) + ReLU; single lane-dense (Cout, OH*wc) store.
    acc = jnp.broadcast_to(b2_ref[...], (cout, l_out))
    for ky in range(kc):
        for kx in range(kc):
            s = ky * wc + kx
            acc = acc + jnp.dot(w2_ref[ky, kx], h1[:, s:s + l_out],
                                preferred_element_type=jnp.float32)
    o_ref[0] = jnp.maximum(acc, 0.0).astype(o_ref.dtype)


# -----------------------------------------------------------------------------
# Wrapper: NCHW in, NCHW out (no layout transposes -- the kernel is channel-first).
# -----------------------------------------------------------------------------
def unet_up_forward(inputs1, inputs2, params):
    n, c1, h1, w1 = inputs1.shape
    _, c2, h2, w2 = inputs2.shape
    cmid = c2 // 2                                     # ch_select
    ku = params["w_up"].shape[0]
    kc = params["w1s"].shape[0]
    cout = params["w_up"].shape[2]
    assert params["w_up"].shape == (ku, ku, cout, cmid)

    h_up, w_up = h2 + ku - 1, w2 + ku - 1              # ConvTranspose2d output size
    offset = h1 - h_up
    # mirrors torch's inputs1[:, :, p:-p, p:-p]; odd offsets unsupported (as in torch)
    assert offset > 0 and offset % 2 == 0, "odd/zero crop offset unsupported"
    p = offset // 2
    assert h1 - 2 * p == h_up and w1 - 2 * p == w_up, "crop mismatch vs up-sampled size"

    oh, ow = h_up - 2 * (kc - 1), w_up - 2 * (kc - 1)  # after two VALID 3x3 convs
    wc = w1                                            # shared canvas row stride
    assert w2 + 2 * (ku - 1) <= wc
    l_out = oh * wc
    la1 = (kc - 1) * (wc + 1) + l_out
    la_up = (kc - 1) * (wc + 1) + la1
    l_pad = (ku - 1) * (wc + 1) + la_up
    l_x1 = h1 * w1
    assert (p + kc - 1) * (wc + 1) + la1 <= l_x1
    assert h2 * wc + 1 + w2 <= l_pad

    x1_flat = inputs1.astype(PREC).reshape(n, c1, l_x1)
    x2_flat = inputs2.astype(PREC).reshape(n, c2, h2 * w2)

    kernel = functools.partial(
        _unet_up_kernel, wc=wc, h2=h2, w2=w2, crop=p * wc + p,
        la_up=la_up, la1=la1, l_out=l_out)

    out = pl.pallas_call(
        kernel,
        out_shape=jax.ShapeDtypeStruct((n, cout, l_out), jnp.float32),
        grid=(n,),
        in_specs=[
            pl.BlockSpec((1, c1, l_x1), lambda i: (i, 0, 0)),
            # Only the first half of inputs2's channels is DMA'd: the ch_select
            # slice is done by the BlockSpec, not by an XLA slice.
            pl.BlockSpec((1, cmid, h2 * w2), lambda i: (i, 0, 0)),
            pl.BlockSpec((ku, ku, cout, cmid), lambda i: (0, 0, 0, 0)),
            pl.BlockSpec((cout, 1), lambda i: (0, 0)),
            pl.BlockSpec((kc, kc, cout, c1), lambda i: (0, 0, 0, 0)),
            pl.BlockSpec((kc, kc, cout, cout), lambda i: (0, 0, 0, 0)),
            pl.BlockSpec((cout, 1), lambda i: (0, 0)),
            pl.BlockSpec((kc, kc, cout, cout), lambda i: (0, 0, 0, 0)),
            pl.BlockSpec((cout, 1), lambda i: (0, 0)),
        ],
        out_specs=pl.BlockSpec((1, cout, l_out), lambda i: (i, 0, 0)),
        scratch_shapes=[pltpu.VMEM((cmid, l_pad), jnp.float32)],
        compiler_params=pltpu.CompilerParams(dimension_semantics=("parallel",)),
    )(x1_flat, x2_flat, params["w_up"], params["b_up"], params["w1s"],
      params["w1u"], params["b1"], params["w2"], params["b2"])

    # Cheap final trim of the flat canvas (tiny tensor); kernel stores stay lane-dense.
    return out.reshape(n, cout, oh, wc)[:, :, :, :ow]


# -----------------------------------------------------------------------------
# Parameter preparation: PyTorch layouts -> per-tap (kH, kW, Out, In) matrices.
# -----------------------------------------------------------------------------
def prepare_params(w_up_pt, b_up, w1_pt, b1, w2_pt, b2, c_skip):
    def to_taps(w):                                    # OIHW -> (kH, kW, O, I)
        return jnp.transpose(w, (2, 3, 0, 1))
    # ConvTranspose2d weight (I, O, kH, kW): spatial flip + swap -> (kH, kW, O, I),
    # so the transposed conv becomes a VALID conv of the zero-padded input.
    w_up_taps = jnp.transpose(w_up_pt[:, :, ::-1, ::-1], (2, 3, 1, 0))
    w1_taps = to_taps(w1_pt)                           # split: skip half | up half
    col = lambda b: jnp.reshape(b, (-1, 1)).astype(jnp.float32)
    return dict(
        w_up=w_up_taps.astype(PREC), b_up=col(b_up),
        w1s=w1_taps[..., :c_skip].astype(PREC),
        w1u=w1_taps[..., c_skip:].astype(PREC), b1=col(b1),
        w2=to_taps(w2_pt).astype(PREC), b2=col(b2),
    )


# -----------------------------------------------------------------------------
# Pure-JAX/XLA reference with identical operand rounding points (PREC matmul
# operands, f32 accumulation) so the comparison isolates the Pallas lowering.
# -----------------------------------------------------------------------------
def _conv_nchw_ref(x, w_oihw, b, relu):
    out = lax.conv_general_dilated(
        x, w_oihw, window_strides=(1, 1), padding="VALID",
        dimension_numbers=("NCHW", "OIHW", "NCHW"),
        preferred_element_type=jnp.float32)
    out = out + b.reshape(1, -1, 1, 1)
    return jnp.maximum(out, 0.0) if relu else out


def unet_up_reference(inputs1, inputs2, params):
    taps_to_oihw = lambda w: jnp.transpose(w, (2, 3, 0, 1))
    x1 = inputs1.astype(PREC)
    x2 = inputs2.astype(PREC)
    cmid = x2.shape[1] // 2
    up_pad = jnp.pad(x2[:, :cmid], ((0, 0), (0, 0), (1, 1), (1, 1)))
    o2 = _conv_nchw_ref(up_pad, taps_to_oihw(params["w_up"]), params["b_up"], False)
    p = (x1.shape[2] - o2.shape[2]) // 2
    o1 = x1[:, :, p:x1.shape[2] - p, p:x1.shape[3] - p]
    cat = jnp.concatenate([o1, o2.astype(PREC)], axis=1)
    w1 = jnp.concatenate([taps_to_oihw(params["w1s"]),
                          taps_to_oihw(params["w1u"])], axis=1)
    h = _conv_nchw_ref(cat, w1, params["b1"], True).astype(PREC)
    h = _conv_nchw_ref(h, taps_to_oihw(params["w2"]), params["b2"], True)
    return h


# -----------------------------------------------------------------------------
if __name__ == "__main__":
    key = jax.random.PRNGKey(0)
    ks = jax.random.split(key, 8)

    N = 2
    in_size, out_size = 8, 4
    c_skip = in_size - out_size        # skip channels, so the concat has in_size channels
    c_deep = 2 * in_size               # inputs2 channels (forward keeps the first half)
    H1 = W1 = 20                       # inputs1 spatial
    H2 = W2 = 15                       # inputs2 spatial -> up: 16x16, crop p=2, out: 12x12

    inputs1 = jax.random.normal(ks[0], (N, c_skip, H1, W1), jnp.float32)
    inputs2 = jax.random.normal(ks[1], (N, c_deep, H2, W2), jnp.float32)

    # Synthetic parameters in the native PyTorch layouts.
    w_up_pt = jax.random.normal(ks[2], (in_size, out_size, 2, 2), jnp.float32) * 0.1
    b_up = jax.random.normal(ks[3], (out_size,), jnp.float32) * 0.1
    w1_pt = jax.random.normal(ks[4], (out_size, in_size, 3, 3), jnp.float32) * 0.1
    b1 = jax.random.normal(ks[5], (out_size,), jnp.float32) * 0.1
    w2_pt = jax.random.normal(ks[6], (out_size, out_size, 3, 3), jnp.float32) * 0.1
    b2 = jax.random.normal(ks[7], (out_size,), jnp.float32) * 0.1

    params = prepare_params(w_up_pt, b_up, w1_pt, b1, w2_pt, b2, c_skip)

    out = jax.jit(unet_up_forward)(inputs1, inputs2, params)
    out = jax.block_until_ready(out)

    ref = unet_up_reference(inputs1, inputs2, params)
    assert out.shape == (N, out_size, 12, 12), out.shape
    # Both paths use identical bf16-rounded operands with f32 accumulation; the
    # tolerance only absorbs summation-order / bf16 re-rounding of intermediates.
    err = float(jnp.max(jnp.abs(out - ref)))
    assert jnp.allclose(out, ref, atol=1e-2, rtol=1e-2), f"mismatch vs reference: {err}"

    print("KERNEL_OK")
</pallas_src>

<mosaic_0001>
module attributes {stable_mosaic.version = 11 : i64} {
  func.func @_unet_up_kernel(%arg0: i32, %arg1: memref<1x4x400xbf16, #tpu.memory_space<vmem>>, %arg2: memref<1x8x225xbf16, #tpu.memory_space<vmem>>, %arg3: memref<2x2x4x8xbf16, #tpu.memory_space<vmem>>, %arg4: memref<4x1xf32, #tpu.memory_space<vmem>>, %arg5: memref<3x3x4x4xbf16, #tpu.memory_space<vmem>>, %arg6: memref<3x3x4x4xbf16, #tpu.memory_space<vmem>>, %arg7: memref<4x1xf32, #tpu.memory_space<vmem>>, %arg8: memref<3x3x4x4xbf16, #tpu.memory_space<vmem>>, %arg9: memref<4x1xf32, #tpu.memory_space<vmem>>, %arg10: memref<1x4x240xf32, #tpu.memory_space<vmem>>, %arg11: memref<8x345xf32, #tpu.memory_space<vmem>>) attributes {dimension_semantics = [#tpu.dimension_semantics<parallel>], iteration_bounds = array<i64: 2>, scalar_prefetch = 0 : i64, scratch_operands = 1 : i64, tpu.core_type = #tpu.core_type<tc>, window_params = [{transform_indices = @transform_0, window_bounds = array<i64: 1, 4, 400>}, {transform_indices = @transform_1, window_bounds = array<i64: 1, 8, 225>}, {pipeline_mode = #tpu.pipeline_mode<synchronous>, transform_indices = @transform_2, window_bounds = array<i64: 2, 2, 4, 8>}, {pipeline_mode = #tpu.pipeline_mode<synchronous>, transform_indices = @transform_3, window_bounds = array<i64: 4, 1>}, {pipeline_mode = #tpu.pipeline_mode<synchronous>, transform_indices = @transform_4, window_bounds = array<i64: 3, 3, 4, 4>}, {pipeline_mode = #tpu.pipeline_mode<synchronous>, transform_indices = @transform_5, window_bounds = array<i64: 3, 3, 4, 4>}, {pipeline_mode = #tpu.pipeline_mode<synchronous>, transform_indices = @transform_6, window_bounds = array<i64: 4, 1>}, {pipeline_mode = #tpu.pipeline_mode<synchronous>, transform_indices = @transform_7, window_bounds = array<i64: 3, 3, 4, 4>}, {pipeline_mode = #tpu.pipeline_mode<synchronous>, transform_indices = @transform_8, window_bounds = array<i64: 4, 1>}, {transform_indices = @transform_9, window_bounds = array<i64: 1, 4, 240>}]} {
    %cst = arith.constant 0.000000e+00 : f32
    %0 = vector.broadcast %cst : f32 to vector<8x345xf32>
    %c0 = arith.constant 0 : index
    %c0_0 = arith.constant 0 : index
    %1 = vector.load %arg11[%c0, %c0_0] : memref<8x345xf32, #tpu.memory_space<vmem>>, vector<8x345xf32>
    tpu.vector_store %arg11[%c0, %c0_0], %0 {strides = array<i32>} : memref<8x345xf32, #tpu.memory_space<vmem>>, vector<8x345xf32>,
    %c0_1 = arith.constant 0 : index
    %c0_2 = arith.constant 0 : index
    %c0_3 = arith.constant 0 : index
    %2 = vector.load %arg2[%c0_1, %c0_2, %c0_3] : memref<1x8x225xbf16, #tpu.memory_space<vmem>>, vector<1x8x225xbf16>
    %3 = vector.shape_cast %2 : vector<1x8x225xbf16> to vector<8x225xbf16>
    %4 = vector.extract_strided_slice %3 {offsets = [0, 0], sizes = [8, 15], strides = [1, 1]} : vector<8x225xbf16> to vector<8x15xbf16>
    %5 = arith.extf %4 : vector<8x15xbf16> to vector<8x15xf32>
    %c0_4 = arith.constant 0 : index
    %c21 = arith.constant 21 : index
    %6 = vector.load %arg11[%c0_4, %c21] : memref<8x345xf32, #tpu.memory_space<vmem>>, vector<8x15xf32>
    tpu.vector_store %arg11[%c0_4, %c21], %5 {strides = array<i32>} : memref<8x345xf32, #tpu.memory_space<vmem>>, vector<8x15xf32>,
    %7 = vector.extract_strided_slice %3 {offsets = [0, 15], sizes = [8, 15], strides = [1, 1]} : vector<8x225xbf16> to vector<8x15xbf16>
    %8 = arith.extf %7 : vector<8x15xbf16> to vector<8x15xf32>
    %c0_5 = arith.constant 0 : index
    %c41 = arith.constant 41 : index
    %9 = vector.load %arg11[%c0_5, %c41] : memref<8x345xf32, #tpu.memory_space<vmem>>, vector<8x15xf32>
    tpu.vector_store %arg11[%c0_5, %c41], %8 {strides = array<i32>} : memref<8x345xf32, #tpu.memory_space<vmem>>, vector<8x15xf32>,
    %10 = vector.extract_strided_slice %3 {offsets = [0, 30], sizes = [8, 15], strides = [1, 1]} : vector<8x225xbf16> to vector<8x15xbf16>
    %11 = arith.extf %10 : vector<8x15xbf16> to vector<8x15xf32>
    %c0_6 = arith.constant 0 : index
    %c61 = arith.constant 61 : index
    %12 = vector.load %arg11[%c0_6, %c61] : memref<8x345xf32, #tpu.memory_space<vmem>>, vector<8x15xf32>
    tpu.vector_store %arg11[%c0_6, %c61], %11 {strides = array<i32>} : memref<8x345xf32, #tpu.memory_space<vmem>>, vector<8x15xf32>,
    %13 = vector.extract_strided_slice %3 {offsets = [0, 45], sizes = [8, 15], strides = [1, 1]} : vector<8x225xbf16> to vector<8x15xbf16>
    %14 = arith.extf %13 : vector<8x15xbf16> to vector<8x15xf32>
    %c0_7 = arith.constant 0 : index
    %c81 = arith.constant 81 : index
    %15 = vector.load %arg11[%c0_7, %c81] : memref<8x345xf32, #tpu.memory_space<vmem>>, vector<8x15xf32>
    tpu.vector_store %arg11[%c0_7, %c81], %14 {strides = array<i32>} : memref<8x345xf32, #tpu.memory_space<vmem>>, vector<8x15xf32>,
    %16 = vector.extract_strided_slice %3 {offsets = [0, 60], sizes = [8, 15], strides = [1, 1]} : vector<8x225xbf16> to vector<8x15xbf16>
    %17 = arith.extf %16 : vector<8x15xbf16> to vector<8x15xf32>
    %c0_8 = arith.constant 0 : index
    %c101 = arith.constant 101 : index
    %18 = vector.load %arg11[%c0_8, %c101] : memref<8x345xf32, #tpu.memory_space<vmem>>, vector<8x15xf32>
    tpu.vector_store %arg11[%c0_8, %c101], %17 {strides = array<i32>} : memref<8x345xf32, #tpu.memory_space<vmem>>, vector<8x15xf32>,
    %19 = vector.extract_strided_slice %3 {offsets = [0, 75], sizes = [8, 15], strides = [1, 1]} : vector<8x225xbf16> to vector<8x15xbf16>
    %20 = arith.extf %19 : vector<8x15xbf16> to vector<8x15xf32>
    %c0_9 = arith.constant 0 : index
    %c121 = arith.constant 121 : index
    %21 = vector.load %arg11[%c0_9, %c121] : memref<8x345xf32, #tpu.memory_space<vmem>>, vector<8x15xf32>
    tpu.vector_store %arg11[%c0_9, %c121], %20 {strides = array<i32>} : memref<8x345xf32, #tpu.memory_space<vmem>>, vector<8x15xf32>,
    %22 = vector.extract_strided_slice %3 {offsets = [0, 90], sizes = [8, 15], strides = [1, 1]} : vector<8x225xbf16> to vector<8x15xbf16>
    %23 = arith.extf %22 : vector<8x15xbf16> to vector<8x15xf32>
    %c0_10 = arith.constant 0 : index
    %c141 = arith.constant 141 : index
    %24 = vector.load %arg11[%c0_10, %c141] : memref<8x345xf32, #tpu.memory_space<vmem>>, vector<8x15xf32>
    tpu.vector_store %arg11[%c0_10, %c141], %23 {strides = array<i32>} : memref<8x345xf32, #tpu.memory_space<vmem>>, vector<8x15xf32>,
    %25 = vector.extract_strided_slice %3 {offsets = [0, 105], sizes = [8, 15], strides = [1, 1]} : vector<8x225xbf16> to vector<8x15xbf16>
    %26 = arith.extf %25 : vector<8x15xbf16> to vector<8x15xf32>
    %c0_11 = arith.constant 0 : index
    %c161 = arith.constant 161 : index
    %27 = vector.load %arg11[%c0_11, %c161] : memref<8x345xf32, #tpu.memory_space<vmem>>, vector<8x15xf32>
    tpu.vector_store %arg11[%c0_11, %c161], %26 {strides = array<i32>} : memref<8x345xf32, #tpu.memory_space<vmem>>, vector<8x15xf32>,
    %28 = vector.extract_strided_slice %3 {offsets = [0, 120], sizes = [8, 15], strides = [1, 1]} : vector<8x225xbf16> to vector<8x15xbf16>
    %29 = arith.extf %28 : vector<8x15xbf16> to vector<8x15xf32>
    %c0_12 = arith.constant 0 : index
    %c181 = arith.constant 181 : index
    %30 = vector.load %arg11[%c0_12, %c181] : memref<8x345xf32, #tpu.memory_space<vmem>>, vector<8x15xf32>
    tpu.vector_store %arg11[%c0_12, %c181], %29 {strides = array<i32>} : memref<8x345xf32, #tpu.memory_space<vmem>>, vector<8x15xf32>,
    %31 = vector.extract_strided_slice %3 {offsets = [0, 135], sizes = [8, 15], strides = [1, 1]} : vector<8x225xbf16> to vector<8x15xbf16>
    %32 = arith.extf %31 : vector<8x15xbf16> to vector<8x15xf32>
    %c0_13 = arith.constant 0 : index
    %c201 = arith.constant 201 : index
    %33 = vector.load %arg11[%c0_13, %c201] : memref<8x345xf32, #tpu.memory_space<vmem>>, vector<8x15xf32>
    tpu.vector_store %arg11[%c0_13, %c201], %32 {strides = array<i32>} : memref<8x345xf32, #tpu.memory_space<vmem>>, vector<8x15xf32>,
    %34 = vector.extract_strided_slice %3 {offsets = [0, 150], sizes = [8, 15], strides = [1, 1]} : vector<8x225xbf16> to vector<8x15xbf16>
    %35 = arith.extf %34 : vector<8x15xbf16> to vector<8x15xf32>
    %c0_14 = arith.constant 0 : index
    %c221 = arith.constant 221 : index
    %36 = vector.load %arg11[%c0_14, %c221] : memref<8x345xf32, #tpu.memory_space<vmem>>, vector<8x15xf32>
    tpu.vector_store %arg11[%c0_14, %c221], %35 {strides = array<i32>} : memref<8x345xf32, #tpu.memory_space<vmem>>, vector<8x15xf32>,
    %37 = vector.extract_strided_slice %3 {offsets = [0, 165], sizes = [8, 15], strides = [1, 1]} : vector<8x225xbf16> to vector<8x15xbf16>
    %38 = arith.extf %37 : vector<8x15xbf16> to vector<8x15xf32>
    %c0_15 = arith.constant 0 : index
    %c241 = arith.constant 241 : index
    %39 = vector.load %arg11[%c0_15, %c241] : memref<8x345xf32, #tpu.memory_space<vmem>>, vector<8x15xf32>
    tpu.vector_store %arg11[%c0_15, %c241], %38 {strides = array<i32>} : memref<8x345xf32, #tpu.memory_space<vmem>>, vector<8x15xf32>,
    %40 = vector.extract_strided_slice %3 {offsets = [0, 180], sizes = [8, 15], strides = [1, 1]} : vector<8x225xbf16> to vector<8x15xbf16>
    %41 = arith.extf %40 : vector<8x15xbf16> to vector<8x15xf32>
    %c0_16 = arith.constant 0 : index
    %c261 = arith.constant 261 : index
    %42 = vector.load %arg11[%c0_16, %c261] : memref<8x345xf32, #tpu.memory_space<vmem>>, vector<8x15xf32>
    tpu.vector_store %arg11[%c0_16, %c261], %41 {strides = array<i32>} : memref<8x345xf32, #tpu.memory_space<vmem>>, vector<8x15xf32>,
    %43 = vector.extract_strided_slice %3 {offsets = [0, 195], sizes = [8, 15], strides = [1, 1]} : vector<8x225xbf16> to vector<8x15xbf16>
    %44 = arith.extf %43 : vector<8x15xbf16> to vector<8x15xf32>
    %c0_17 = arith.constant 0 : index
    %c281 = arith.constant 281 : index
    %45 = vector.load %arg11[%c0_17, %c281] : memref<8x345xf32, #tpu.memory_space<vmem>>, vector<8x15xf32>
    tpu.vector_store %arg11[%c0_17, %c281], %44 {strides = array<i32>} : memref<8x345xf32, #tpu.memory_space<vmem>>, vector<8x15xf32>,
    %46 = vector.extract_strided_slice %3 {offsets = [0, 210], sizes = [8, 15], strides = [1, 1]} : vector<8x225xbf16> to vector<8x15xbf16>
    %47 = arith.extf %46 : vector<8x15xbf16> to vector<8x15xf32>
    %c0_18 = arith.constant 0 : index
    %c301 = arith.constant 301 : index
    %48 = vector.load %arg11[%c0_18, %c301] : memref<8x345xf32, #tpu.memory_space<vmem>>, vector<8x15xf32>
    tpu.vector_store %arg11[%c0_18, %c301], %47 {strides = array<i32>} : memref<8x345xf32, #tpu.memory_space<vmem>>, vector<8x15xf32>,
    %c0_19 = arith.constant 0 : index
    %c0_20 = arith.constant 0 : index
    %49 = vector.load %arg11[%c0_19, %c0_20] : memref<8x345xf32, #tpu.memory_space<vmem>>, vector<8x345xf32>
    %50 = arith.truncf %49 : vector<8x345xf32> to vector<8x345xbf16>
    %c0_21 = arith.constant 0 : index
    %c0_22 = arith.constant 0 : index
    %51 = vector.load %arg4[%c0_21, %c0_22] : memref<4x1xf32, #tpu.memory_space<vmem>>, vector<4x1xf32>
    %52 = vector.shape_cast %51 : vector<4x1xf32> to vector<4x1xf32>
    %53 = vector.broadcast %52 : vector<4x1xf32> to vector<4x324xf32>
    %c0_23 = arith.constant 0 : index
    %c0_24 = arith.constant 0 : index
    %c0_25 = arith.constant 0 : index
    %c0_26 = arith.constant 0 : index
    %54 = vector.load %arg3[%c0_23, %c0_24, %c0_25, %c0_26] : memref<2x2x4x8xbf16, #tpu.memory_space<vmem>>, vector<1x1x4x8xbf16>
    %55 = vector.shape_cast %54 : vector<1x1x4x8xbf16> to vector<4x8xbf16>
    %56 = vector.extract_strided_slice %50 {offsets = [0, 0], sizes = [8, 324], strides = [1, 1]} : vector<8x345xbf16> to vector<8x324xbf16>
    %cst_27 = arith.constant dense<0.000000e+00> : vector<4x324xf32>
    %57 = tpu.matmul %55, %56, %cst_27 {dimension_numbers = #tpu.dot_dimension_numbers<[1], [0], [0], [1], [0, 0, 1, 1], [], []>} : vector<4x8xbf16>, vector<8x324xbf16>, vector<4x324xf32> -> vector<4x324xf32>
    %58 = arith.addf %53, %57 : vector<4x324xf32>
    %c0_28 = arith.constant 0 : index
    %c1 = arith.constant 1 : index
    %c0_29 = arith.constant 0 : index
    %c0_30 = arith.constant 0 : index
    %59 = vector.load %arg3[%c0_28, %c1, %c0_29, %c0_30] : memref<2x2x4x8xbf16, #tpu.memory_space<vmem>>, vector<1x1x4x8xbf16>
    %60 = vector.shape_cast %59 : vector<1x1x4x8xbf16> to vector<4x8xbf16>
    %61 = vector.extract_strided_slice %50 {offsets = [0, 1], sizes = [8, 324], strides = [1, 1]} : vector<8x345xbf16> to vector<8x324xbf16>
    %cst_31 = arith.constant dense<0.000000e+00> : vector<4x324xf32>
    %62 = tpu.matmul %60, %61, %cst_31 {dimension_numbers = #tpu.dot_dimension_numbers<[1], [0], [0], [1], [0, 0, 1, 1], [], []>} : vector<4x8xbf16>, vector<8x324xbf16>, vector<4x324xf32> -> vector<4x324xf32>
    %63 = arith.addf %58, %62 : vector<4x324xf32>
    %c1_32 = arith.constant 1 : index
    %c0_33 = arith.constant 0 : index
    %c0_34 = arith.constant 0 : index
    %c0_35 = arith.constant 0 : index
    %64 = vector.load %arg3[%c1_32, %c0_33, %c0_34, %c0_35] : memref<2x2x4x8xbf16, #tpu.memory_space<vmem>>, vector<1x1x4x8xbf16>
    %65 = vector.shape_cast %64 : vector<1x1x4x8xbf16> to vector<4x8xbf16>
    %66 = vector.extract_strided_slice %50 {offsets = [0, 20], sizes = [8, 324], strides = [1, 1]} : vector<8x345xbf16> to vector<8x324xbf16>
    %cst_36 = arith.constant dense<0.000000e+00> : vector<4x324xf32>
    %67 = tpu.matmul %65, %66, %cst_36 {dimension_numbers = #tpu.dot_dimension_numbers<[1], [0], [0], [1], [0, 0, 1, 1], [], []>} : vector<4x8xbf16>, vector<8x324xbf16>, vector<4x324xf32> -> vector<4x324xf32>
    %68 = arith.addf %63, %67 : vector<4x324xf32>
    %c1_37 = arith.constant 1 : index
    %c1_38 = arith.constant 1 : index
    %c0_39 = arith.constant 0 : index
    %c0_40 = arith.constant 0 : index
    %69 = vector.load %arg3[%c1_37, %c1_38, %c0_39, %c0_40] : memref<2x2x4x8xbf16, #tpu.memory_space<vmem>>, vector<1x1x4x8xbf16>
    %70 = vector.shape_cast %69 : vector<1x1x4x8xbf16> to vector<4x8xbf16>
    %71 = vector.extract_strided_slice %50 {offsets = [0, 21], sizes = [8, 324], strides = [1, 1]} : vector<8x345xbf16> to vector<8x324xbf16>
    %cst_41 = arith.constant dense<0.000000e+00> : vector<4x324xf32>
    %72 = tpu.matmul %70, %71, %cst_41 {dimension_numbers = #tpu.dot_dimension_numbers<[1], [0], [0], [1], [0, 0, 1, 1], [], []>} : vector<4x8xbf16>, vector<8x324xbf16>, vector<4x324xf32> -> vector<4x324xf32>
    %73 = arith.addf %68, %72 : vector<4x324xf32>
    %74 = arith.truncf %73 : vector<4x324xf32> to vector<4x324xbf16>
    %c0_42 = arith.constant 0 : index
    %c0_43 = arith.constant 0 : index
    %c0_44 = arith.constant 0 : index
    %75 = vector.load %arg1[%c0_42, %c0_43, %c0_44] : memref<1x4x400xbf16, #tpu.memory_space<vmem>>, vector<1x4x400xbf16>
    %76 = vector.shape_cast %75 : vector<1x4x400xbf16> to vector<4x400xbf16>
    %c0_45 = arith.constant 0 : index
    %c0_46 = arith.constant 0 : index
    %77 = vector.load %arg7[%c0_45, %c0_46] : memref<4x1xf32, #tpu.memory_space<vmem>>, vector<4x1xf32>
    %78 = vector.shape_cast %77 : vector<4x1xf32> to vector<4x1xf32>
    %79 = vector.broadcast %78 : vector<4x1xf32> to vector<4x282xf32>
    %c0_47 = arith.constant 0 : index
    %c0_48 = arith.constant 0 : index
    %c0_49 = arith.constant 0 : index
    %c0_50 = arith.constant 0 : index
    %80 = vector.load %arg5[%c0_47, %c0_48, %c0_49, %c0_50] : memref<3x3x4x4xbf16, #tpu.memory_space<vmem>>, vector<1x1x4x4xbf16>
    %81 = vector.shape_cast %80 : vector<1x1x4x4xbf16> to vector<4x4xbf16>
    %82 = vector.extract_strided_slice %76 {offsets = [0, 42], sizes = [4, 282], strides = [1, 1]} : vector<4x400xbf16> to vector<4x282xbf16>
    %cst_51 = arith.constant dense<0.000000e+00> : vector<4x282xf32>
    %83 = tpu.matmul %81, %82, %cst_51 {dimension_numbers = #tpu.dot_dimension_numbers<[1], [0], [0], [1], [0, 0, 1, 1], [], []>} : vector<4x4xbf16>, vector<4x282xbf16>, vector<4x282xf32> -> vector<4x282xf32>
    %84 = arith.addf %79, %83 : vector<4x282xf32>
    %c0_52 = arith.constant 0 : index
    %c0_53 = arith.constant 0 : index
    %c0_54 = arith.constant 0 : index
    %c0_55 = arith.constant 0 : index
    %85 = vector.load %arg6[%c0_52, %c0_53, %c0_54, %c0_55] : memref<3x3x4x4xbf16, #tpu.memory_space<vmem>>, vector<1x1x4x4xbf16>
    %86 = vector.shape_cast %85 : vector<1x1x4x4xbf16> to vector<4x4xbf16>
    %87 = vector.extract_strided_slice %74 {offsets = [0, 0], sizes = [4, 282], strides = [1, 1]} : vector<4x324xbf16> to vector<4x282xbf16>
    %cst_56 = arith.constant dense<0.000000e+00> : vector<4x282xf32>
    %88 = tpu.matmul %86, %87, %cst_56 {dimension_numbers = #tpu.dot_dimension_numbers<[1], [0], [0], [1], [0, 0, 1, 1], [], []>} : vector<4x4xbf16>, vector<4x282xbf16>, vector<4x282xf32> -> vector<4x282xf32>
    %89 = arith.addf %84, %88 : vector<4x282xf32>
    %c0_57 = arith.constant 0 : index
    %c1_58 = arith.constant 1 : index
    %c0_59 = arith.constant 0 : index
    %c0_60 = arith.constant 0 : index
    %90 = vector.load %arg5[%c0_57, %c1_58, %c0_59, %c0_60] : memref<3x3x4x4xbf16, #tpu.memory_space<vmem>>, vector<1x1x4x4xbf16>
    %91 = vector.shape_cast %90 : vector<1x1x4x4xbf16> to vector<4x4xbf16>
    %92 = vector.extract_strided_slice %76 {offsets = [0, 43], sizes = [4, 282], strides = [1, 1]} : vector<4x400xbf16> to vector<4x282xbf16>
    %cst_61 = arith.constant dense<0.000000e+00> : vector<4x282xf32>
    %93 = tpu.matmul %91, %92, %cst_61 {dimension_numbers = #tpu.dot_dimension_numbers<[1], [0], [0], [1], [0, 0, 1, 1], [], []>} : vector<4x4xbf16>, vector<4x282xbf16>, vector<4x282xf32> -> vector<4x282xf32>
    %94 = arith.addf %89, %93 : vector<4x282xf32>
    %c0_62 = arith.constant 0 : index
    %c1_63 = arith.constant 1 : index
    %c0_64 = arith.constant 0 : index
    %c0_65 = arith.constant 0 : index
    %95 = vector.load %arg6[%c0_62, %c1_63, %c0_64, %c0_65] : memref<3x3x4x4xbf16, #tpu.memory_space<vmem>>, vector<1x1x4x4xbf16>
    %96 = vector.shape_cast %95 : vector<1x1x4x4xbf16> to vector<4x4xbf16>
    %97 = vector.extract_strided_slice %74 {offsets = [0, 1], sizes = [4, 282], strides = [1, 1]} : vector<4x324xbf16> to vector<4x282xbf16>
    %cst_66 = arith.constant dense<0.000000e+00> : vector<4x282xf32>
    %98 = tpu.matmul %96, %97, %cst_66 {dimension_numbers = #tpu.dot_dimension_numbers<[1], [0], [0], [1], [0, 0, 1, 1], [], []>} : vector<4x4xbf16>, vector<4x282xbf16>, vector<4x282xf32> -> vector<4x282xf32>
    %99 = arith.addf %94, %98 : vector<4x282xf32>
    %c0_67 = arith.constant 0 : index
    %c2 = arith.constant 2 : index
    %c0_68 = arith.constant 0 : index
    %c0_69 = arith.constant 0 : index
    %100 = vector.load %arg5[%c0_67, %c2, %c0_68, %c0_69] : memref<3x3x4x4xbf16, #tpu.memory_space<vmem>>, vector<1x1x4x4xbf16>
    %101 = vector.shape_cast %100 : vector<1x1x4x4xbf16> to vector<4x4xbf16>
    %102 = vector.extract_strided_slice %76 {offsets = [0, 44], sizes = [4, 282], strides = [1, 1]} : vector<4x400xbf16> to vector<4x282xbf16>
    %cst_70 = arith.constant dense<0.000000e+00> : vector<4x282xf32>
    %103 = tpu.matmul %101, %102, %cst_70 {dimension_numbers = #tpu.dot_dimension_numbers<[1], [0], [0], [1], [0, 0, 1, 1], [], []>} : vector<4x4xbf16>, vector<4x282xbf16>, vector<4x282xf32> -> vector<4x282xf32>
    %104 = arith.addf %99, %103 : vector<4x282xf32>
    %c0_71 = arith.constant 0 : index
    %c2_72 = arith.constant 2 : index
    %c0_73 = arith.constant 0 : index
    %c0_74 = arith.constant 0 : index
    %105 = vector.load %arg6[%c0_71, %c2_72, %c0_73, %c0_74] : memref<3x3x4x4xbf16, #tpu.memory_space<vmem>>, vector<1x1x4x4xbf16>
    %106 = vector.shape_cast %105 : vector<1x1x4x4xbf16> to vector<4x4xbf16>
    %107 = vector.extract_strided_slice %74 {offsets = [0, 2], sizes = [4, 282], strides = [1, 1]} : vector<4x324xbf16> to vector<4x282xbf16>
    %cst_75 = arith.constant dense<0.000000e+00> : vector<4x282xf32>
    %108 = tpu.matmul %106, %107, %cst_75 {dimension_numbers = #tpu.dot_dimension_numbers<[1], [0], [0], [1], [0, 0, 1, 1], [], []>} : vector<4x4xbf16>, vector<4x282xbf16>, vector<4x282xf32> -> vector<4x282xf32>
    %109 = arith.addf %104, %108 : vector<4x282xf32>
    %c1_76 = arith.constant 1 : index
    %c0_77 = arith.constant 0 : index
    %c0_78 = arith.constant 0 : index
    %c0_79 = arith.constant 0 : index
    %110 = vector.load %arg5[%c1_76, %c0_77, %c0_78, %c0_79] : memref<3x3x4x4xbf16, #tpu.memory_space<vmem>>, vector<1x1x4x4xbf16>
    %111 = vector.shape_cast %110 : vector<1x1x4x4xbf16> to vector<4x4xbf16>
    %112 = vector.extract_strided_slice %76 {offsets = [0, 62], sizes = [4, 282], strides = [1, 1]} : vector<4x400xbf16> to vector<4x282xbf16>
    %cst_80 = arith.constant dense<0.000000e+00> : vector<4x282xf32>
    %113 = tpu.matmul %111, %112, %cst_80 {dimension_numbers = #tpu.dot_dimension_numbers<[1], [0], [0], [1], [0, 0, 1, 1], [], []>} : vector<4x4xbf16>, vector<4x282xbf16>, vector<4x282xf32> -> vector<4x282xf32>
    %114 = arith.addf %109, %113 : vector<4x282xf32>
    %c1_81 = arith.constant 1 : index
    %c0_82 = arith.constant 0 : index
    %c0_83 = arith.constant 0 : index
    %c0_84 = arith.constant 0 : index
    %115 = vector.load %arg6[%c1_81, %c0_82, %c0_83, %c0_84] : memref<3x3x4x4xbf16, #tpu.memory_space<vmem>>, vector<1x1x4x4xbf16>
    %116 = vector.shape_cast %115 : vector<1x1x4x4xbf16> to vector<4x4xbf16>
    %117 = vector.extract_strided_slice %74 {offsets = [0, 20], sizes = [4, 282], strides = [1, 1]} : vector<4x324xbf16> to vector<4x282xbf16>
    %cst_85 = arith.constant dense<0.000000e+00> : vector<4x282xf32>
    %118 = tpu.matmul %116, %117, %cst_85 {dimension_numbers = #tpu.dot_dimension_numbers<[1], [0], [0], [1], [0, 0, 1, 1], [], []>} : vector<4x4xbf16>, vector<4x282xbf16>, vector<4x282xf32> -> vector<4x282xf32>
    %119 = arith.addf %114, %118 : vector<4x282xf32>
    %c1_86 = arith.constant 1 : index
    %c1_87 = arith.constant 1 : index
    %c0_88 = arith.constant 0 : index
    %c0_89 = arith.constant 0 : index
    %120 = vector.load %arg5[%c1_86, %c1_87, %c0_88, %c0_89] : memref<3x3x4x4xbf16, #tpu.memory_space<vmem>>, vector<1x1x4x4xbf16>
    %121 = vector.shape_cast %120 : vector<1x1x4x4xbf16> to vector<4x4xbf16>
    %122 = vector.extract_strided_slice %76 {offsets = [0, 63], sizes = [4, 282], strides = [1, 1]} : vector<4x400xbf16> to vector<4x282xbf16>
    %cst_90 = arith.constant dense<0.000000e+00> : vector<4x282xf32>
    %123 = tpu.matmul %121, %122, %cst_90 {dimension_numbers = #tpu.dot_dimension_numbers<[1], [0], [0], [1], [0, 0, 1, 1], [], []>} : vector<4x4xbf16>, vector<4x282xbf16>, vector<4x282xf32> -> vector<4x282xf32>
    %124 = arith.addf %119, %123 : vector<4x282xf32>
    %c1_91 = arith.constant 1 : index
    %c1_92 = arith.constant 1 : index
    %c0_93 = arith.constant 0 : index
    %c0_94 = arith.constant 0 : index
    %125 = vector.load %arg6[%c1_91, %c1_92, %c0_93, %c0_94] : memref<3x3x4x4xbf16, #tpu.memory_space<vmem>>, vector<1x1x4x4xbf16>
    %126 = vector.shape_cast %125 : vector<1x1x4x4xbf16> to vector<4x4xbf16>
    %127 = vector.extract_strided_slice %74 {offsets = [0, 21], sizes = [4, 282], strides = [1, 1]} : vector<4x324xbf16> to vector<4x282xbf16>
    %cst_95 = arith.constant dense<0.000000e+00> : vector<4x282xf32>
    %128 = tpu.matmul %126, %127, %cst_95 {dimension_numbers = #tpu.dot_dimension_numbers<[1], [0], [0], [1], [0, 0, 1, 1], [], []>} : vector<4x4xbf16>, vector<4x282xbf16>, vector<4x282xf32> -> vector<4x282xf32>
    %129 = arith.addf %124, %128 : vector<4x282xf32>
    %c1_96 = arith.constant 1 : index
    %c2_97 = arith.constant 2 : index
    %c0_98 = arith.constant 0 : index
    %c0_99 = arith.constant 0 : index
    %130 = vector.load %arg5[%c1_96, %c2_97, %c0_98, %c0_99] : memref<3x3x4x4xbf16, #tpu.memory_space<vmem>>, vector<1x1x4x4xbf16>
    %131 = vector.shape_cast %130 : vector<1x1x4x4xbf16> to vector<4x4xbf16>
    %132 = vector.extract_strided_slice %76 {offsets = [0, 64], sizes = [4, 282], strides = [1, 1]} : vector<4x400xbf16> to vector<4x282xbf16>
    %cst_100 = arith.constant dense<0.000000e+00> : vector<4x282xf32>
    %133 = tpu.matmul %131, %132, %cst_100 {dimension_numbers = #tpu.dot_dimension_numbers<[1], [0], [0], [1], [0, 0, 1, 1], [], []>} : vector<4x4xbf16>, vector<4x282xbf16>, vector<4x282xf32> -> vector<4x282xf32>
    %134 = arith.addf %129, %133 : vector<4x282xf32>
    %c1_101 = arith.constant 1 : index
    %c2_102 = arith.constant 2 : index
    %c0_103 = arith.constant 0 : index
    %c0_104 = arith.constant 0 : index
    %135 = vector.load %arg6[%c1_101, %c2_102, %c0_103, %c0_104] : memref<3x3x4x4xbf16, #tpu.memory_space<vmem>>, vector<1x1x4x4xbf16>
    %136 = vector.shape_cast %135 : vector<1x1x4x4xbf16> to vector<4x4xbf16>
    %137 = vector.extract_strided_slice %74 {offsets = [0, 22], sizes = [4, 282], strides = [1, 1]} : vector<4x324xbf16> to vector<4x282xbf16>
    %cst_105 = arith.constant dense<0.000000e+00> : vector<4x282xf32>
    %138 = tpu.matmul %136, %137, %cst_105 {dimension_numbers = #tpu.dot_dimension_numbers<[1], [0], [0], [1], [0, 0, 1, 1], [], []>} : vector<4x4xbf16>, vector<4x282xbf16>, vector<4x282xf32> -> vector<4x282xf32>
    %139 = arith.addf %134, %138 : vector<4x282xf32>
    %c2_106 = arith.constant 2 : index
    %c0_107 = arith.constant 0 : index
    %c0_108 = arith.constant 0 : index
    %c0_109 = arith.constant 0 : index
    %140 = vector.load %arg5[%c2_106, %c0_107, %c0_108, %c0_109] : memref<3x3x4x4xbf16, #tpu.memory_space<vmem>>, vector<1x1x4x4xbf16>
    %141 = vector.shape_cast %140 : vector<1x1x4x4xbf16> to vector<4x4xbf16>
    %142 = vector.extract_strided_slice %76 {offsets = [0, 82], sizes = [4, 282], strides = [1, 1]} : vector<4x400xbf16> to vector<4x282xbf16>
    %cst_110 = arith.constant dense<0.000000e+00> : vector<4x282xf32>
    %143 = tpu.matmul %141, %142, %cst_110 {dimension_numbers = #tpu.dot_dimension_numbers<[1], [0], [0], [1], [0, 0, 1, 1], [], []>} : vector<4x4xbf16>, vector<4x282xbf16>, vector<4x282xf32> -> vector<4x282xf32>
    %144 = arith.addf %139, %143 : vector<4x282xf32>
    %c2_111 = arith.constant 2 : index
    %c0_112 = arith.constant 0 : index
    %c0_113 = arith.constant 0 : index
    %c0_114 = arith.constant 0 : index
    %145 = vector.load %arg6[%c2_111, %c0_112, %c0_113, %c0_114] : memref<3x3x4x4xbf16, #tpu.memory_space<vmem>>, vector<1x1x4x4xbf16>
    %146 = vector.shape_cast %145 : vector<1x1x4x4xbf16> to vector<4x4xbf16>
    %147 = vector.extract_strided_slice %74 {offsets = [0, 40], sizes = [4, 282], strides = [1, 1]} : vector<4x324xbf16> to vector<4x282xbf16>
    %cst_115 = arith.constant dense<0.000000e+00> : vector<4x282xf32>
    %148 = tpu.matmul %146, %147, %cst_115 {dimension_numbers = #tpu.dot_dimension_numbers<[1], [0], [0], [1], [0, 0, 1, 1], [], []>} : vector<4x4xbf16>, vector<4x282xbf16>, vector<4x282xf32> -> vector<4x282xf32>
    %149 = arith.addf %144, %148 : vector<4x282xf32>
    %c2_116 = arith.constant 2 : index
    %c1_117 = arith.constant 1 : index
    %c0_118 = arith.constant 0 : index
    %c0_119 = arith.constant 0 : index
    %150 = vector.load %arg5[%c2_116, %c1_117, %c0_118, %c0_119] : memref<3x3x4x4xbf16, #tpu.memory_space<vmem>>, vector<1x1x4x4xbf16>
    %151 = vector.shape_cast %150 : vector<1x1x4x4xbf16> to vector<4x4xbf16>
    %152 = vector.extract_strided_slice %76 {offsets = [0, 83], sizes = [4, 282], strides = [1, 1]} : vector<4x400xbf16> to vector<4x282xbf16>
    %cst_120 = arith.constant dense<0.000000e+00> : vector<4x282xf32>
    %153 = tpu.matmul %151, %152, %cst_120 {dimension_numbers = #tpu.dot_dimension_numbers<[1], [0], [0], [1], [0, 0, 1, 1], [], []>} : vector<4x4xbf16>, vector<4x282xbf16>, vector<4x282xf32> -> vector<4x282xf32>
    %154 = arith.addf %149, %153 : vector<4x282xf32>
    %c2_121 = arith.constant 2 : index
    %c1_122 = arith.constant 1 : index
    %c0_123 = arith.constant 0 : index
    %c0_124 = arith.constant 0 : index
    %155 = vector.load %arg6[%c2_121, %c1_122, %c0_123, %c0_124] : memref<3x3x4x4xbf16, #tpu.memory_space<vmem>>, vector<1x1x4x4xbf16>
    %156 = vector.shape_cast %155 : vector<1x1x4x4xbf16> to vector<4x4xbf16>
    %157 = vector.extract_strided_slice %74 {offsets = [0, 41], sizes = [4, 282], strides = [1, 1]} : vector<4x324xbf16> to vector<4x282xbf16>
    %cst_125 = arith.constant dense<0.000000e+00> : vector<4x282xf32>
    %158 = tpu.matmul %156, %157, %cst_125 {dimension_numbers = #tpu.dot_dimension_numbers<[1], [0], [0], [1], [0, 0, 1, 1], [], []>} : vector<4x4xbf16>, vector<4x282xbf16>, vector<4x282xf32> -> vector<4x282xf32>
    %159 = arith.addf %154, %158 : vector<4x282xf32>
    %c2_126 = arith.constant 2 : index
    %c2_127 = arith.constant 2 : index
    %c0_128 = arith.constant 0 : index
    %c0_129 = arith.constant 0 : index
    %160 = vector.load %arg5[%c2_126, %c2_127, %c0_128, %c0_129] : memref<3x3x4x4xbf16, #tpu.memory_space<vmem>>, vector<1x1x4x4xbf16>
    %161 = vector.shape_cast %160 : vector<1x1x4x4xbf16> to vector<4x4xbf16>
    %162 = vector.extract_strided_slice %76 {offsets = [0, 84], sizes = [4, 282], strides = [1, 1]} : vector<4x400xbf16> to vector<4x282xbf16>
    %cst_130 = arith.constant dense<0.000000e+00> : vector<4x282xf32>
    %163 = tpu.matmul %161, %162, %cst_130 {dimension_numbers = #tpu.dot_dimension_numbers<[1], [0], [0], [1], [0, 0, 1, 1], [], []>} : vector<4x4xbf16>, vector<4x282xbf16>, vector<4x282xf32> -> vector<4x282xf32>
    %164 = arith.addf %159, %163 : vector<4x282xf32>
    %c2_131 = arith.constant 2 : index
    %c2_132 = arith.constant 2 : index
    %c0_133 = arith.constant 0 : index
    %c0_134 = arith.constant 0 : index
    %165 = vector.load %arg6[%c2_131, %c2_132, %c0_133, %c0_134] : memref<3x3x4x4xbf16, #tpu.memory_space<vmem>>, vector<1x1x4x4xbf16>
    %166 = vector.shape_cast %165 : vector<1x1x4x4xbf16> to vector<4x4xbf16>
    %167 = vector.extract_strided_slice %74 {offsets = [0, 42], sizes = [4, 282], strides = [1, 1]} : vector<4x324xbf16> to vector<4x282xbf16>
    %cst_135 = arith.constant dense<0.000000e+00> : vector<4x282xf32>
    %168 = tpu.matmul %166, %167, %cst_135 {dimension_numbers = #tpu.dot_dimension_numbers<[1], [0], [0], [1], [0, 0, 1, 1], [], []>} : vector<4x4xbf16>, vector<4x282xbf16>, vector<4x282xf32> -> vector<4x282xf32>
    %169 = arith.addf %164, %168 : vector<4x282xf32>
    %cst_136 = arith.constant 0.000000e+00 : f32
    %170 = vector.broadcast %cst_136 : f32 to vector<4x282xf32>
    %171 = arith.maximumf %169, %170 : vector<4x282xf32>
    %172 = arith.truncf %171 : vector<4x282xf32> to vector<4x282xbf16>
    %c0_137 = arith.constant 0 : index
    %c0_138 = arith.constant 0 : index
    %173 = vector.load %arg9[%c0_137, %c0_138] : memref<4x1xf32, #tpu.memory_space<vmem>>, vector<4x1xf32>
    %174 = vector.shape_cast %173 : vector<4x1xf32> to vector<4x1xf32>
    %175 = vector.broadcast %174 : vector<4x1xf32> to vector<4x240xf32>
    %c0_139 = arith.constant 0 : index
    %c0_140 = arith.constant 0 : index
    %c0_141 = arith.constant 0 : index
    %c0_142 = arith.constant 0 : index
    %176 = vector.load %arg8[%c0_139, %c0_140, %c0_141, %c0_142] : memref<3x3x4x4xbf16, #tpu.memory_space<vmem>>, vector<1x1x4x4xbf16>
    %177 = vector.shape_cast %176 : vector<1x1x4x4xbf16> to vector<4x4xbf16>
    %178 = vector.extract_strided_slice %172 {offsets = [0, 0], sizes = [4, 240], strides = [1, 1]} : vector<4x282xbf16> to vector<4x240xbf16>
    %cst_143 = arith.constant dense<0.000000e+00> : vector<4x240xf32>
    %179 = tpu.matmul %177, %178, %cst_143 {dimension_numbers = #tpu.dot_dimension_numbers<[1], [0], [0], [1], [0, 0, 1, 1], [], []>} : vector<4x4xbf16>, vector<4x240xbf16>, vector<4x240xf32> -> vector<4x240xf32>
    %180 = arith.addf %175, %179 : vector<4x240xf32>
    %c0_144 = arith.constant 0 : index
    %c1_145 = arith.constant 1 : index
    %c0_146 = arith.constant 0 : index
    %c0_147 = arith.constant 0 : index
    %181 = vector.load %arg8[%c0_144, %c1_145, %c0_146, %c0_147] : memref<3x3x4x4xbf16, #tpu.memory_space<vmem>>, vector<1x1x4x4xbf16>
    %182 = vector.shape_cast %181 : vector<1x1x4x4xbf16> to vector<4x4xbf16>
    %183 = vector.extract_strided_slice %172 {offsets = [0, 1], sizes = [4, 240], strides = [1, 1]} : vector<4x282xbf16> to vector<4x240xbf16>
    %cst_148 = arith.constant dense<0.000000e+00> : vector<4x240xf32>
    %184 = tpu.matmul %182, %183, %cst_148 {dimension_numbers = #tpu.dot_dimension_numbers<[1], [0], [0], [1], [0, 0, 1, 1], [], []>} : vector<4x4xbf16>, vector<4x240xbf16>, vector<4x240xf32> -> vector<4x240xf32>
    %185 = arith.addf %180, %184 : vector<4x240xf32>
    %c0_149 = arith.constant 0 : index
    %c2_150 = arith.constant 2 : index
    %c0_151 = arith.constant 0 : index
    %c0_152 = arith.constant 0 : index
    %186 = vector.load %arg8[%c0_149, %c2_150, %c0_151, %c0_152] : memref<3x3x4x4xbf16, #tpu.memory_space<vmem>>, vector<1x1x4x4xbf16>
    %187 = vector.shape_cast %186 : vector<1x1x4x4xbf16> to vector<4x4xbf16>
    %188 = vector.extract_strided_slice %172 {offsets = [0, 2], sizes = [4, 240], strides = [1, 1]} : vector<4x282xbf16> to vector<4x240xbf16>
    %cst_153 = arith.constant dense<0.000000e+00> : vector<4x240xf32>
    %189 = tpu.matmul %187, %188, %cst_153 {dimension_numbers = #tpu.dot_dimension_numbers<[1], [0], [0], [1], [0, 0, 1, 1], [], []>} : vector<4x4xbf16>, vector<4x240xbf16>, vector<4x240xf32> -> vector<4x240xf32>
    %190 = arith.addf %185, %189 : vector<4x240xf32>
    %c1_154 = arith.constant 1 : index
    %c0_155 = arith.constant 0 : index
    %c0_156 = arith.constant 0 : index
    %c0_157 = arith.constant 0 : index
    %191 = vector.load %arg8[%c1_154, %c0_155, %c0_156, %c0_157] : memref<3x3x4x4xbf16, #tpu.memory_space<vmem>>, vector<1x1x4x4xbf16>
    %192 = vector.shape_cast %191 : vector<1x1x4x4xbf16> to vector<4x4xbf16>
    %193 = vector.extract_strided_slice %172 {offsets = [0, 20], sizes = [4, 240], strides = [1, 1]} : vector<4x282xbf16> to vector<4x240xbf16>
    %cst_158 = arith.constant dense<0.000000e+00> : vector<4x240xf32>
    %194 = tpu.matmul %192, %193, %cst_158 {dimension_numbers = #tpu.dot_dimension_numbers<[1], [0], [0], [1], [0, 0, 1, 1], [], []>} : vector<4x4xbf16>, vector<4x240xbf16>, vector<4x240xf32> -> vector<4x240xf32>
    %195 = arith.addf %190, %194 : vector<4x240xf32>
    %c1_159 = arith.constant 1 : index
    %c1_160 = arith.constant 1 : index
    %c0_161 = arith.constant 0 : index
    %c0_162 = arith.constant 0 : index
    %196 = vector.load %arg8[%c1_159, %c1_160, %c0_161, %c0_162] : memref<3x3x4x4xbf16, #tpu.memory_space<vmem>>, vector<1x1x4x4xbf16>
    %197 = vector.shape_cast %196 : vector<1x1x4x4xbf16> to vector<4x4xbf16>
    %198 = vector.extract_strided_slice %172 {offsets = [0, 21], sizes = [4, 240], strides = [1, 1]} : vector<4x282xbf16> to vector<4x240xbf16>
    %cst_163 = arith.constant dense<0.000000e+00> : vector<4x240xf32>
    %199 = tpu.matmul %197, %198, %cst_163 {dimension_numbers = #tpu.dot_dimension_numbers<[1], [0], [0], [1], [0, 0, 1, 1], [], []>} : vector<4x4xbf16>, vector<4x240xbf16>, vector<4x240xf32> -> vector<4x240xf32>
    %200 = arith.addf %195, %199 : vector<4x240xf32>
    %c1_164 = arith.constant 1 : index
    %c2_165 = arith.constant 2 : index
    %c0_166 = arith.constant 0 : index
    %c0_167 = arith.constant 0 : index
    %201 = vector.load %arg8[%c1_164, %c2_165, %c0_166, %c0_167] : memref<3x3x4x4xbf16, #tpu.memory_space<vmem>>, vector<1x1x4x4xbf16>
    %202 = vector.shape_cast %201 : vector<1x1x4x4xbf16> to vector<4x4xbf16>
    %203 = vector.extract_strided_slice %172 {offsets = [0, 22], sizes = [4, 240], strides = [1, 1]} : vector<4x282xbf16> to vector<4x240xbf16>
    %cst_168 = arith.constant dense<0.000000e+00> : vector<4x240xf32>
    %204 = tpu.matmul %202, %203, %cst_168 {dimension_numbers = #tpu.dot_dimension_numbers<[1], [0], [0], [1], [0, 0, 1, 1], [], []>} : vector<4x4xbf16>, vector<4x240xbf16>, vector<4x240xf32> -> vector<4x240xf32>
    %205 = arith.addf %200, %204 : vector<4x240xf32>
    %c2_169 = arith.constant 2 : index
    %c0_170 = arith.constant 0 : index
    %c0_171 = arith.constant 0 : index
    %c0_172 = arith.constant 0 : index
    %206 = vector.load %arg8[%c2_169, %c0_170, %c0_171, %c0_172] : memref<3x3x4x4xbf16, #tpu.memory_space<vmem>>, vector<1x1x4x4xbf16>
    %207 = vector.shape_cast %206 : vector<1x1x4x4xbf16> to vector<4x4xbf16>
    %208 = vector.extract_strided_slice %172 {offsets = [0, 40], sizes = [4, 240], strides = [1, 1]} : vector<4x282xbf16> to vector<4x240xbf16>
    %cst_173 = arith.constant dense<0.000000e+00> : vector<4x240xf32>
    %209 = tpu.matmul %207, %208, %cst_173 {dimension_numbers = #tpu.dot_dimension_numbers<[1], [0], [0], [1], [0, 0, 1, 1], [], []>} : vector<4x4xbf16>, vector<4x240xbf16>, vector<4x240xf32> -> vector<4x240xf32>
    %210 = arith.addf %205, %209 : vector<4x240xf32>
    %c2_174 = arith.constant 2 : index
    %c1_175 = arith.constant 1 : index
    %c0_176 = arith.constant 0 : index
    %c0_177 = arith.constant 0 : index
    %211 = vector.load %arg8[%c2_174, %c1_175, %c0_176, %c0_177] : memref<3x3x4x4xbf16, #tpu.memory_space<vmem>>, vector<1x1x4x4xbf16>
    %212 = vector.shape_cast %211 : vector<1x1x4x4xbf16> to vector<4x4xbf16>
    %213 = vector.extract_strided_slice %172 {offsets = [0, 41], sizes = [4, 240], strides = [1, 1]} : vector<4x282xbf16> to vector<4x240xbf16>
    %cst_178 = arith.constant dense<0.000000e+00> : vector<4x240xf32>
    %214 = tpu.matmul %212, %213, %cst_178 {dimension_numbers = #tpu.dot_dimension_numbers<[1], [0], [0], [1], [0, 0, 1, 1], [], []>} : vector<4x4xbf16>, vector<4x240xbf16>, vector<4x240xf32> -> vector<4x240xf32>
    %215 = arith.addf %210, %214 : vector<4x240xf32>
    %c2_179 = arith.constant 2 : index
    %c2_180 = arith.constant 2 : index
    %c0_181 = arith.constant 0 : index
    %c0_182 = arith.constant 0 : index
    %216 = vector.load %arg8[%c2_179, %c2_180, %c0_181, %c0_182] : memref<3x3x4x4xbf16, #tpu.memory_space<vmem>>, vector<1x1x4x4xbf16>
    %217 = vector.shape_cast %216 : vector<1x1x4x4xbf16> to vector<4x4xbf16>
    %218 = vector.extract_strided_slice %172 {offsets = [0, 42], sizes = [4, 240], strides = [1, 1]} : vector<4x282xbf16> to vector<4x240xbf16>
    %cst_183 = arith.constant dense<0.000000e+00> : vector<4x240xf32>
    %219 = tpu.matmul %217, %218, %cst_183 {dimension_numbers = #tpu.dot_dimension_numbers<[1], [0], [0], [1], [0, 0, 1, 1], [], []>} : vector<4x4xbf16>, vector<4x240xbf16>, vector<4x240xf32> -> vector<4x240xf32>
    %220 = arith.addf %215, %219 : vector<4x240xf32>
    %cst_184 = arith.constant 0.000000e+00 : f32
    %221 = vector.broadcast %cst_184 : f32 to vector<4x240xf32>
    %222 = arith.maximumf %220, %221 : vector<4x240xf32>
    %c0_185 = arith.constant 0 : index
    %c0_186 = arith.constant 0 : index
    %c0_187 = arith.constant 0 : index
    %223 = vector.load %arg10[%c0_185, %c0_186, %c0_187] : memref<1x4x240xf32, #tpu.memory_space<vmem>>, vector<1x4x240xf32>
    %224 = vector.shape_cast %223 : vector<1x4x240xf32> to vector<4x240xf32>
    %225 = vector.shape_cast %222 : vector<4x240xf32> to vector<1x4x240xf32>
    tpu.vector_store %arg10[%c0_185, %c0_186, %c0_187], %225 {strides = array<i32>} : memref<1x4x240xf32, #tpu.memory_space<vmem>>, vector<1x4x240xf32>,
    return
  }
  func.func @transform_0(%arg0: i32) -> (i32, i32, i32) {
    %c0_i32 = arith.constant 0 : i32
    %c0_i32_0 = arith.constant 0 : i32
    %c0_i32_1 = arith.constant 0 : i32
    return %arg0, %c0_i32, %c0_i32_0 : i32, i32, i32
  }
  func.func @transform_1(%arg0: i32) -> (i32, i32, i32) {
    %c0_i32 = arith.constant 0 : i32
    %c0_i32_0 = arith.constant 0 : i32
    %c0_i32_1 = arith.constant 0 : i32
    return %arg0, %c0_i32, %c0_i32_0 : i32, i32, i32
  }
  func.func @transform_2(%arg0: i32) -> (i32, i32, i32, i32) {
    %c0_i32 = arith.constant 0 : i32
    %c0_i32_0 = arith.constant 0 : i32
    %c0_i32_1 = arith.constant 0 : i32
    %c0_i32_2 = arith.constant 0 : i32
    %c0_i32_3 = arith.constant 0 : i32
    return %c0_i32, %c0_i32_0, %c0_i32_1, %c0_i32_2 : i32, i32, i32, i32
  }
  func.func @transform_3(%arg0: i32) -> (i32, i32) {
    %c0_i32 = arith.constant 0 : i32
    %c0_i32_0 = arith.constant 0 : i32
    %c0_i32_1 = arith.constant 0 : i32
    return %c0_i32, %c0_i32_0 : i32, i32
  }
  func.func @transform_4(%arg0: i32) -> (i32, i32, i32, i32) {
    %c0_i32 = arith.constant 0 : i32
    %c0_i32_0 = arith.constant 0 : i32
    %c0_i32_1 = arith.constant 0 : i32
    %c0_i32_2 = arith.constant 0 : i32
    %c0_i32_3 = arith.constant 0 : i32
    return %c0_i32, %c0_i32_0, %c0_i32_1, %c0_i32_2 : i32, i32, i32, i32
  }
  func.func @transform_5(%arg0: i32) -> (i32, i32, i32, i32) {
    %c0_i32 = arith.constant 0 : i32
    %c0_i32_0 = arith.constant 0 : i32
    %c0_i32_1 = arith.constant 0 : i32
    %c0_i32_2 = arith.constant 0 : i32
    %c0_i32_3 = arith.constant 0 : i32
    return %c0_i32, %c0_i32_0, %c0_i32_1, %c0_i32_2 : i32, i32, i32, i32
  }
  func.func @transform_6(%arg0: i32) -> (i32, i32) {
    %c0_i32 = arith.constant 0 : i32
    %c0_i32_0 = arith.constant 0 : i32
    %c0_i32_1 = arith.constant 0 : i32
    return %c0_i32, %c0_i32_0 : i32, i32
  }
  func.func @transform_7(%arg0: i32) -> (i32, i32, i32, i32) {
    %c0_i32 = arith.constant 0 : i32
    %c0_i32_0 = arith.constant 0 : i32
    %c0_i32_1 = arith.constant 0 : i32
    %c0_i32_2 = arith.constant 0 : i32
    %c0_i32_3 = arith.constant 0 : i32
    return %c0_i32, %c0_i32_0, %c0_i32_1, %c0_i32_2 : i32, i32, i32, i32
  }
  func.func @transform_8(%arg0: i32) -> (i32, i32) {
    %c0_i32 = arith.constant 0 : i32
    %c0_i32_0 = arith.constant 0 : i32
    %c0_i32_1 = arith.constant 0 : i32
    return %c0_i32, %c0_i32_0 : i32, i32
  }
  func.func @transform_9(%arg0: i32) -> (i32, i32, i32) {
    %c0_i32 = arith.constant 0 : i32
    %c0_i32_0 = arith.constant 0 : i32
    %c0_i32_1 = arith.constant 0 : i32
    return %arg0, %c0_i32, %c0_i32_0 : i32, i32, i32
  }
}

</mosaic_0001>

<llo_original>
// kernel: unet_up_forward.1
$region0: #{unet_up_forward.1}
  #allocation0 [shape = 'u32[]', space=smem, size = 0x4, offset = 0x4, fixed_abs, tag = 'smem constant byte address 0x4 - core index']
  #allocation1 [shape = 'u32[144,128]{1,0:T(1,128)}', space=vmem, size = 0x12000, scoped, tag = 'internal scratch']
  #allocation2 [shape = 'f32[8,345]{1,0:T(8,128)}', space=vmem, size = 0x3000, scoped, tag = 'scratch operand']
  %s0 = inlined_call_operand.vmem [shape: bf16[2,4,400], index: 0, kind: input, shape index: {}]
  %s1 = inlined_call_operand.vmem [shape: bf16[2,16,225], index: 1, kind: input, shape index: {}]
  %s2 = inlined_call_operand.vmem [shape: bf16[2,2,4,8], index: 2, kind: input, shape index: {}]
  %s3 = inlined_call_operand.vmem [shape: f32[4,1], index: 3, kind: input, shape index: {}]
  %s4 = inlined_call_operand.vmem [shape: bf16[3,3,4,4], index: 4, kind: input, shape index: {}]
  %s5 = inlined_call_operand.vmem [shape: bf16[3,3,4,4], index: 5, kind: input, shape index: {}]
  %s6 = inlined_call_operand.vmem [shape: f32[4,1], index: 6, kind: input, shape index: {}]
  %s7 = inlined_call_operand.vmem [shape: bf16[3,3,4,4], index: 7, kind: input, shape index: {}]
  %s8 = inlined_call_operand.vmem [shape: f32[4,1], index: 8, kind: input, shape index: {}]
  %s9 = inlined_call_operand.vmem [shape: f32[2,4,240], index: 9, kind: output, shape index: {}]
  %s10 = sld [smem:[#allocation0]]
  $region69: #{unet_up_forward.1} parent=0
    _
  %s12 = ssub.s32 1, %s10
  %s13 = scalar_select 0, %s12, %s10
  loop: start=0, step=1, limit=4
  $region2: #{unet_up_forward.1} parent=0 // loop_pre_header
    _
  $region3: #{unet_up_forward.1} parent=0 // loop_header
    %s15 = sphi 0, %s19
    %p16 = scmp.ge.s32.totalorder %s15, 4
    %s25 = sphi 0, %s27
    %s28 = sphi 0, %s25
    %s29 = sphi 0, %s28
    %s45 = sphi 0, %s29
    %s51 = sphi 0, %s53
    %s54 = sphi 0, %s51
    %s55 = sphi 0, %s54
    %s71 = sphi 0, %s55
    %s75 = sphi 0, %s75
    %s77 = sphi 0, %s75
    %s78 = sphi 0, %s77
    %s92 = sphi 0, %s78
    %s96 = sphi 0, %s96
    %s98 = sphi 0, %s96
    %s99 = sphi 0, %s98
    %s113 = sphi 0, %s99
    %s117 = sphi 0, %s117
    %s119 = sphi 0, %s117
    %s120 = sphi 0, %s119
    %s134 = sphi 0, %s120
    %s138 = sphi 0, %s138
    %s140 = sphi 0, %s138
    %s141 = sphi 0, %s140
    %s155 = sphi 0, %s141
    %s159 = sphi 0, %s159
    %s161 = sphi 0, %s159
    %s162 = sphi 0, %s161
    %s176 = sphi 0, %s162
    %s180 = sphi 0, %s180
    %s182 = sphi 0, %s180
    %s183 = sphi 0, %s182
    %s197 = sphi 0, %s183
    %s201 = sphi 0, %s201
    %s203 = sphi 0, %s201
    %s204 = sphi 0, %s203
    %s218 = sphi 0, %s204
    %s224 = sphi 0, %s226
    %s227 = sphi 0, %s224
    %s228 = sphi 0, %s227
    %s244 = sphi 0, %s228
  $region4: #{unet_up_forward.1} parent=0 // loop_header_branch
    %18 = sbr.rel (%p16) target = $region8
  $region5: #{unet_up_forward.1} parent=0 // loop_body
    %s20 = ssub.s32 %s15, 1
    %s21 = ssub.s32 %s15, 2
    %s22 = sadd.s32 %s15, 1
    %s23 = ssub.s32 %s15, %s22
    %p24 = scmp.eq.s32.totalorder %s23, 0
    %s26 = sadd.s32 %s25, 1
    %s27 = scalar_select %p24, %s25, %s26
    %p30 = pneg %p24
    %p31 = scmp.eq.s32.totalorder %s15, 1
    %p32 = por %p30, %p31
    %p33 = scmp.ne.s32.totalorder %s25, %s28
    %p34 = scmp.eq.s32.totalorder %s15, 0
    %p35 = por %p33, %p34
    %p36 = scmp.ne.s32.totalorder %s25, %s28
    %p37 = scmp.eq.s32.totalorder %s20, 1
    %p38 = por %p36, %p37
    %p39 = scmp.ne.s32.totalorder %s28, %s29
    %p40 = scmp.eq.s32.totalorder %s20, 0
    %p41 = por %p39, %p40
    %p42 = scmp.ne.s32.totalorder %s28, %s29
    %p43 = scmp.eq.s32.totalorder %s21, 1
    %p44 = por %p42, %p43
    %p46 = scmp.ne.s32.totalorder %s29, %s45
    %p47 = scmp.eq.s32.totalorder %s21, 0
    %p48 = por %p46, %p47
    %s49 = ssub.s32 %s15, %s22
    %p50 = scmp.eq.s32.totalorder %s49, 0
    %s52 = sadd.s32 %s51, 1
    %s53 = scalar_select %p50, %s51, %s52
    %p56 = pneg %p50
    %p57 = scmp.eq.s32.totalorder %s15, 1
    %p58 = por %p56, %p57
    %p59 = scmp.ne.s32.totalorder %s51, %s54
    %p60 = scmp.eq.s32.totalorder %s15, 0
    %p61 = por %p59, %p60
    %p62 = scmp.ne.s32.totalorder %s51, %s54
    %p63 = scmp.eq.s32.totalorder %s20, 1
    %p64 = por %p62, %p63
    %p65 = scmp.ne.s32.totalorder %s54, %s55
    %p66 = scmp.eq.s32.totalorder %s20, 0
    %p67 = por %p65, %p66
    %p68 = scmp.ne.s32.totalorder %s54, %s55
    %p69 = scmp.eq.s32.totalorder %s21, 1
    %p70 = por %p68, %p69
    %p72 = scmp.ne.s32.totalorder %s55, %s71
    %p73 = scmp.eq.s32.totalorder %s21, 0
    %p74 = por %p72, %p73
    %s76 = sadd.s32 %s75, 1
    %p79 = scmp.eq.s32.totalorder %s15, 1
    %p80 = scmp.ne.s32.totalorder %s75, %s77
    %p81 = scmp.eq.s32.totalorder %s15, 0
    %p82 = por %p80, %p81
    %p83 = scmp.ne.s32.totalorder %s75, %s77
    %p84 = scmp.eq.s32.totalorder %s20, 1
    %p85 = por %p83, %p84
    %p86 = scmp.ne.s32.totalorder %s77, %s78
    %p87 = scmp.eq.s32.totalorder %s20, 0
    %p88 = por %p86, %p87
    %p89 = scmp.ne.s32.totalorder %s77, %s78
    %p90 = scmp.eq.s32.totalorder %s21, 1
    %p91 = por %p89, %p90
    %p93 = scmp.ne.s32.totalorder %s78, %s92
    %p94 = scmp.eq.s32.totalorder %s21, 0
    %p95 = por %p93, %p94
    %s97 = sadd.s32 %s96, 1
    %p100 = scmp.eq.s32.totalorder %s15, 1
    %p101 = scmp.ne.s32.totalorder %s96, %s98
    %p102 = scmp.eq.s32.totalorder %s15, 0
    %p103 = por %p101, %p102
    %p104 = scmp.ne.s32.totalorder %s96, %s98
    %p105 = scmp.eq.s32.totalorder %s20, 1
    %p106 = por %p104, %p105
    %p107 = scmp.ne.s32.totalorder %s98, %s99
    %p108 = scmp.eq.s32.totalorder %s20, 0
    %p109 = por %p107, %p108
    %p110 = scmp.ne.s32.totalorder %s98, %s99
    %p111 = scmp.eq.s32.totalorder %s21, 1
    %p112 = por %p110, %p111
    %p114 = scmp.ne.s32.totalorder %s99, %s113
    %p115 = scmp.eq.s32.totalorder %s21, 0
    %p116 = por %p114, %p115
    %s118 = sadd.s32 %s117, 1
    %p121 = scmp.eq.s32.totalorder %s15, 1
    %p122 = scmp.ne.s32.totalorder %s117, %s119
    %p123 = scmp.eq.s32.totalorder %s15, 0
    %p124 = por %p122, %p123
    %p125 = scmp.ne.s32.totalorder %s117, %s119
    %p126 = scmp.eq.s32.totalorder %s20, 1
    %p127 = por %p125, %p126
    %p128 = scmp.ne.s32.totalorder %s119, %s120
    %p129 = scmp.eq.s32.totalorder %s20, 0
    %p130 = por %p128, %p129
    %p131 = scmp.ne.s32.totalorder %s119, %s120
    %p132 = scmp.eq.s32.totalorder %s21, 1
    %p133 = por %p131, %p132
    %p135 = scmp.ne.s32.totalorder %s120, %s134
    %p136 = scmp.eq.s32.totalorder %s21, 0
    %p137 = por %p135, %p136
    %s139 = sadd.s32 %s138, 1
    %p142 = scmp.eq.s32.totalorder %s15, 1
    %p143 = scmp.ne.s32.totalorder %s138, %s140
    %p144 = scmp.eq.s32.totalorder %s15, 0
    %p145 = por %p143, %p144
    %p146 = scmp.ne.s32.totalorder %s138, %s140
    %p147 = scmp.eq.s32.totalorder %s20, 1
    %p148 = por %p146, %p147
    %p149 = scmp.ne.s32.totalorder %s140, %s141
    %p150 = scmp.eq.s32.totalorder %s20, 0
    %p151 = por %p149, %p150
    %p152 = scmp.ne.s32.totalorder %s140, %s141
    %p153 = scmp.eq.s32.totalorder %s21, 1
    %p154 = por %p152, %p153
    %p156 = scmp.ne.s32.totalorder %s141, %s155
    %p157 = scmp.eq.s32.totalorder %s21, 0
    %p158 = por %p156, %p157
    %s160 = sadd.s32 %s159, 1
    %p163 = scmp.eq.s32.totalorder %s15, 1
    %p164 = scmp.ne.s32.totalorder %s159, %s161
    %p165 = scmp.eq.s32.totalorder %s15, 0
    %p166 = por %p164, %p165
    %p167 = scmp.ne.s32.totalorder %s159, %s161
    %p168 = scmp.eq.s32.totalorder %s20, 1
    %p169 = por %p167, %p168
    %p170 = scmp.ne.s32.totalorder %s161, %s162
    %p171 = scmp.eq.s32.totalorder %s20, 0
    %p172 = por %p170, %p171
    %p173 = scmp.ne.s32.totalorder %s161, %s162
    %p174 = scmp.eq.s32.totalorder %s21, 1
    %p175 = por %p173, %p174
    %p177 = scmp.ne.s32.totalorder %s162, %s176
    %p178 = scmp.eq.s32.totalorder %s21, 0
    %p179 = por %p177, %p178
    %s181 = sadd.s32 %s180, 1
    %p184 = scmp.eq.s32.totalorder %s15, 1
    %p185 = scmp.ne.s32.totalorder %s180, %s182
    %p186 = scmp.eq.s32.totalorder %s15, 0
    %p187 = por %p185, %p186
    %p188 = scmp.ne.s32.totalorder %s180, %s182
    %p189 = scmp.eq.s32.totalorder %s20, 1
    %p190 = por %p188, %p189
    %p191 = scmp.ne.s32.totalorder %s182, %s183
    %p192 = scmp.eq.s32.totalorder %s20, 0
    %p193 = por %p191, %p192
    %p194 = scmp.ne.s32.totalorder %s182, %s183
    %p195 = scmp.eq.s32.totalorder %s21, 1
    %p196 = por %p194, %p195
    %p198 = scmp.ne.s32.totalorder %s183, %s197
    %p199 = scmp.eq.s32.totalorder %s21, 0
    %p200 = por %p198, %p199
    %s202 = sadd.s32 %s201, 1
    %p205 = scmp.eq.s32.totalorder %s15, 1
    %p206 = scmp.ne.s32.totalorder %s201, %s203
    %p207 = scmp.eq.s32.totalorder %s15, 0
    %p208 = por %p206, %p207
    %p209 = scmp.ne.s32.totalorder %s201, %s203
    %p210 = scmp.eq.s32.totalorder %s20, 1
    %p211 = por %p209, %p210
    %p212 = scmp.ne.s32.totalorder %s203, %s204
    %p213 = scmp.eq.s32.totalorder %s20, 0
    %p214 = por %p212, %p213
    %p215 = scmp.ne.s32.totalorder %s203, %s204
    %p216 = scmp.eq.s32.totalorder %s21, 1
    %p217 = por %p215, %p216
    %p219 = scmp.ne.s32.totalorder %s204, %s218
    %p220 = scmp.eq.s32.totalorder %s21, 0
    %p221 = por %p219, %p220
    %s222 = ssub.s32 %s15, %s22
    %p223 = scmp.eq.s32.totalorder %s222, 0
    %s225 = sadd.s32 %s224, 1
    %s226 = scalar_select %p223, %s224, %s225
    %p229 = pneg %p223
    %p230 = scmp.eq.s32.totalorder %s15, 1
    %p231 = por %p229, %p230
    %p232 = scmp.ne.s32.totalorder %s224, %s227
    %p233 = scmp.eq.s32.totalorder %s15, 0
    %p234 = por %p232, %p233
    %p235 = scmp.ne.s32.totalorder %s224, %s227
    %p236 = scmp.eq.s32.totalorder %s20, 1
    %p237 = por %p235, %p236
    %p238 = scmp.ne.s32.totalorder %s227, %s228
    %p239 = scmp.eq.s32.totalorder %s20, 0
    %p240 = por %p238, %p239
    %p241 = scmp.ne.s32.totalorder %s227, %s228
    %p242 = scmp.eq.s32.totalorder %s21, 1
    %p243 = por %p241, %p242
    %p245 = scmp.ne.s32.totalorder %s228, %s244
    %p246 = scmp.eq.s32.totalorder %s21, 0
    %p247 = por %p245, %p246
    %p248 = scmp.le.s32.totalorder 1, %s15
    %p249 = scmp.lt.s32.totalorder %s15, 3
    %p250 = pnand %p248, %p249
    %p251 = pneg %p250
    // Predicated region
    $region9: #{unet_up_forward.1} parent=5 // pred_check
      _
    $region10: #{unet_up_forward.1} parent=5 // pred_check_branch
      %253 = sbr.rel (%p250) target = $region12
    $region11: #{unet_up_forward.1} parent=5 // pred_region
      %s254 = ssub.s32 %s15, 1
      // Predicated region
      $region13: #{unet_up_forward.1} parent=11 // pred_check
        %p255 = pneg %p88
      $region14: #{unet_up_forward.1} parent=11 // pred_check_branch
        %257 = sbr.rel (%p255) target = $region16
      $region15: #{unet_up_forward.1} parent=11 // pred_region
        _
      $region16: #{unet_up_forward.1} parent=11 // pred_fallthru
        _
      // Predicated region
      $region17: #{unet_up_forward.1} parent=11 // pred_check
        %p258 = pneg %p109
      $region18: #{unet_up_forward.1} parent=11 // pred_check_branch
        %260 = sbr.rel (%p258) target = $region20
      $region19: #{unet_up_forward.1} parent=11 // pred_region
        _
      $region20: #{unet_up_forward.1} parent=11 // pred_fallthru
        _
      // Predicated region
      $region21: #{unet_up_forward.1} parent=11 // pred_check
        %p261 = pneg %p130
      $region22: #{unet_up_forward.1} parent=11 // pred_check_branch
        %263 = sbr.rel (%p261) target = $region24
      $region23: #{unet_up_forward.1} parent=11 // pred_region
        _
      $region24: #{unet_up_forward.1} parent=11 // pred_fallthru
        _
      // Predicated region
      $region25: #{unet_up_forward.1} parent=11 // pred_check
        %p264 = pneg %p151
      $region26: #{unet_up_forward.1} parent=11 // pred_check_branch
        %266 = sbr.rel (%p264) target = $region28
      $region27: #{unet_up_forward.1} parent=11 // pred_region
        _
      $region28: #{unet_up_forward.1} parent=11 // pred_fallthru
        _
      // Predicated region
      $region29: #{unet_up_forward.1} parent=11 // pred_check
        %p267 = pneg %p172
      $region30: #{unet_up_forward.1} parent=11 // pred_check_branch
        %269 = sbr.rel (%p267) target = $region32
      $region31: #{unet_up_forward.1} parent=11 // pred_region
        _
      $region32: #{unet_up_forward.1} parent=11 // pred_fallthru
        _
      // Predicated region
      $region33: #{unet_up_forward.1} parent=11 // pred_check
        %p270 = pneg %p193
      $region34: #{unet_up_forward.1} parent=11 // pred_check_branch
        %272 = sbr.rel (%p270) target = $region36
      $region35: #{unet_up_forward.1} parent=11 // pred_region
        _
      $region36: #{unet_up_forward.1} parent=11 // pred_fallthru
        _
      // Predicated region
      $region37: #{unet_up_forward.1} parent=11 // pred_check
        %p273 = pneg %p214
      $region38: #{unet_up_forward.1} parent=11 // pred_check_branch
        %275 = sbr.rel (%p273) target = $region40
      $region39: #{unet_up_forward.1} parent=11 // pred_region
        _
      $region40: #{unet_up_forward.1} parent=11 // pred_fallthru
        _
    $region12: #{unet_up_forward.1} parent=5 // pred_fallthru
      _
    %p276 = scmp.lt.s32.totalorder %s15, 2
    // Predicated region
    $region41: #{unet_up_forward.1} parent=5 // pred_check
      %p277 = pneg %p276
    $region42: #{unet_up_forward.1} parent=5 // pred_check_branch
      %279 = sbr.rel (%p277) target = $region44
    $region43: #{unet_up_forward.1} parent=5 // pred_region
      // Predicated region
      $region45: #{unet_up_forward.1} parent=43 // pred_check
        %p280 = pneg %p35
      $region46: #{unet_up_forward.1} parent=43 // pred_check_branch
        %282 = sbr.rel (%p280) target = $region48
      $region47: #{unet_up_forward.1} parent=43 // pred_region
        %p283 = scmp.lt.s32.totalorder %s15, 1
        %s284 = scalar_select %p283, %s15, 1
        %s285 = smul.addr %s284, 4
        %s286 = smul.addr %s285, 2
        %s287 = scalar_lea.vmem %s0, %s286
      $region48: #{unet_up_forward.1} parent=43 // pred_fallthru
        _
      // Predicated region
      $region49: #{unet_up_forward.1} parent=43 // pred_check
        %p288 = pneg %p61
      $region50: #{unet_up_forward.1} parent=43 // pred_check_branch
        %290 = sbr.rel (%p288) target = $region52
      $region51: #{unet_up_forward.1} parent=43 // pred_region
        %p291 = scmp.lt.s32.totalorder %s15, 1
        %s292 = scalar_select %p291, %s15, 1
        %s293 = smul.addr %s292, 4
        %s294 = smul.addr %s293, 4
        %s295 = scalar_lea.vmem %s1, %s294
      $region52: #{unet_up_forward.1} parent=43 // pred_fallthru
        _
    $region44: #{unet_up_forward.1} parent=5 // pred_fallthru
      _
    %p296 = scmp.le.s32.totalorder 1, %s15
    %p297 = scmp.lt.s32.totalorder %s15, 3
    %p298 = pnand %p296, %p297
    %p299 = pneg %p298
    // Predicated region
    $region53: #{unet_up_forward.1} parent=5 // pred_check
      _
    $region54: #{unet_up_forward.1} parent=5 // pred_check_branch
      %301 = sbr.rel (%p298) target = $region56
    $region55: #{unet_up_forward.1} parent=5 // pred_region
      %s302 = ssub.s32 %s15, 1
      %p303 = scmp.lt.s32.totalorder %s20, 1
      %s304 = scalar_select %p303, %s20, 1
      %s305 = smul.addr %s304, 4
      %s306 = smul.addr %s305, 2
      %s307 = scalar_lea.vmem %s0, %s306
      %p308 = pneg %p41
      %p309 = pneg %p38
      %p310 = scmp.lt.s32.totalorder %s20, 1
      %s311 = scalar_select %p310, %s20, 1
      %s312 = smul.addr %s311, 4
      %s313 = smul.addr %s312, 4
      %s314 = scalar_lea.vmem %s1, %s313
      %p315 = pneg %p67
      %p316 = pneg %p64
      %p317 = pneg %p88
      %p318 = pneg %p85
      %p319 = pneg %p109
      %p320 = pneg %p106
      %p321 = pneg %p130
      %p322 = pneg %p127
      %p323 = pneg %p151
      %p324 = pneg %p148
      %p325 = pneg %p172
      %p326 = pneg %p169
      %p327 = pneg %p193
      %p328 = pneg %p190
      %p329 = pneg %p214
      %p330 = pneg %p211
      %p331 = pneg %p240
      %p332 = pneg %p237
      %p333 = scmp.lt.s32.totalorder %s20, 1
      %s334 = scalar_select %p333, %s20, 1
      %s335 = smul.addr %s334, 2
      %s336 = smul.addr %s335, 4
      %s337 = scalar_lea.vmem %s9, %s336
      %p338 = scmp.lt.s32.totalorder %s20, 1
      %s339 = scalar_select %p338, %s20, 1
      %s340 = smul.addr %s339, 4
      %s341 = smul.addr %s340, 2
      %s342 = scalar_lea.vmem %s0, %s341
      %p343 = scmp.lt.s32.totalorder %s20, 1
      %s344 = scalar_select %p343, %s20, 1
      %s345 = smul.addr %s344, 4
      %s346 = smul.addr %s345, 4
      %s347 = scalar_lea.vmem %s1, %s346
      %p348 = scmp.lt.s32.totalorder %s20, 1
      %s349 = scalar_select %p348, %s20, 1
      %s350 = smul.addr %s349, 2
      %s351 = smul.addr %s350, 4
      %s352 = scalar_lea.vmem %s9, %s351
      %354 = vst [vmem:[#allocation2] sm:$0xff] 0.0
      %355 = vst [vmem:[#allocation2 + $0x8] sm:$0xff] 0.0
      %vm356 = vcmask 728064
      %357 = vst.msk [vmem:[#allocation2 + $0x10] sm:$0xff] %vm356, 0.0
      %v358 = vld [vmem:[%s347] sm:$0xff]
      %v359 = vunpack.c.l.bf16 %v358
      %361 = vrot.lane.b32.xlu0 %v359, 21
      %v362 = vpop.permute.xlu0 %361
      %vm364 = vcmask 294056
      %365 = vst.msk [vmem:[#allocation2] sm:$0xff] %vm364, %v362
      %366 = vrot.lane.b32.xlu0 %v359, 26
      %v367 = vpop.permute.xlu0 %366
      %vm369 = vcmask 458056
      %370 = vst.msk [vmem:[#allocation2] sm:$0xff] %vm369, %v367
      %371 = vrot.lane.b32.xlu0 %v359, 31
      %v372 = vpop.permute.xlu0 %371
      %vm374 = vcmask 622056
      %375 = vst.msk [vmem:[#allocation2] sm:$0xff] %vm374, %v372
      %376 = vrot.lane.b32.xlu0 %v359, 36
      %v377 = vpop.permute.xlu0 %376
      %vm379 = vcmask 786056
      %380 = vst.msk [vmem:[#allocation2] sm:$0xff] %vm379, %v377
      %381 = vrot.lane.b32.xlu0 %v359, 41
      %v382 = vpop.permute.xlu0 %381
      %vm384 = vcmask 950056
      %385 = vst.msk [vmem:[#allocation2] sm:$0xff] %vm384, %v382
      %386 = vrot.lane.b32.xlu0 %v359, 46
      %v387 = vpop.permute.xlu0 %386
      %vm389 = vcmask 1048520
      %390 = vst.msk [vmem:[#allocation2] sm:$0xff] %vm389, %v387
      %vm391 = vcmask 64512
      %392 = vst.msk [vmem:[#allocation2 + $0x8] sm:$0xff] %vm391, %v387
      %393 = vrot.lane.b32.xlu0 %v359, 51
      %v394 = vpop.permute.xlu0 %393
      %vm396 = vcmask 228456
      %397 = vst.msk [vmem:[#allocation2 + $0x8] sm:$0xff] %vm396, %v394
      %398 = vrot.lane.b32.xlu0 %v359, 56
      %v399 = vpop.permute.xlu0 %398
      %vm401 = vcmask 392456
      %402 = vst.msk [vmem:[#allocation2 + $0x8] sm:$0xff] %vm401, %v399
      %v403 = vunpack.c.h.bf16 %v358
      %405 = vrot.lane.b32.xlu0 %v359, 61
      %v406 = vpop.permute.xlu0 %405
      %407 = vrot.lane.b32.xlu0 %v403, 61
      %v408 = vpop.permute.xlu0 %407
      %vm409 = vcmask 498688
      %v410 = vsel %vm409, %v406, %v408
      %vm412 = vcmask 556456
      %413 = vst.msk [vmem:[#allocation2 + $0x8] sm:$0xff] %vm412, %v410
      %415 = vrot.lane.b32.xlu0 %v358, 121
      %v416 = vpop.permute.xlu0 %415
      %v417 = vrot.slane %v416, 4
      %v419 = vunpack.c.l.bf16 %v417
      %421 = vrot.lane.b32.xlu0 %v419, 73
      %v422 = vpop.permute.xlu0 %421
      %vm424 = vcmask 720456
      %425 = vst.msk [vmem:[#allocation2 + $0x8] sm:$0xff] %vm424, %v422
      %426 = vrot.lane.b32.xlu0 %v358, 106
      %v427 = vpop.permute.xlu0 %426
      %v428 = vrot.slane %v427, 4
      %v430 = vunpack.c.l.bf16 %v428
      %432 = vrot.lane.b32.xlu0 %v430, 93
      %v433 = vpop.permute.xlu0 %432
      %vm435 = vcmask 884456
      %436 = vst.msk [vmem:[#allocation2 + $0x8] sm:$0xff] %vm435, %v433
      %437 = vrot.lane.b32.xlu0 %v358, 91
      %v438 = vpop.permute.xlu0 %437
      %v439 = vrot.slane %v438, 4
      %v441 = vunpack.c.l.bf16 %v439
      %443 = vrot.lane.b32.xlu0 %v441, 113
      %v444 = vpop.permute.xlu0 %443
      %vm446 = vcmask 1048456
      %447 = vst.msk [vmem:[#allocation2 + $0x8] sm:$0xff] %vm446, %v444
      %448 = vrot.lane.b32.xlu0 %v358, 76
      %v449 = vpop.permute.xlu0 %448
      %v450 = vrot.slane %v449, 4
      %v452 = vunpack.c.l.bf16 %v450
      %454 = vrot.lane.b32.xlu0 %v452, 5
      %v455 = vpop.permute.xlu0 %454
      %vm457 = vcmask 162856
      %458 = vst.msk [vmem:[#allocation2 + $0x10] sm:$0xff] %vm457, %v455
      %459 = vrot.lane.b32.xlu0 %v358, 61
      %v460 = vpop.permute.xlu0 %459
      %v461 = vrot.slane %v460, 4
      %v463 = vunpack.c.l.bf16 %v461
      %465 = vrot.lane.b32.xlu0 %v463, 25
      %v466 = vpop.permute.xlu0 %465
      %vm468 = vcmask 326856
      %469 = vst.msk [vmem:[#allocation2 + $0x10] sm:$0xff] %vm468, %v466
      %470 = vrot.lane.b32.xlu0 %v358, 46
      %v471 = vpop.permute.xlu0 %470
      %v472 = vrot.slane %v471, 4
      %v474 = vunpack.c.l.bf16 %v472
      %476 = vrot.lane.b32.xlu0 %v474, 45
      %v477 = vpop.permute.xlu0 %476
      %vm479 = vcmask 490856
      %480 = vst.msk [vmem:[#allocation2 + $0x10] sm:$0xff] %vm479, %v477
      %v481 = vld [vmem:[#allocation2] sm:$0xff]
      %v482 = vld [vmem:[#allocation2 + $0x8] sm:$0xff]
      %v483 = vld [vmem:[#allocation2 + $0x10] sm:$0xff]
      %v484 = vpack.c.bf16 %v481, %v481
      %v485 = vpack.c.bf16 %v482, %v482
      %v486 = vpack.c.bf16 %v483, %v483
      %v487 = vld [vmem:[%s3] sm:$0xf]
      %489 = vset.pattern.permute.xlu0 0
      %490 = vperm.xlu0 %489, %v487
      %v491 = vpop.permute.xlu0 %490
      %v493 = vld [vmem:[%s2] sm:$0x3]
      %v495 = vsel %vm391, %v493, 0
      %vm497 = vcmask 1043456
      %v499 = vsel %vm497, %v484, 0
      %v502 = vsel %vm497, %v485, 0
      %v505 = vsel %vm497, %v486, 0
      %507 = vmatprep.subr.bf16.mxu0 0
      %508 = vmatpush1.bf16.msra.mxu0 0
      %509 = vmatprep.subr.bf16.mxu0 0
      %510 = vmatpush1.bf16.msra.mxu0 0
      %511 = vmatprep.subr.bf16.mxu0 0
      %512 = vmatpush1.bf16.msra.mxu0 0
      %513 = vmatprep.subr.bf16.mxu0 0
      %514 = vmatpush1.bf16.msra.mxu0 0
      %515 = vmatprep.subr.bf16.mxu0 0
      %516 = vmatpush1.bf16.msra.mxu0 0
      %517 = vmatprep.subr.bf16.mxu0 0
      %518 = vmatpush1.bf16.msra.mxu0 0
      %519 = vmatprep.subr.bf16.mxu0 0
      %520 = vmatpush1.bf16.msra.mxu0 0
      %521 = vmatprep.subr.bf16.mxu0 %v502
      %522 = vmatpush1.bf16.msra.mxu0 %v499
      %523 = vmatprep.subr.bf16.mxu0 0
      %524 = vmatpush2.bf16.msra.mxu0 0
      %525 = vmatprep.subr.bf16.mxu0 0
      %526 = vmatpush2.bf16.msra.mxu0 0
      %527 = vmatprep.subr.bf16.mxu0 0
      %528 = vmatpush2.bf16.msra.mxu0 0
      %529 = vmatprep.subr.bf16.mxu0 0
      %530 = vmatpush2.bf16.msra.mxu0 0
      %531 = vmatprep.subr.bf16.mxu0 0
      %532 = vmatpush2.bf16.msra.mxu0 0
      %533 = vmatprep.subr.bf16.mxu0 0
      %534 = vmatpush2.bf16.msra.mxu0 0
      %535 = vmatprep.subr.bf16.mxu0 0
      %536 = vmatpush2.bf16.msra.mxu0 0
      %537 = vmatprep.subr.bf16.mxu0 0
      %538 = vmatpush2.bf16.msra.mxu0 0
      %539 = vmatprep.mubr.bf16.mxu0 0
      %540 = vmatmul.mubr.bf16.gmra.mxu0 %v495
      %v541 = vpop.f32.mrf.mxu0
      %v542 = vadd.f32 0.0, %v541
      %v543 = vpop.f32.mrf.mxu0
      %v544 = vadd.f32 0.0, %v543
      %v545 = vpop.f32.mrf.mxu0
      %v546 = vpop.f32.mrf.mxu0
      %547 = vdwg.mxu0
      %548 = vmatprep.subr.bf16.mxu0 0
      %549 = vmatpush1.bf16.msra.mxu0 0
      %550 = vmatprep.subr.bf16.mxu0 0
      %551 = vmatpush1.bf16.msra.mxu0 0
      %552 = vmatprep.subr.bf16.mxu0 0
      %553 = vmatpush1.bf16.msra.mxu0 0
      %554 = vmatprep.subr.bf16.mxu0 0
      %555 = vmatpush1.bf16.msra.mxu0 0
      %556 = vmatprep.subr.bf16.mxu0 0
      %557 = vmatpush1.bf16.msra.mxu0 0
      %558 = vmatprep.subr.bf16.mxu0 0
      %559 = vmatpush1.bf16.msra.mxu0 0
      %560 = vmatprep.subr.bf16.mxu0 0
      %561 = vmatpush1.bf16.msra.mxu0 0
      %562 = vmatprep.subr.bf16.mxu0 0
      %563 = vmatpush1.bf16.msra.mxu0 %v505
      %564 = vmatprep.subr.bf16.mxu0 0
      %565 = vmatpush2.bf16.msra.mxu0 0
      %566 = vmatprep.subr.bf16.mxu0 0
      %567 = vmatpush2.bf16.msra.mxu0 0
      %568 = vmatprep.subr.bf16.mxu0 0
      %569 = vmatpush2.bf16.msra.mxu0 0
      %570 = vmatprep.subr.bf16.mxu0 0
      %571 = vmatpush2.bf16.msra.mxu0 0
      %572 = vmatprep.subr.bf16.mxu0 0
      %573 = vmatpush2.bf16.msra.mxu0 0
      %574 = vmatprep.subr.bf16.mxu0 0
      %575 = vmatpush2.bf16.msra.mxu0 0
      %576 = vmatprep.subr.bf16.mxu0 0
      %577 = vmatpush2.bf16.msra.mxu0 0
      %578 = vmatprep.subr.bf16.mxu0 0
      %579 = vmatpush2.bf16.msra.mxu0 0
      %580 = vmatprep.mubr.bf16.mxu0 0
      %581 = vmatmul.mubr.bf16.gmra.mxu0 %v495
      %v582 = vpop.f32.mrf.mxu0
      %v583 = vadd.f32 0.0, %v582
      %v584 = vpop.f32.mrf.mxu0
      %v585 = vpop.f32.mrf.mxu0
      %v586 = vpop.f32.mrf.mxu0
      %587 = vdwg.mxu0
      %v588 = vadd.f32 %v491, %v542
      %v589 = vadd.f32 %v491, %v544
      %v590 = vadd.f32 %v491, %v583
      %s591 = scalar_lea.vmem %s2, 2
      %v592 = vld [vmem:[%s591] sm:$0x3]
      %596 = vrot.lane.b32.xlu0 %v484, 127
      %v597 = vpop.permute.xlu0 %596
      %598 = vrot.lane.b32.xlu0 %v485, 127
      %v599 = vpop.permute.xlu0 %598
      %600 = vrot.lane.b32.xlu0 %v486, 127
      %v601 = vpop.permute.xlu0 %600
      %vm602 = vcmask 1039360
      %v603 = vsel %vm602, %v597, %v599
      %v604 = vsel %vm602, %v599, %v601
      %v606 = vsel %vm391, %v592, 0
      %v609 = vsel %vm497, %v603, 0
      %v612 = vsel %vm497, %v604, 0
      %v615 = vsel %vm497, %v601, 0
      %617 = vmatprep.subr.bf16.mxu0 0
      %618 = vmatpush1.bf16.msra.mxu0 0
      %619 = vmatprep.subr.bf16.mxu0 0
      %620 = vmatpush1.bf16.msra.mxu0 0
      %621 = vmatprep.subr.bf16.mxu0 0
      %622 = vmatpush1.bf16.msra.mxu0 0
      %623 = vmatprep.subr.bf16.mxu0 0
      %624 = vmatpush1.bf16.msra.mxu0 0
      %625 = vmatprep.subr.bf16.mxu0 0
      %626 = vmatpush1.bf16.msra.mxu0 0
      %627 = vmatprep.subr.bf16.mxu0 0
      %628 = vmatpush1.bf16.msra.mxu0 0
      %629 = vmatprep.subr.bf16.mxu0 0
      %630 = vmatpush1.bf16.msra.mxu0 0
      %631 = vmatprep.subr.bf16.mxu0 %v612
      %632 = vmatpush1.bf16.msra.mxu0 %v609
      %633 = vmatprep.subr.bf16.mxu0 0
      %634 = vmatpush2.bf16.msra.mxu0 0
      %635 = vmatprep.subr.bf16.mxu0 0
      %636 = vmatpush2.bf16.msra.mxu0 0
      %637 = vmatprep.subr.bf16.mxu0 0
      %638 = vmatpush2.bf16.msra.mxu0 0
      %639 = vmatprep.subr.bf16.mxu0 0
      %640 = vmatpush2.bf16.msra.mxu0 0
      %641 = vmatprep.subr.bf16.mxu0 0
      %642 = vmatpush2.bf16.msra.mxu0 0
      %643 = vmatprep.subr.bf16.mxu0 0
      %644 = vmatpush2.bf16.msra.mxu0 0
      %645 = vmatprep.subr.bf16.mxu0 0
      %646 = vmatpush2.bf16.msra.mxu0 0
      %647 = vmatprep.subr.bf16.mxu0 0
      %648 = vmatpush2.bf16.msra.mxu0 0
      %649 = vmatprep.mubr.bf16.mxu0 0
      %650 = vmatmul.mubr.bf16.gmra.mxu0 %v606
      %v651 = vpop.f32.mrf.mxu0
      %v652 = vadd.f32 0.0, %v651
      %v653 = vpop.f32.mrf.mxu0
      %v654 = vadd.f32 0.0, %v653
      %v655 = vpop.f32.mrf.mxu0
      %v656 = vpop.f32.mrf.mxu0
      %657 = vdwg.mxu0
      %658 = vmatprep.subr.bf16.mxu0 0
      %659 = vmatpush1.bf16.msra.mxu0 0
      %660 = vmatprep.subr.bf16.mxu0 0
      %661 = vmatpush1.bf16.msra.mxu0 0
      %662 = vmatprep.subr.bf16.mxu0 0
      %663 = vmatpush1.bf16.msra.mxu0 0
      %664 = vmatprep.subr.bf16.mxu0 0
      %665 = vmatpush1.bf16.msra.mxu0 0
      %666 = vmatprep.subr.bf16.mxu0 0
      %667 = vmatpush1.bf16.msra.mxu0 0
      %668 = vmatprep.subr.bf16.mxu0 0
      %669 = vmatpush1.bf16.msra.mxu0 0
      %670 = vmatprep.subr.bf16.mxu0 0
      %671 = vmatpush1.bf16.msra.mxu0 0
      %672 = vmatprep.subr.bf16.mxu0 0
      %673 = vmatpush1.bf16.msra.mxu0 %v615
      %674 = vmatprep.subr.bf16.mxu0 0
      %675 = vmatpush2.bf16.msra.mxu0 0
      %676 = vmatprep.subr.bf16.mxu0 0
      %677 = vmatpush2.bf16.msra.mxu0 0
      %678 = vmatprep.subr.bf16.mxu0 0
      %679 = vmatpush2.bf16.msra.mxu0 0
      %680 = vmatprep.subr.bf16.mxu0 0
      %681 = vmatpush2.bf16.msra.mxu0 0
      %682 = vmatprep.subr.bf16.mxu0 0
      %683 = vmatpush2.bf16.msra.mxu0 0
      %684 = vmatprep.subr.bf16.mxu0 0
      %685 = vmatpush2.bf16.msra.mxu0 0
      %686 = vmatprep.subr.bf16.mxu0 0
      %687 = vmatpush2.bf16.msra.mxu0 0
      %688 = vmatprep.subr.bf16.mxu0 0
      %689 = vmatpush2.bf16.msra.mxu0 0
      %690 = vmatprep.mubr.bf16.mxu0 0
      %691 = vmatmul.mubr.bf16.gmra.mxu0 %v606
      %v692 = vpop.f32.mrf.mxu0
      %v693 = vadd.f32 0.0, %v692
      %v694 = vpop.f32.mrf.mxu0
      %v695 = vpop.f32.mrf.mxu0
      %v696 = vpop.f32.mrf.mxu0
      %697 = vdwg.mxu0
      %v698 = vadd.f32 %v588, %v652
      %v699 = vadd.f32 %v589, %v654
      %v700 = vadd.f32 %v590, %v693
      %s701 = scalar_lea.vmem %s2, 4
      %v702 = vld [vmem:[%s701] sm:$0x3]
      %703 = vrot.lane.b32.xlu0 %v484, 108
      %v704 = vpop.permute.xlu0 %703
      %705 = vrot.lane.b32.xlu0 %v485, 108
      %v706 = vpop.permute.xlu0 %705
      %707 = vrot.lane.b32.xlu0 %v486, 108
      %v708 = vpop.permute.xlu0 %707
      %vm709 = vcmask 883712
      %v710 = vsel %vm709, %v704, %v706
      %v711 = vsel %vm709, %v706, %v708
      %v713 = vsel %vm391, %v702, 0
      %v716 = vsel %vm497, %v710, 0
      %v719 = vsel %vm497, %v711, 0
      %v722 = vsel %vm497, %v708, 0
      %724 = vmatprep.subr.bf16.mxu0 0
      %725 = vmatpush1.bf16.msra.mxu0 0
      %726 = vmatprep.subr.bf16.mxu0 0
      %727 = vmatpush1.bf16.msra.mxu0 0
      %728 = vmatprep.subr.bf16.mxu0 0
      %729 = vmatpush1.bf16.msra.mxu0 0
      %730 = vmatprep.subr.bf16.mxu0 0
      %731 = vmatpush1.bf16.msra.mxu0 0
      %732 = vmatprep.subr.bf16.mxu0 0
      %733 = vmatpush1.bf16.msra.mxu0 0
      %734 = vmatprep.subr.bf16.mxu0 0
      %735 = vmatpush1.bf16.msra.mxu0 0
      %736 = vmatprep.subr.bf16.mxu0 0
      %737 = vmatpush1.bf16.msra.mxu0 0
      %738 = vmatprep.subr.bf16.mxu0 %v719
      %739 = vmatpush1.bf16.msra.mxu0 %v716
      %740 = vmatprep.subr.bf16.mxu0 0
      %741 = vmatpush2.bf16.msra.mxu0 0
      %742 = vmatprep.subr.bf16.mxu0 0
      %743 = vmatpush2.bf16.msra.mxu0 0
      %744 = vmatprep.subr.bf16.mxu0 0
      %745 = vmatpush2.bf16.msra.mxu0 0
      %746 = vmatprep.subr.bf16.mxu0 0
      %747 = vmatpush2.bf16.msra.mxu0 0
      %748 = vmatprep.subr.bf16.mxu0 0
      %749 = vmatpush2.bf16.msra.mxu0 0
      %750 = vmatprep.subr.bf16.mxu0 0
      %751 = vmatpush2.bf16.msra.mxu0 0
      %752 = vmatprep.subr.bf16.mxu0 0
      %753 = vmatpush2.bf16.msra.mxu0 0
      %754 = vmatprep.subr.bf16.mxu0 0
      %755 = vmatpush2.bf16.msra.mxu0 0
      %756 = vmatprep.mubr.bf16.mxu0 0
      %757 = vmatmul.mubr.bf16.gmra.mxu0 %v713
      %v758 = vpop.f32.mrf.mxu0
      %v759 = vadd.f32 0.0, %v758
      %v760 = vpop.f32.mrf.mxu0
      %v761 = vadd.f32 0.0, %v760
      %v762 = vpop.f32.mrf.mxu0
      %v763 = vpop.f32.mrf.mxu0
      %764 = vdwg.mxu0
      %765 = vmatprep.subr.bf16.mxu0 0
      %766 = vmatpush1.bf16.msra.mxu0 0
      %767 = vmatprep.subr.bf16.mxu0 0
      %768 = vmatpush1.bf16.msra.mxu0 0
      %769 = vmatprep.subr.bf16.mxu0 0
      %770 = vmatpush1.bf16.msra.mxu0 0
      %771 = vmatprep.subr.bf16.mxu0 0
      %772 = vmatpush1.bf16.msra.mxu0 0
      %773 = vmatprep.subr.bf16.mxu0 0
      %774 = vmatpush1.bf16.msra.mxu0 0
      %775 = vmatprep.subr.bf16.mxu0 0
      %776 = vmatpush1.bf16.msra.mxu0 0
      %777 = vmatprep.subr.bf16.mxu0 0
      %778 = vmatpush1.bf16.msra.mxu0 0
      %779 = vmatprep.subr.bf16.mxu0 0
      %780 = vmatpush1.bf16.msra.mxu0 %v722
      %781 = vmatprep.subr.bf16.mxu0 0
      %782 = vmatpush2.bf16.msra.mxu0 0
      %783 = vmatprep.subr.bf16.mxu0 0
      %784 = vmatpush2.bf16.msra.mxu0 0
      %785 = vmatprep.subr.bf16.mxu0 0
      %786 = vmatpush2.bf16.msra.mxu0 0
      %787 = vmatprep.subr.bf16.mxu0 0
      %788 = vmatpush2.bf16.msra.mxu0 0
      %789 = vmatprep.subr.bf16.mxu0 0
      %790 = vmatpush2.bf16.msra.mxu0 0
      %791 = vmatprep.subr.bf16.mxu0 0
      %792 = vmatpush2.bf16.msra.mxu0 0
      %793 = vmatprep.subr.bf16.mxu0 0
      %794 = vmatpush2.bf16.msra.mxu0 0
      %795 = vmatprep.subr.bf16.mxu0 0
      %796 = vmatpush2.bf16.msra.mxu0 0
      %797 = vmatprep.mubr.bf16.mxu0 0
      %798 = vmatmul.mubr.bf16.gmra.mxu0 %v713
      %v799 = vpop.f32.mrf.mxu0
      %v800 = vadd.f32 0.0, %v799
      %v801 = vpop.f32.mrf.mxu0
      %v802 = vpop.f32.mrf.mxu0
      %v803 = vpop.f32.mrf.mxu0
      %804 = vdwg.mxu0
      %v805 = vadd.f32 %v698, %v759
      %v806 = vadd.f32 %v699, %v761
      %v807 = vadd.f32 %v700, %v800
      %s808 = scalar_lea.vmem %s2, 6
      %v809 = vld [vmem:[%s808] sm:$0x3]
      %810 = vrot.lane.b32.xlu0 %v484, 107
      %v811 = vpop.permute.xlu0 %810
      %812 = vrot.lane.b32.xlu0 %v485, 107
      %v813 = vpop.permute.xlu0 %812
      %814 = vrot.lane.b32.xlu0 %v486, 107
      %v815 = vpop.permute.xlu0 %814
      %vm816 = vcmask 875520
      %v817 = vsel %vm816, %v811, %v813
      %v818 = vsel %vm816, %v813, %v815
      %v820 = vsel %vm391, %v809, 0
      %v823 = vsel %vm497, %v817, 0
      %v826 = vsel %vm497, %v818, 0
      %v829 = vsel %vm497, %v815, 0
      %831 = vmatprep.subr.bf16.mxu0 0
      %832 = vmatpush1.bf16.msra.mxu0 0
      %833 = vmatprep.subr.bf16.mxu0 0
      %834 = vmatpush1.bf16.msra.mxu0 0
      %835 = vmatprep.subr.bf16.mxu0 0
      %836 = vmatpush1.bf16.msra.mxu0 0
      %837 = vmatprep.subr.bf16.mxu0 0
      %838 = vmatpush1.bf16.msra.mxu0 0
      %839 = vmatprep.subr.bf16.mxu0 0
      %840 = vmatpush1.bf16.msra.mxu0 0
      %841 = vmatprep.subr.bf16.mxu0 0
      %842 = vmatpush1.bf16.msra.mxu0 0
      %843 = vmatprep.subr.bf16.mxu0 0
      %844 = vmatpush1.bf16.msra.mxu0 0
      %845 = vmatprep.subr.bf16.mxu0 %v826
      %846 = vmatpush1.bf16.msra.mxu0 %v823
      %847 = vmatprep.subr.bf16.mxu0 0
      %848 = vmatpush2.bf16.msra.mxu0 0
      %849 = vmatprep.subr.bf16.mxu0 0
      %850 = vmatpush2.bf16.msra.mxu0 0
      %851 = vmatprep.subr.bf16.mxu0 0
      %852 = vmatpush2.bf16.msra.mxu0 0
      %853 = vmatprep.subr.bf16.mxu0 0
      %854 = vmatpush2.bf16.msra.mxu0 0
      %855 = vmatprep.subr.bf16.mxu0 0
      %856 = vmatpush2.bf16.msra.mxu0 0
      %857 = vmatprep.subr.bf16.mxu0 0
      %858 = vmatpush2.bf16.msra.mxu0 0
      %859 = vmatprep.subr.bf16.mxu0 0
      %860 = vmatpush2.bf16.msra.mxu0 0
      %861 = vmatprep.subr.bf16.mxu0 0
      %862 = vmatpush2.bf16.msra.mxu0 0
      %863 = vmatprep.mubr.bf16.mxu0 0
      %864 = vmatmul.mubr.bf16.gmra.mxu0 %v820
      %v865 = vpop.f32.mrf.mxu0
      %v866 = vadd.f32 0.0, %v865
      %v867 = vpop.f32.mrf.mxu0
      %v868 = vadd.f32 0.0, %v867
      %v869 = vpop.f32.mrf.mxu0
      %v870 = vpop.f32.mrf.mxu0
      %871 = vdwg.mxu0
      %872 = vmatprep.subr.bf16.mxu0 0
      %873 = vmatpush1.bf16.msra.mxu0 0
      %874 = vmatprep.subr.bf16.mxu0 0
      %875 = vmatpush1.bf16.msra.mxu0 0
      %876 = vmatprep.subr.bf16.mxu0 0
      %877 = vmatpush1.bf16.msra.mxu0 0
      %878 = vmatprep.subr.bf16.mxu0 0
      %879 = vmatpush1.bf16.msra.mxu0 0
      %880 = vmatprep.subr.bf16.mxu0 0
      %881 = vmatpush1.bf16.msra.mxu0 0
      %882 = vmatprep.subr.bf16.mxu0 0
      %883 = vmatpush1.bf16.msra.mxu0 0
      %884 = vmatprep.subr.bf16.mxu0 0
      %885 = vmatpush1.bf16.msra.mxu0 0
      %886 = vmatprep.subr.bf16.mxu0 0
      %887 = vmatpush1.bf16.msra.mxu0 %v829
      %888 = vmatprep.subr.bf16.mxu0 0
      %889 = vmatpush2.bf16.msra.mxu0 0
      %890 = vmatprep.subr.bf16.mxu0 0
      %891 = vmatpush2.bf16.msra.mxu0 0
      %892 = vmatprep.subr.bf16.mxu0 0
      %893 = vmatpush2.bf16.msra.mxu0 0
      %894 = vmatprep.subr.bf16.mxu0 0
      %895 = vmatpush2.bf16.msra.mxu0 0
      %896 = vmatprep.subr.bf16.mxu0 0
      %897 = vmatpush2.bf16.msra.mxu0 0
      %898 = vmatprep.subr.bf16.mxu0 0
      %899 = vmatpush2.bf16.msra.mxu0 0
      %900 = vmatprep.subr.bf16.mxu0 0
      %901 = vmatpush2.bf16.msra.mxu0 0
      %902 = vmatprep.subr.bf16.mxu0 0
      %903 = vmatpush2.bf16.msra.mxu0 0
      %904 = vmatprep.mubr.bf16.mxu0 0
      %905 = vmatmul.mubr.bf16.gmra.mxu0 %v820
      %v906 = vpop.f32.mrf.mxu0
      %v907 = vadd.f32 0.0, %v906
      %v908 = vpop.f32.mrf.mxu0
      %v909 = vpop.f32.mrf.mxu0
      %v910 = vpop.f32.mrf.mxu0
      %911 = vdwg.mxu0
      %v912 = vadd.f32 %v805, %v866
      %v913 = vadd.f32 %v806, %v868
      %v914 = vadd.f32 %v807, %v907
      %v915 = vpack.c.bf16 %v912, %v912
      %v916 = vpack.c.bf16 %v913, %v913
      %v917 = vpack.c.bf16 %v914, %v914
      %v918 = vld [vmem:[%s342] sm:$0xff]
      %v919 = vld [vmem:[%s6] sm:$0xf]
      %921 = vset.pattern.permute.xlu0 0
      %922 = vperm.xlu0 %921, %v919
      %v923 = vpop.permute.xlu0 %922
      %v925 = vld [vmem:[%s4] sm:$0x3]
      %v927 = vcombine.high %v918, %v918
      %v929 = vunpack.c.l.s4 1983009808
      %v930 = vunpack.c.0.s8 %v929
      %v931 = vlaneseq
      %v932 = vshrl.u32 %v931, 7
      %v933 = vsub.s32 %v930, %v932
      %v934 = vrot.slane %v918, %v933
      %v936 = vunpack.c.l.s4 1983009808
      %v937 = vunpack.c.0.s8 %v936
      %v938 = vlaneseq
      %v939 = vshrl.u32 %v938, 7
      %v940 = vsub.s32 %v937, %v939
      %v941 = vrot.slane %v927, %v940
      %v942 = vcombine.high %v934, %v934
      %943 = vrot.lane.b32.xlu0 %v934, 86
      %v944 = vpop.permute.xlu0 %943
      %945 = vrot.lane.b32.xlu0 %v942, 86
      %v946 = vpop.permute.xlu0 %945
      %947 = vrot.lane.b32.xlu0 %v941, 86
      %v948 = vpop.permute.xlu0 %947
      %vm949 = vcmask 703488
      %v950 = vsel %vm949, %v944, %v946
      %v951 = vsel %vm949, %v946, %v948
      %vm952 = vcmask 31744
      %v954 = vsel %vm952, %v925, 0
      %vm956 = vcmask 1041408
      %v958 = vsel %vm956, %v950, 0
      %v961 = vsel %vm956, %v951, 0
      %v964 = vsel %vm956, %v948, 0
      %966 = vmatprep.subr.bf16.mxu0 0
      %967 = vmatpush1.bf16.msra.mxu0 0
      %968 = vmatprep.subr.bf16.mxu0 0
      %969 = vmatpush1.bf16.msra.mxu0 0
      %970 = vmatprep.subr.bf16.mxu0 0
      %971 = vmatpush1.bf16.msra.mxu0 0
      %972 = vmatprep.subr.bf16.mxu0 0
      %973 = vmatpush1.bf16.msra.mxu0 0
      %974 = vmatprep.subr.bf16.mxu0 0
      %975 = vmatpush1.bf16.msra.mxu0 0
      %976 = vmatprep.subr.bf16.mxu0 0
      %977 = vmatpush1.bf16.msra.mxu0 0
      %978 = vmatprep.subr.bf16.mxu0 0
      %979 = vmatpush1.bf16.msra.mxu0 0
      %980 = vmatprep.subr.bf16.mxu0 %v961
      %981 = vmatpush1.bf16.msra.mxu0 %v958
      %982 = vmatprep.subr.bf16.mxu0 0
      %983 = vmatpush2.bf16.msra.mxu0 0
      %984 = vmatprep.subr.bf16.mxu0 0
      %985 = vmatpush2.bf16.msra.mxu0 0
      %986 = vmatprep.subr.bf16.mxu0 0
      %987 = vmatpush2.bf16.msra.mxu0 0
      %988 = vmatprep.subr.bf16.mxu0 0
      %989 = vmatpush2.bf16.msra.mxu0 0
      %990 = vmatprep.subr.bf16.mxu0 0
      %991 = vmatpush2.bf16.msra.mxu0 0
      %992 = vmatprep.subr.bf16.mxu0 0
      %993 = vmatpush2.bf16.msra.mxu0 0
      %994 = vmatprep.subr.bf16.mxu0 0
      %995 = vmatpush2.bf16.msra.mxu0 0
      %996 = vmatprep.subr.bf16.mxu0 0
      %997 = vmatpush2.bf16.msra.mxu0 0
      %998 = vmatprep.mubr.bf16.mxu0 0
      %999 = vmatmul.mubr.bf16.gmra.mxu0 %v954
      %v1000 = vpop.f32.mrf.mxu0
      %v1001 = vadd.f32 0.0, %v1000
      %v1002 = vpop.f32.mrf.mxu0
      %v1003 = vadd.f32 0.0, %v1002
      %v1004 = vpop.f32.mrf.mxu0
      %v1005 = vpop.f32.mrf.mxu0
      %1006 = vdwg.mxu0
      %1007 = vmatprep.subr.bf16.mxu0 0
      %1008 = vmatpush1.bf16.msra.mxu0 0
      %1009 = vmatprep.subr.bf16.mxu0 0
      %1010 = vmatpush1.bf16.msra.mxu0 0
      %1011 = vmatprep.subr.bf16.mxu0 0
      %1012 = vmatpush1.bf16.msra.mxu0 0
      %1013 = vmatprep.subr.bf16.mxu0 0
      %1014 = vmatpush1.bf16.msra.mxu0 0
      %1015 = vmatprep.subr.bf16.mxu0 0
      %1016 = vmatpush1.bf16.msra.mxu0 0
      %1017 = vmatprep.subr.bf16.mxu0 0
      %1018 = vmatpush1.bf16.msra.mxu0 0
      %1019 = vmatprep.subr.bf16.mxu0 0
      %1020 = vmatpush1.bf16.msra.mxu0 0
      %1021 = vmatprep.subr.bf16.mxu0 0
      %1022 = vmatpush1.bf16.msra.mxu0 %v964
      %1023 = vmatprep.subr.bf16.mxu0 0
      %1024 = vmatpush2.bf16.msra.mxu0 0
      %1025 = vmatprep.subr.bf16.mxu0 0
      %1026 = vmatpush2.bf16.msra.mxu0 0
      %1027 = vmatprep.subr.bf16.mxu0 0
      %1028 = vmatpush2.bf16.msra.mxu0 0
      %1029 = vmatprep.subr.bf16.mxu0 0
      %1030 = vmatpush2.bf16.msra.mxu0 0
      %1031 = vmatprep.subr.bf16.mxu0 0
      %1032 = vmatpush2.bf16.msra.mxu0 0
      %1033 = vmatprep.subr.bf16.mxu0 0
      %1034 = vmatpush2.bf16.msra.mxu0 0
      %1035 = vmatprep.subr.bf16.mxu0 0
      %1036 = vmatpush2.bf16.msra.mxu0 0
      %1037 = vmatprep.subr.bf16.mxu0 0
      %1038 = vmatpush2.bf16.msra.mxu0 0
      %1039 = vmatprep.mubr.bf16.mxu0 0
      %1040 = vmatmul.mubr.bf16.gmra.mxu0 %v954
      %v1041 = vpop.f32.mrf.mxu0
      %v1042 = vadd.f32 0.0, %v1041
      %v1043 = vpop.f32.mrf.mxu0
      %v1044 = vpop.f32.mrf.mxu0
      %v1045 = vpop.f32.mrf.mxu0
      %1046 = vdwg.mxu0
      %v1047 = vadd.f32 %v923, %v1001
      %v1048 = vadd.f32 %v923, %v1003
      %v1049 = vadd.f32 %v923, %v1042
      %v1050 = vld [vmem:[%s5] sm:$0x3]
      %v1052 = vsel %vm952, %v1050, 0
      %v1055 = vsel %vm956, %v915, 0
      %v1058 = vsel %vm956, %v916, 0
      %v1061 = vsel %vm956, %v917, 0
      %1063 = vmatprep.subr.bf16.mxu0 0
      %1064 = vmatpush1.bf16.msra.mxu0 0
      %1065 = vmatprep.subr.bf16.mxu0 0
      %1066 = vmatpush1.bf16.msra.mxu0 0
      %1067 = vmatprep.subr.bf16.mxu0 0
      %1068 = vmatpush1.bf16.msra.mxu0 0
      %1069 = vmatprep.subr.bf16.mxu0 0
      %1070 = vmatpush1.bf16.msra.mxu0 0
      %1071 = vmatprep.subr.bf16.mxu0 0
      %1072 = vmatpush1.bf16.msra.mxu0 0
      %1073 = vmatprep.subr.bf16.mxu0 0
      %1074 = vmatpush1.bf16.msra.mxu0 0
      %1075 = vmatprep.subr.bf16.mxu0 0
      %1076 = vmatpush1.bf16.msra.mxu0 0
      %1077 = vmatprep.subr.bf16.mxu0 %v1058
      %1078 = vmatpush1.bf16.msra.mxu0 %v1055
      %1079 = vmatprep.subr.bf16.mxu0 0
      %1080 = vmatpush2.bf16.msra.mxu0 0
      %1081 = vmatprep.subr.bf16.mxu0 0
      %1082 = vmatpush2.bf16.msra.mxu0 0
      %1083 = vmatprep.subr.bf16.mxu0 0
      %1084 = vmatpush2.bf16.msra.mxu0 0
      %1085 = vmatprep.subr.bf16.mxu0 0
      %1086 = vmatpush2.bf16.msra.mxu0 0
      %1087 = vmatprep.subr.bf16.mxu0 0
      %1088 = vmatpush2.bf16.msra.mxu0 0
      %1089 = vmatprep.subr.bf16.mxu0 0
      %1090 = vmatpush2.bf16.msra.mxu0 0
      %1091 = vmatprep.subr.bf16.mxu0 0
      %1092 = vmatpush2.bf16.msra.mxu0 0
      %1093 = vmatprep.subr.bf16.mxu0 0
      %1094 = vmatpush2.bf16.msra.mxu0 0
      %1095 = vmatprep.mubr.bf16.mxu0 0
      %1096 = vmatmul.mubr.bf16.gmra.mxu0 %v1052
      %v1097 = vpop.f32.mrf.mxu0
      %v1098 = vadd.f32 0.0, %v1097
      %v1099 = vpop.f32.mrf.mxu0
      %v1100 = vadd.f32 0.0, %v1099
      %v1101 = vpop.f32.mrf.mxu0
      %v1102 = vpop.f32.mrf.mxu0
      %1103 = vdwg.mxu0
      %1104 = vmatprep.subr.bf16.mxu0 0
      %1105 = vmatpush1.bf16.msra.mxu0 0
      %1106 = vmatprep.subr.bf16.mxu0 0
      %1107 = vmatpush1.bf16.msra.mxu0 0
      %1108 = vmatprep.subr.bf16.mxu0 0
      %1109 = vmatpush1.bf16.msra.mxu0 0
      %1110 = vmatprep.subr.bf16.mxu0 0
      %1111 = vmatpush1.bf16.msra.mxu0 0
      %1112 = vmatprep.subr.bf16.mxu0 0
      %1113 = vmatpush1.bf16.msra.mxu0 0
      %1114 = vmatprep.subr.bf16.mxu0 0
      %1115 = vmatpush1.bf16.msra.mxu0 0
      %1116 = vmatprep.subr.bf16.mxu0 0
      %1117 = vmatpush1.bf16.msra.mxu0 0
      %1118 = vmatprep.subr.bf16.mxu0 0
      %1119 = vmatpush1.bf16.msra.mxu0 %v1061
      %1120 = vmatprep.subr.bf16.mxu0 0
      %1121 = vmatpush2.bf16.msra.mxu0 0
      %1122 = vmatprep.subr.bf16.mxu0 0
      %1123 = vmatpush2.bf16.msra.mxu0 0
      %1124 = vmatprep.subr.bf16.mxu0 0
      %1125 = vmatpush2.bf16.msra.mxu0 0
      %1126 = vmatprep.subr.bf16.mxu0 0
      %1127 = vmatpush2.bf16.msra.mxu0 0
      %1128 = vmatprep.subr.bf16.mxu0 0
      %1129 = vmatpush2.bf16.msra.mxu0 0
      %1130 = vmatprep.subr.bf16.mxu0 0
      %1131 = vmatpush2.bf16.msra.mxu0 0
      %1132 = vmatprep.subr.bf16.mxu0 0
      %1133 = vmatpush2.bf16.msra.mxu0 0
      %1134 = vmatprep.subr.bf16.mxu0 0
      %1135 = vmatpush2.bf16.msra.mxu0 0
      %1136 = vmatprep.mubr.bf16.mxu0 0
      %1137 = vmatmul.mubr.bf16.gmra.mxu0 %v1052
      %v1138 = vpop.f32.mrf.mxu0
      %v1139 = vadd.f32 0.0, %v1138
      %v1140 = vpop.f32.mrf.mxu0
      %v1141 = vpop.f32.mrf.mxu0
      %v1142 = vpop.f32.mrf.mxu0
      %1143 = vdwg.mxu0
      %v1144 = vadd.f32 %v1047, %v1098
      %v1145 = vadd.f32 %v1048, %v1100
      %v1146 = vadd.f32 %v1049, %v1139
      %s1147 = scalar_lea.vmem %s4, 2
      %v1148 = vld [vmem:[%s1147] sm:$0x3]
      %1149 = vrot.lane.b32.xlu0 %v934, 85
      %v1150 = vpop.permute.xlu0 %1149
      %1151 = vrot.lane.b32.xlu0 %v942, 85
      %v1152 = vpop.permute.xlu0 %1151
      %1153 = vrot.lane.b32.xlu0 %v941, 85
      %v1154 = vpop.permute.xlu0 %1153
      %vm1155 = vcmask 695296
      %v1156 = vsel %vm1155, %v1150, %v1152
      %v1157 = vsel %vm1155, %v1152, %v1154
      %v1159 = vsel %vm952, %v1148, 0
      %v1162 = vsel %vm956, %v1156, 0
      %v1165 = vsel %vm956, %v1157, 0
      %v1168 = vsel %vm956, %v1154, 0
      %1170 = vmatprep.subr.bf16.mxu0 0
      %1171 = vmatpush1.bf16.msra.mxu0 0
      %1172 = vmatprep.subr.bf16.mxu0 0
      %1173 = vmatpush1.bf16.msra.mxu0 0
      %1174 = vmatprep.subr.bf16.mxu0 0
      %1175 = vmatpush1.bf16.msra.mxu0 0
      %1176 = vmatprep.subr.bf16.mxu0 0
      %1177 = vmatpush1.bf16.msra.mxu0 0
      %1178 = vmatprep.subr.bf16.mxu0 0
      %1179 = vmatpush1.bf16.msra.mxu0 0
      %1180 = vmatprep.subr.bf16.mxu0 0
      %1181 = vmatpush1.bf16.msra.mxu0 0
      %1182 = vmatprep.subr.bf16.mxu0 0
      %1183 = vmatpush1.bf16.msra.mxu0 0
      %1184 = vmatprep.subr.bf16.mxu0 %v1165
      %1185 = vmatpush1.bf16.msra.mxu0 %v1162
      %1186 = vmatprep.subr.bf16.mxu0 0
      %1187 = vmatpush2.bf16.msra.mxu0 0
      %1188 = vmatprep.subr.bf16.mxu0 0
      %1189 = vmatpush2.bf16.msra.mxu0 0
      %1190 = vmatprep.subr.bf16.mxu0 0
      %1191 = vmatpush2.bf16.msra.mxu0 0
      %1192 = vmatprep.subr.bf16.mxu0 0
      %1193 = vmatpush2.bf16.msra.mxu0 0
      %1194 = vmatprep.subr.bf16.mxu0 0
      %1195 = vmatpush2.bf16.msra.mxu0 0
      %1196 = vmatprep.subr.bf16.mxu0 0
      %1197 = vmatpush2.bf16.msra.mxu0 0
      %1198 = vmatprep.subr.bf16.mxu0 0
      %1199 = vmatpush2.bf16.msra.mxu0 0
      %1200 = vmatprep.subr.bf16.mxu0 0
      %1201 = vmatpush2.bf16.msra.mxu0 0
      %1202 = vmatprep.mubr.bf16.mxu0 0
      %1203 = vmatmul.mubr.bf16.gmra.mxu0 %v1159
      %v1204 = vpop.f32.mrf.mxu0
      %v1205 = vadd.f32 0.0, %v1204
      %v1206 = vpop.f32.mrf.mxu0
      %v1207 = vadd.f32 0.0, %v1206
      %v1208 = vpop.f32.mrf.mxu0
      %v1209 = vpop.f32.mrf.mxu0
      %1210 = vdwg.mxu0
      %1211 = vmatprep.subr.bf16.mxu0 0
      %1212 = vmatpush1.bf16.msra.mxu0 0
      %1213 = vmatprep.subr.bf16.mxu0 0
      %1214 = vmatpush1.bf16.msra.mxu0 0
      %1215 = vmatprep.subr.bf16.mxu0 0
      %1216 = vmatpush1.bf16.msra.mxu0 0
      %1217 = vmatprep.subr.bf16.mxu0 0
      %1218 = vmatpush1.bf16.msra.mxu0 0
      %1219 = vmatprep.subr.bf16.mxu0 0
      %1220 = vmatpush1.bf16.msra.mxu0 0
      %1221 = vmatprep.subr.bf16.mxu0 0
      %1222 = vmatpush1.bf16.msra.mxu0 0
      %1223 = vmatprep.subr.bf16.mxu0 0
      %1224 = vmatpush1.bf16.msra.mxu0 0
      %1225 = vmatprep.subr.bf16.mxu0 0
      %1226 = vmatpush1.bf16.msra.mxu0 %v1168
      %1227 = vmatprep.subr.bf16.mxu0 0
      %1228 = vmatpush2.bf16.msra.mxu0 0
      %1229 = vmatprep.subr.bf16.mxu0 0
      %1230 = vmatpush2.bf16.msra.mxu0 0
      %1231 = vmatprep.subr.bf16.mxu0 0
      %1232 = vmatpush2.bf16.msra.mxu0 0
      %1233 = vmatprep.subr.bf16.mxu0 0
      %1234 = vmatpush2.bf16.msra.mxu0 0
      %1235 = vmatprep.subr.bf16.mxu0 0
      %1236 = vmatpush2.bf16.msra.mxu0 0
      %1237 = vmatprep.subr.bf16.mxu0 0
      %1238 = vmatpush2.bf16.msra.mxu0 0
      %1239 = vmatprep.subr.bf16.mxu0 0
      %1240 = vmatpush2.bf16.msra.mxu0 0
      %1241 = vmatprep.subr.bf16.mxu0 0
      %1242 = vmatpush2.bf16.msra.mxu0 0
      %1243 = vmatprep.mubr.bf16.mxu0 0
      %1244 = vmatmul.mubr.bf16.gmra.mxu0 %v1159
      %v1245 = vpop.f32.mrf.mxu0
      %v1246 = vadd.f32 0.0, %v1245
      %v1247 = vpop.f32.mrf.mxu0
      %v1248 = vpop.f32.mrf.mxu0
      %v1249 = vpop.f32.mrf.mxu0
      %1250 = vdwg.mxu0
      %v1251 = vadd.f32 %v1144, %v1205
      %v1252 = vadd.f32 %v1145, %v1207
      %v1253 = vadd.f32 %v1146, %v1246
      %s1254 = scalar_lea.vmem %s5, 2
      %v1255 = vld [vmem:[%s1254] sm:$0x3]
      %1259 = vrot.lane.b32.xlu0 %v915, 127
      %v1260 = vpop.permute.xlu0 %1259
      %1261 = vrot.lane.b32.xlu0 %v916, 127
      %v1262 = vpop.permute.xlu0 %1261
      %1263 = vrot.lane.b32.xlu0 %v917, 127
      %v1264 = vpop.permute.xlu0 %1263
      %v1265 = vsel %vm602, %v1260, %v1262
      %v1266 = vsel %vm602, %v1262, %v1264
      %v1268 = vsel %vm952, %v1255, 0
      %v1271 = vsel %vm956, %v1265, 0
      %v1274 = vsel %vm956, %v1266, 0
      %v1277 = vsel %vm956, %v1264, 0
      %1279 = vmatprep.subr.bf16.mxu0 0
      %1280 = vmatpush1.bf16.msra.mxu0 0
      %1281 = vmatprep.subr.bf16.mxu0 0
      %1282 = vmatpush1.bf16.msra.mxu0 0
      %1283 = vmatprep.subr.bf16.mxu0 0
      %1284 = vmatpush1.bf16.msra.mxu0 0
      %1285 = vmatprep.subr.bf16.mxu0 0
      %1286 = vmatpush1.bf16.msra.mxu0 0
      %1287 = vmatprep.subr.bf16.mxu0 0
      %1288 = vmatpush1.bf16.msra.mxu0 0
      %1289 = vmatprep.subr.bf16.mxu0 0
      %1290 = vmatpush1.bf16.msra.mxu0 0
      %1291 = vmatprep.subr.bf16.mxu0 0
      %1292 = vmatpush1.bf16.msra.mxu0 0
      %1293 = vmatprep.subr.bf16.mxu0 %v1274
      %1294 = vmatpush1.bf16.msra.mxu0 %v1271
      %1295 = vmatprep.subr.bf16.mxu0 0
      %1296 = vmatpush2.bf16.msra.mxu0 0
      %1297 = vmatprep.subr.bf16.mxu0 0
      %1298 = vmatpush2.bf16.msra.mxu0 0
      %1299 = vmatprep.subr.bf16.mxu0 0
      %1300 = vmatpush2.bf16.msra.mxu0 0
      %1301 = vmatprep.subr.bf16.mxu0 0
      %1302 = vmatpush2.bf16.msra.mxu0 0
      %1303 = vmatprep.subr.bf16.mxu0 0
      %1304 = vmatpush2.bf16.msra.mxu0 0
      %1305 = vmatprep.subr.bf16.mxu0 0
      %1306 = vmatpush2.bf16.msra.mxu0 0
      %1307 = vmatprep.subr.bf16.mxu0 0
      %1308 = vmatpush2.bf16.msra.mxu0 0
      %1309 = vmatprep.subr.bf16.mxu0 0
      %1310 = vmatpush2.bf16.msra.mxu0 0
      %1311 = vmatprep.mubr.bf16.mxu0 0
      %1312 = vmatmul.mubr.bf16.gmra.mxu0 %v1268
      %v1313 = vpop.f32.mrf.mxu0
      %v1314 = vadd.f32 0.0, %v1313
      %v1315 = vpop.f32.mrf.mxu0
      %v1316 = vadd.f32 0.0, %v1315
      %v1317 = vpop.f32.mrf.mxu0
      %v1318 = vpop.f32.mrf.mxu0
      %1319 = vdwg.mxu0
      %1320 = vmatprep.subr.bf16.mxu0 0
      %1321 = vmatpush1.bf16.msra.mxu0 0
      %1322 = vmatprep.subr.bf16.mxu0 0
      %1323 = vmatpush1.bf16.msra.mxu0 0
      %1324 = vmatprep.subr.bf16.mxu0 0
      %1325 = vmatpush1.bf16.msra.mxu0 0
      %1326 = vmatprep.subr.bf16.mxu0 0
      %1327 = vmatpush1.bf16.msra.mxu0 0
      %1328 = vmatprep.subr.bf16.mxu0 0
      %1329 = vmatpush1.bf16.msra.mxu0 0
      %1330 = vmatprep.subr.bf16.mxu0 0
      %1331 = vmatpush1.bf16.msra.mxu0 0
      %1332 = vmatprep.subr.bf16.mxu0 0
      %1333 = vmatpush1.bf16.msra.mxu0 0
      %1334 = vmatprep.subr.bf16.mxu0 0
      %1335 = vmatpush1.bf16.msra.mxu0 %v1277
      %1336 = vmatprep.subr.bf16.mxu0 0
      %1337 = vmatpush2.bf16.msra.mxu0 0
      %1338 = vmatprep.subr.bf16.mxu0 0
      %1339 = vmatpush2.bf16.msra.mxu0 0
      %1340 = vmatprep.subr.bf16.mxu0 0
      %1341 = vmatpush2.bf16.msra.mxu0 0
      %1342 = vmatprep.subr.bf16.mxu0 0
      %1343 = vmatpush2.bf16.msra.mxu0 0
      %1344 = vmatprep.subr.bf16.mxu0 0
      %1345 = vmatpush2.bf16.msra.mxu0 0
      %1346 = vmatprep.subr.bf16.mxu0 0
      %1347 = vmatpush2.bf16.msra.mxu0 0
      %1348 = vmatprep.subr.bf16.mxu0 0
      %1349 = vmatpush2.bf16.msra.mxu0 0
      %1350 = vmatprep.subr.bf16.mxu0 0
      %1351 = vmatpush2.bf16.msra.mxu0 0
      %1352 = vmatprep.mubr.bf16.mxu0 0
      %1353 = vmatmul.mubr.bf16.gmra.mxu0 %v1268
      %v1354 = vpop.f32.mrf.mxu0
      %v1355 = vadd.f32 0.0, %v1354
      %v1356 = vpop.f32.mrf.mxu0
      %v1357 = vpop.f32.mrf.mxu0
      %v1358 = vpop.f32.mrf.mxu0
      %1359 = vdwg.mxu0
      %v1360 = vadd.f32 %v1251, %v1314
      %v1361 = vadd.f32 %v1252, %v1316
      %v1362 = vadd.f32 %v1253, %v1355
      %s1363 = scalar_lea.vmem %s4, 4
      %v1364 = vld [vmem:[%s1363] sm:$0x3]
      %1365 = vrot.lane.b32.xlu0 %v934, 84
      %v1366 = vpop.permute.xlu0 %1365
      %1367 = vrot.lane.b32.xlu0 %v942, 84
      %v1368 = vpop.permute.xlu0 %1367
      %1369 = vrot.lane.b32.xlu0 %v941, 84
      %v1370 = vpop.permute.xlu0 %1369
      %vm1371 = vcmask 687104
      %v1372 = vsel %vm1371, %v1366, %v1368
      %v1373 = vsel %vm1371, %v1368, %v1370
      %v1375 = vsel %vm952, %v1364, 0
      %v1378 = vsel %vm956, %v1372, 0
      %v1381 = vsel %vm956, %v1373, 0
      %v1384 = vsel %vm956, %v1370, 0
      %1386 = vmatprep.subr.bf16.mxu0 0
      %1387 = vmatpush1.bf16.msra.mxu0 0
      %1388 = vmatprep.subr.bf16.mxu0 0
      %1389 = vmatpush1.bf16.msra.mxu0 0
      %1390 = vmatprep.subr.bf16.mxu0 0
      %1391 = vmatpush1.bf16.msra.mxu0 0
      %1392 = vmatprep.subr.bf16.mxu0 0
      %1393 = vmatpush1.bf16.msra.mxu0 0
      %1394 = vmatprep.subr.bf16.mxu0 0
      %1395 = vmatpush1.bf16.msra.mxu0 0
      %1396 = vmatprep.subr.bf16.mxu0 0
      %1397 = vmatpush1.bf16.msra.mxu0 0
      %1398 = vmatprep.subr.bf16.mxu0 0
      %1399 = vmatpush1.bf16.msra.mxu0 0
      %1400 = vmatprep.subr.bf16.mxu0 %v1381
      %1401 = vmatpush1.bf16.msra.mxu0 %v1378
      %1402 = vmatprep.subr.bf16.mxu0 0
      %1403 = vmatpush2.bf16.msra.mxu0 0
      %1404 = vmatprep.subr.bf16.mxu0 0
      %1405 = vmatpush2.bf16.msra.mxu0 0
      %1406 = vmatprep.subr.bf16.mxu0 0
      %1407 = vmatpush2.bf16.msra.mxu0 0
      %1408 = vmatprep.subr.bf16.mxu0 0
      %1409 = vmatpush2.bf16.msra.mxu0 0
      %1410 = vmatprep.subr.bf16.mxu0 0
      %1411 = vmatpush2.bf16.msra.mxu0 0
      %1412 = vmatprep.subr.bf16.mxu0 0
      %1413 = vmatpush2.bf16.msra.mxu0 0
      %1414 = vmatprep.subr.bf16.mxu0 0
      %1415 = vmatpush2.bf16.msra.mxu0 0
      %1416 = vmatprep.subr.bf16.mxu0 0
      %1417 = vmatpush2.bf16.msra.mxu0 0
      %1418 = vmatprep.mubr.bf16.mxu0 0
      %1419 = vmatmul.mubr.bf16.gmra.mxu0 %v1375
      %v1420 = vpop.f32.mrf.mxu0
      %v1421 = vadd.f32 0.0, %v1420
      %v1422 = vpop.f32.mrf.mxu0
      %v1423 = vadd.f32 0.0, %v1422
      %v1424 = vpop.f32.mrf.mxu0
      %v1425 = vpop.f32.mrf.mxu0
      %1426 = vdwg.mxu0
      %1427 = vmatprep.subr.bf16.mxu0 0
      %1428 = vmatpush1.bf16.msra.mxu0 0
      %1429 = vmatprep.subr.bf16.mxu0 0
      %1430 = vmatpush1.bf16.msra.mxu0 0
      %1431 = vmatprep.subr.bf16.mxu0 0
      %1432 = vmatpush1.bf16.msra.mxu0 0
      %1433 = vmatprep.subr.bf16.mxu0 0
      %1434 = vmatpush1.bf16.msra.mxu0 0
      %1435 = vmatprep.subr.bf16.mxu0 0
      %1436 = vmatpush1.bf16.msra.mxu0 0
      %1437 = vmatprep.subr.bf16.mxu0 0
      %1438 = vmatpush1.bf16.msra.mxu0 0
      %1439 = vmatprep.subr.bf16.mxu0 0
      %1440 = vmatpush1.bf16.msra.mxu0 0
      %1441 = vmatprep.subr.bf16.mxu0 0
      %1442 = vmatpush1.bf16.msra.mxu0 %v1384
      %1443 = vmatprep.subr.bf16.mxu0 0
      %1444 = vmatpush2.bf16.msra.mxu0 0
      %1445 = vmatprep.subr.bf16.mxu0 0
      %1446 = vmatpush2.bf16.msra.mxu0 0
      %1447 = vmatprep.subr.bf16.mxu0 0
      %1448 = vmatpush2.bf16.msra.mxu0 0
      %1449 = vmatprep.subr.bf16.mxu0 0
      %1450 = vmatpush2.bf16.msra.mxu0 0
      %1451 = vmatprep.subr.bf16.mxu0 0
      %1452 = vmatpush2.bf16.msra.mxu0 0
      %1453 = vmatprep.subr.bf16.mxu0 0
      %1454 = vmatpush2.bf16.msra.mxu0 0
      %1455 = vmatprep.subr.bf16.mxu0 0
      %1456 = vmatpush2.bf16.msra.mxu0 0
      %1457 = vmatprep.subr.bf16.mxu0 0
      %1458 = vmatpush2.bf16.msra.mxu0 0
      %1459 = vmatprep.mubr.bf16.mxu0 0
      %1460 = vmatmul.mubr.bf16.gmra.mxu0 %v1375
      %v1461 = vpop.f32.mrf.mxu0
      %v1462 = vadd.f32 0.0, %v1461
      %v1463 = vpop.f32.mrf.mxu0
      %v1464 = vpop.f32.mrf.mxu0
      %v1465 = vpop.f32.mrf.mxu0
      %1466 = vdwg.mxu0
      %v1467 = vadd.f32 %v1360, %v1421
      %v1468 = vadd.f32 %v1361, %v1423
      %v1469 = vadd.f32 %v1362, %v1462
      %s1470 = scalar_lea.vmem %s5, 4
      %v1471 = vld [vmem:[%s1470] sm:$0x3]
      %1472 = vrot.lane.b32.xlu0 %v915, 126
      %v1473 = vpop.permute.xlu0 %1472
      %1474 = vrot.lane.b32.xlu0 %v916, 126
      %v1475 = vpop.permute.xlu0 %1474
      %1476 = vrot.lane.b32.xlu0 %v917, 126
      %v1477 = vpop.permute.xlu0 %1476
      %vm1478 = vcmask 1031168
      %v1479 = vsel %vm1478, %v1473, %v1475
      %v1480 = vsel %vm1478, %v1475, %v1477
      %v1482 = vsel %vm952, %v1471, 0
      %v1485 = vsel %vm956, %v1479, 0
      %v1488 = vsel %vm956, %v1480, 0
      %v1491 = vsel %vm956, %v1477, 0
      %1493 = vmatprep.subr.bf16.mxu0 0
      %1494 = vmatpush1.bf16.msra.mxu0 0
      %1495 = vmatprep.subr.bf16.mxu0 0
      %1496 = vmatpush1.bf16.msra.mxu0 0
      %1497 = vmatprep.subr.bf16.mxu0 0
      %1498 = vmatpush1.bf16.msra.mxu0 0
      %1499 = vmatprep.subr.bf16.mxu0 0
      %1500 = vmatpush1.bf16.msra.mxu0 0
      %1501 = vmatprep.subr.bf16.mxu0 0
      %1502 = vmatpush1.bf16.msra.mxu0 0
      %1503 = vmatprep.subr.bf16.mxu0 0
      %1504 = vmatpush1.bf16.msra.mxu0 0
      %1505 = vmatprep.subr.bf16.mxu0 0
      %1506 = vmatpush1.bf16.msra.mxu0 0
      %1507 = vmatprep.subr.bf16.mxu0 %v1488
      %1508 = vmatpush1.bf16.msra.mxu0 %v1485
      %1509 = vmatprep.subr.bf16.mxu0 0
      %1510 = vmatpush2.bf16.msra.mxu0 0
      %1511 = vmatprep.subr.bf16.mxu0 0
      %1512 = vmatpush2.bf16.msra.mxu0 0
      %1513 = vmatprep.subr.bf16.mxu0 0
      %1514 = vmatpush2.bf16.msra.mxu0 0
      %1515 = vmatprep.subr.bf16.mxu0 0
      %1516 = vmatpush2.bf16.msra.mxu0 0
      %1517 = vmatprep.subr.bf16.mxu0 0
      %1518 = vmatpush2.bf16.msra.mxu0 0
      %1519 = vmatprep.subr.bf16.mxu0 0
      %1520 = vmatpush2.bf16.msra.mxu0 0
      %1521 = vmatprep.subr.bf16.mxu0 0
      %1522 = vmatpush2.bf16.msra.mxu0 0
      %1523 = vmatprep.subr.bf16.mxu0 0
      %1524 = vmatpush2.bf16.msra.mxu0 0
      %1525 = vmatprep.mubr.bf16.mxu0 0
      %1526 = vmatmul.mubr.bf16.gmra.mxu0 %v1482
      %v1527 = vpop.f32.mrf.mxu0
      %v1528 = vadd.f32 0.0, %v1527
      %v1529 = vpop.f32.mrf.mxu0
      %v1530 = vadd.f32 0.0, %v1529
      %v1531 = vpop.f32.mrf.mxu0
      %v1532 = vpop.f32.mrf.mxu0
      %1533 = vdwg.mxu0
      %1534 = vmatprep.subr.bf16.mxu0 0
      %1535 = vmatpush1.bf16.msra.mxu0 0
      %1536 = vmatprep.subr.bf16.mxu0 0
      %1537 = vmatpush1.bf16.msra.mxu0 0
      %1538 = vmatprep.subr.bf16.mxu0 0
      %1539 = vmatpush1.bf16.msra.mxu0 0
      %1540 = vmatprep.subr.bf16.mxu0 0
      %1541 = vmatpush1.bf16.msra.mxu0 0
      %1542 = vmatprep.subr.bf16.mxu0 0
      %1543 = vmatpush1.bf16.msra.mxu0 0
      %1544 = vmatprep.subr.bf16.mxu0 0
      %1545 = vmatpush1.bf16.msra.mxu0 0
      %1546 = vmatprep.subr.bf16.mxu0 0
      %1547 = vmatpush1.bf16.msra.mxu0 0
      %1548 = vmatprep.subr.bf16.mxu0 0
      %1549 = vmatpush1.bf16.msra.mxu0 %v1491
      %1550 = vmatprep.subr.bf16.mxu0 0
      %1551 = vmatpush2.bf16.msra.mxu0 0
      %1552 = vmatprep.subr.bf16.mxu0 0
      %1553 = vmatpush2.bf16.msra.mxu0 0
      %1554 = vmatprep.subr.bf16.mxu0 0
      %1555 = vmatpush2.bf16.msra.mxu0 0
      %1556 = vmatprep.subr.bf16.mxu0 0
      %1557 = vmatpush2.bf16.msra.mxu0 0
      %1558 = vmatprep.subr.bf16.mxu0 0
      %1559 = vmatpush2.bf16.msra.mxu0 0
      %1560 = vmatprep.subr.bf16.mxu0 0
      %1561 = vmatpush2.bf16.msra.mxu0 0
      %1562 = vmatprep.subr.bf16.mxu0 0
      %1563 = vmatpush2.bf16.msra.mxu0 0
      %1564 = vmatprep.subr.bf16.mxu0 0
      %1565 = vmatpush2.bf16.msra.mxu0 0
      %1566 = vmatprep.mubr.bf16.mxu0 0
      %1567 = vmatmul.mubr.bf16.gmra.mxu0 %v1482
      %v1568 = vpop.f32.mrf.mxu0
      %v1569 = vadd.f32 0.0, %v1568
      %v1570 = vpop.f32.mrf.mxu0
      %v1571 = vpop.f32.mrf.mxu0
      %v1572 = vpop.f32.mrf.mxu0
      %1573 = vdwg.mxu0
      %v1574 = vadd.f32 %v1467, %v1528
      %v1575 = vadd.f32 %v1468, %v1530
      %v1576 = vadd.f32 %v1469, %v1569
      %s1577 = scalar_lea.vmem %s4, 6
      %v1578 = vld [vmem:[%s1577] sm:$0x3]
      %1579 = vrot.lane.b32.xlu0 %v934, 66
      %v1580 = vpop.permute.xlu0 %1579
      %1581 = vrot.lane.b32.xlu0 %v942, 66
      %v1582 = vpop.permute.xlu0 %1581
      %1583 = vrot.lane.b32.xlu0 %v941, 66
      %v1584 = vpop.permute.xlu0 %1583
      %vm1585 = vcmask 539648
      %v1586 = vsel %vm1585, %v1580, %v1582
      %v1587 = vsel %vm1585, %v1582, %v1584
      %v1589 = vsel %vm952, %v1578, 0
      %v1592 = vsel %vm956, %v1586, 0
      %v1595 = vsel %vm956, %v1587, 0
      %v1598 = vsel %vm956, %v1584, 0
      %1600 = vmatprep.subr.bf16.mxu0 0
      %1601 = vmatpush1.bf16.msra.mxu0 0
      %1602 = vmatprep.subr.bf16.mxu0 0
      %1603 = vmatpush1.bf16.msra.mxu0 0
      %1604 = vmatprep.subr.bf16.mxu0 0
      %1605 = vmatpush1.bf16.msra.mxu0 0
      %1606 = vmatprep.subr.bf16.mxu0 0
      %1607 = vmatpush1.bf16.msra.mxu0 0
      %1608 = vmatprep.subr.bf16.mxu0 0
      %1609 = vmatpush1.bf16.msra.mxu0 0
      %1610 = vmatprep.subr.bf16.mxu0 0
      %1611 = vmatpush1.bf16.msra.mxu0 0
      %1612 = vmatprep.subr.bf16.mxu0 0
      %1613 = vmatpush1.bf16.msra.mxu0 0
      %1614 = vmatprep.subr.bf16.mxu0 %v1595
      %1615 = vmatpush1.bf16.msra.mxu0 %v1592
      %1616 = vmatprep.subr.bf16.mxu0 0
      %1617 = vmatpush2.bf16.msra.mxu0 0
      %1618 = vmatprep.subr.bf16.mxu0 0
      %1619 = vmatpush2.bf16.msra.mxu0 0
      %1620 = vmatprep.subr.bf16.mxu0 0
      %1621 = vmatpush2.bf16.msra.mxu0 0
      %1622 = vmatprep.subr.bf16.mxu0 0
      %1623 = vmatpush2.bf16.msra.mxu0 0
      %1624 = vmatprep.subr.bf16.mxu0 0
      %1625 = vmatpush2.bf16.msra.mxu0 0
      %1626 = vmatprep.subr.bf16.mxu0 0
      %1627 = vmatpush2.bf16.msra.mxu0 0
      %1628 = vmatprep.subr.bf16.mxu0 0
      %1629 = vmatpush2.bf16.msra.mxu0 0
      %1630 = vmatprep.subr.bf16.mxu0 0
      %1631 = vmatpush2.bf16.msra.mxu0 0
      %1632 = vmatprep.mubr.bf16.mxu0 0
      %1633 = vmatmul.mubr.bf16.gmra.mxu0 %v1589
      %v1634 = vpop.f32.mrf.mxu0
      %v1635 = vadd.f32 0.0, %v1634
      %v1636 = vpop.f32.mrf.mxu0
      %v1637 = vadd.f32 0.0, %v1636
      %v1638 = vpop.f32.mrf.mxu0
      %v1639 = vpop.f32.mrf.mxu0
      %1640 = vdwg.mxu0
      %1641 = vmatprep.subr.bf16.mxu0 0
      %1642 = vmatpush1.bf16.msra.mxu0 0
      %1643 = vmatprep.subr.bf16.mxu0 0
      %1644 = vmatpush1.bf16.msra.mxu0 0
      %1645 = vmatprep.subr.bf16.mxu0 0
      %1646 = vmatpush1.bf16.msra.mxu0 0
      %1647 = vmatprep.subr.bf16.mxu0 0
      %1648 = vmatpush1.bf16.msra.mxu0 0
      %1649 = vmatprep.subr.bf16.mxu0 0
      %1650 = vmatpush1.bf16.msra.mxu0 0
      %1651 = vmatprep.subr.bf16.mxu0 0
      %1652 = vmatpush1.bf16.msra.mxu0 0
      %1653 = vmatprep.subr.bf16.mxu0 0
      %1654 = vmatpush1.bf16.msra.mxu0 0
      %1655 = vmatprep.subr.bf16.mxu0 0
      %1656 = vmatpush1.bf16.msra.mxu0 %v1598
      %1657 = vmatprep.subr.bf16.mxu0 0
      %1658 = vmatpush2.bf16.msra.mxu0 0
      %1659 = vmatprep.subr.bf16.mxu0 0
      %1660 = vmatpush2.bf16.msra.mxu0 0
      %1661 = vmatprep.subr.bf16.mxu0 0
      %1662 = vmatpush2.bf16.msra.mxu0 0
      %1663 = vmatprep.subr.bf16.mxu0 0
      %1664 = vmatpush2.bf16.msra.mxu0 0
      %1665 = vmatprep.subr.bf16.mxu0 0
      %1666 = vmatpush2.bf16.msra.mxu0 0
      %1667 = vmatprep.subr.bf16.mxu0 0
      %1668 = vmatpush2.bf16.msra.mxu0 0
      %1669 = vmatprep.subr.bf16.mxu0 0
      %1670 = vmatpush2.bf16.msra.mxu0 0
      %1671 = vmatprep.subr.bf16.mxu0 0
      %1672 = vmatpush2.bf16.msra.mxu0 0
      %1673 = vmatprep.mubr.bf16.mxu0 0
      %1674 = vmatmul.mubr.bf16.gmra.mxu0 %v1589
      %v1675 = vpop.f32.mrf.mxu0
      %v1676 = vadd.f32 0.0, %v1675
      %v1677 = vpop.f32.mrf.mxu0
      %v1678 = vpop.f32.mrf.mxu0
      %v1679 = vpop.f32.mrf.mxu0
      %1680 = vdwg.mxu0
      %v1681 = vadd.f32 %v1574, %v1635
      %v1682 = vadd.f32 %v1575, %v1637
      %v1683 = vadd.f32 %v1576, %v1676
      %s1684 = scalar_lea.vmem %s5, 6
      %v1685 = vld [vmem:[%s1684] sm:$0x3]
      %1686 = vrot.lane.b32.xlu0 %v915, 108
      %v1687 = vpop.permute.xlu0 %1686
      %1688 = vrot.lane.b32.xlu0 %v916, 108
      %v1689 = vpop.permute.xlu0 %1688
      %1690 = vrot.lane.b32.xlu0 %v917, 108
      %v1691 = vpop.permute.xlu0 %1690
      %v1692 = vsel %vm709, %v1687, %v1689
      %v1693 = vsel %vm709, %v1689, %v1691
      %v1695 = vsel %vm952, %v1685, 0
      %v1698 = vsel %vm956, %v1692, 0
      %v1701 = vsel %vm956, %v1693, 0
      %v1704 = vsel %vm956, %v1691, 0
      %1706 = vmatprep.subr.bf16.mxu0 0
      %1707 = vmatpush1.bf16.msra.mxu0 0
      %1708 = vmatprep.subr.bf16.mxu0 0
      %1709 = vmatpush1.bf16.msra.mxu0 0
      %1710 = vmatprep.subr.bf16.mxu0 0
      %1711 = vmatpush1.bf16.msra.mxu0 0
      %1712 = vmatprep.subr.bf16.mxu0 0
      %1713 = vmatpush1.bf16.msra.mxu0 0
      %1714 = vmatprep.subr.bf16.mxu0 0
      %1715 = vmatpush1.bf16.msra.mxu0 0
      %1716 = vmatprep.subr.bf16.mxu0 0
      %1717 = vmatpush1.bf16.msra.mxu0 0
      %1718 = vmatprep.subr.bf16.mxu0 0
      %1719 = vmatpush1.bf16.msra.mxu0 0
      %1720 = vmatprep.subr.bf16.mxu0 %v1701
      %1721 = vmatpush1.bf16.msra.mxu0 %v1698
      %1722 = vmatprep.subr.bf16.mxu0 0
      %1723 = vmatpush2.bf16.msra.mxu0 0
      %1724 = vmatprep.subr.bf16.mxu0 0
      %1725 = vmatpush2.bf16.msra.mxu0 0
      %1726 = vmatprep.subr.bf16.mxu0 0
      %1727 = vmatpush2.bf16.msra.mxu0 0
      %1728 = vmatprep.subr.bf16.mxu0 0
      %1729 = vmatpush2.bf16.msra.mxu0 0
      %1730 = vmatprep.subr.bf16.mxu0 0
      %1731 = vmatpush2.bf16.msra.mxu0 0
      %1732 = vmatprep.subr.bf16.mxu0 0
      %1733 = vmatpush2.bf16.msra.mxu0 0
      %1734 = vmatprep.subr.bf16.mxu0 0
      %1735 = vmatpush2.bf16.msra.mxu0 0
      %1736 = vmatprep.subr.bf16.mxu0 0
      %1737 = vmatpush2.bf16.msra.mxu0 0
      %1738 = vmatprep.mubr.bf16.mxu0 0
      %1739 = vmatmul.mubr.bf16.gmra.mxu0 %v1695
      %v1740 = vpop.f32.mrf.mxu0
      %v1741 = vadd.f32 0.0, %v1740
      %v1742 = vpop.f32.mrf.mxu0
      %v1743 = vadd.f32 0.0, %v1742
      %v1744 = vpop.f32.mrf.mxu0
      %v1745 = vpop.f32.mrf.mxu0
      %1746 = vdwg.mxu0
      %1747 = vmatprep.subr.bf16.mxu0 0
      %1748 = vmatpush1.bf16.msra.mxu0 0
      %1749 = vmatprep.subr.bf16.mxu0 0
      %1750 = vmatpush1.bf16.msra.mxu0 0
      %1751 = vmatprep.subr.bf16.mxu0 0
      %1752 = vmatpush1.bf16.msra.mxu0 0
      %1753 = vmatprep.subr.bf16.mxu0 0
      %1754 = vmatpush1.bf16.msra.mxu0 0
      %1755 = vmatprep.subr.bf16.mxu0 0
      %1756 = vmatpush1.bf16.msra.mxu0 0
      %1757 = vmatprep.subr.bf16.mxu0 0
      %1758 = vmatpush1.bf16.msra.mxu0 0
      %1759 = vmatprep.subr.bf16.mxu0 0
      %1760 = vmatpush1.bf16.msra.mxu0 0
      %1761 = vmatprep.subr.bf16.mxu0 0
      %1762 = vmatpush1.bf16.msra.mxu0 %v1704
      %1763 = vmatprep.subr.bf16.mxu0 0
      %1764 = vmatpush2.bf16.msra.mxu0 0
      %1765 = vmatprep.subr.bf16.mxu0 0
      %1766 = vmatpush2.bf16.msra.mxu0 0
      %1767 = vmatprep.subr.bf16.mxu0 0
      %1768 = vmatpush2.bf16.msra.mxu0 0
      %1769 = vmatprep.subr.bf16.mxu0 0
      %1770 = vmatpush2.bf16.msra.mxu0 0
      %1771 = vmatprep.subr.bf16.mxu0 0
      %1772 = vmatpush2.bf16.msra.mxu0 0
      %1773 = vmatprep.subr.bf16.mxu0 0
      %1774 = vmatpush2.bf16.msra.mxu0 0
      %1775 = vmatprep.subr.bf16.mxu0 0
      %1776 = vmatpush2.bf16.msra.mxu0 0
      %1777 = vmatprep.subr.bf16.mxu0 0
      %1778 = vmatpush2.bf16.msra.mxu0 0
      %1779 = vmatprep.mubr.bf16.mxu0 0
      %1780 = vmatmul.mubr.bf16.gmra.mxu0 %v1695
      %v1781 = vpop.f32.mrf.mxu0
      %v1782 = vadd.f32 0.0, %v1781
      %v1783 = vpop.f32.mrf.mxu0
      %v1784 = vpop.f32.mrf.mxu0
      %v1785 = vpop.f32.mrf.mxu0
      %1786 = vdwg.mxu0
      %v1787 = vadd.f32 %v1681, %v1741
      %v1788 = vadd.f32 %v1682, %v1743
      %v1789 = vadd.f32 %v1683, %v1782
      %s1790 = scalar_lea.vmem %s4, 8
      %v1791 = vld [vmem:[%s1790] sm:$0x3]
      %1792 = vrot.lane.b32.xlu0 %v934, 65
      %v1793 = vpop.permute.xlu0 %1792
      %1794 = vrot.lane.b32.xlu0 %v942, 65
      %v1795 = vpop.permute.xlu0 %1794
      %1796 = vrot.lane.b32.xlu0 %v941, 65
      %v1797 = vpop.permute.xlu0 %1796
      %vm1798 = vcmask 531456
      %v1799 = vsel %vm1798, %v1793, %v1795
      %v1800 = vsel %vm1798, %v1795, %v1797
      %v1802 = vsel %vm952, %v1791, 0
      %v1805 = vsel %vm956, %v1799, 0
      %v1808 = vsel %vm956, %v1800, 0
      %v1811 = vsel %vm956, %v1797, 0
      %1813 = vmatprep.subr.bf16.mxu0 0
      %1814 = vmatpush1.bf16.msra.mxu0 0
      %1815 = vmatprep.subr.bf16.mxu0 0
      %1816 = vmatpush1.bf16.msra.mxu0 0
      %1817 = vmatprep.subr.bf16.mxu0 0
      %1818 = vmatpush1.bf16.msra.mxu0 0
      %1819 = vmatprep.subr.bf16.mxu0 0
      %1820 = vmatpush1.bf16.msra.mxu0 0
      %1821 = vmatprep.subr.bf16.mxu0 0
      %1822 = vmatpush1.bf16.msra.mxu0 0
      %1823 = vmatprep.subr.bf16.mxu0 0
      %1824 = vmatpush1.bf16.msra.mxu0 0
      %1825 = vmatprep.subr.bf16.mxu0 0
      %1826 = vmatpush1.bf16.msra.mxu0 0
      %1827 = vmatprep.subr.bf16.mxu0 %v1808
      %1828 = vmatpush1.bf16.msra.mxu0 %v1805
      %1829 = vmatprep.subr.bf16.mxu0 0
      %1830 = vmatpush2.bf16.msra.mxu0 0
      %1831 = vmatprep.subr.bf16.mxu0 0
      %1832 = vmatpush2.bf16.msra.mxu0 0
      %1833 = vmatprep.subr.bf16.mxu0 0
      %1834 = vmatpush2.bf16.msra.mxu0 0
      %1835 = vmatprep.subr.bf16.mxu0 0
      %1836 = vmatpush2.bf16.msra.mxu0 0
      %1837 = vmatprep.subr.bf16.mxu0 0
      %1838 = vmatpush2.bf16.msra.mxu0 0
      %1839 = vmatprep.subr.bf16.mxu0 0
      %1840 = vmatpush2.bf16.msra.mxu0 0
      %1841 = vmatprep.subr.bf16.mxu0 0
      %1842 = vmatpush2.bf16.msra.mxu0 0
      %1843 = vmatprep.subr.bf16.mxu0 0
      %1844 = vmatpush2.bf16.msra.mxu0 0
      %1845 = vmatprep.mubr.bf16.mxu0 0
      %1846 = vmatmul.mubr.bf16.gmra.mxu0 %v1802
      %v1847 = vpop.f32.mrf.mxu0
      %v1848 = vadd.f32 0.0, %v1847
      %v1849 = vpop.f32.mrf.mxu0
      %v1850 = vadd.f32 0.0, %v1849
      %v1851 = vpop.f32.mrf.mxu0
      %v1852 = vpop.f32.mrf.mxu0
      %1853 = vdwg.mxu0
      %1854 = vmatprep.subr.bf16.mxu0 0
      %1855 = vmatpush1.bf16.msra.mxu0 0
      %1856 = vmatprep.subr.bf16.mxu0 0
      %1857 = vmatpush1.bf16.msra.mxu0 0
      %1858 = vmatprep.subr.bf16.mxu0 0
      %1859 = vmatpush1.bf16.msra.mxu0 0
      %1860 = vmatprep.subr.bf16.mxu0 0
      %1861 = vmatpush1.bf16.msra.mxu0 0
      %1862 = vmatprep.subr.bf16.mxu0 0
      %1863 = vmatpush1.bf16.msra.mxu0 0
      %1864 = vmatprep.subr.bf16.mxu0 0
      %1865 = vmatpush1.bf16.msra.mxu0 0
      %1866 = vmatprep.subr.bf16.mxu0 0
      %1867 = vmatpush1.bf16.msra.mxu0 0
      %1868 = vmatprep.subr.bf16.mxu0 0
      %1869 = vmatpush1.bf16.msra.mxu0 %v1811
      %1870 = vmatprep.subr.bf16.mxu0 0
      %1871 = vmatpush2.bf16.msra.mxu0 0
      %1872 = vmatprep.subr.bf16.mxu0 0
      %1873 = vmatpush2.bf16.msra.mxu0 0
      %1874 = vmatprep.subr.bf16.mxu0 0
      %1875 = vmatpush2.bf16.msra.mxu0 0
      %1876 = vmatprep.subr.bf16.mxu0 0
      %1877 = vmatpush2.bf16.msra.mxu0 0
      %1878 = vmatprep.subr.bf16.mxu0 0
      %1879 = vmatpush2.bf16.msra.mxu0 0
      %1880 = vmatprep.subr.bf16.mxu0 0
      %1881 = vmatpush2.bf16.msra.mxu0 0
      %1882 = vmatprep.subr.bf16.mxu0 0
      %1883 = vmatpush2.bf16.msra.mxu0 0
      %1884 = vmatprep.subr.bf16.mxu0 0
      %1885 = vmatpush2.bf16.msra.mxu0 0
      %1886 = vmatprep.mubr.bf16.mxu0 0
      %1887 = vmatmul.mubr.bf16.gmra.mxu0 %v1802
      %v1888 = vpop.f32.mrf.mxu0
      %v1889 = vadd.f32 0.0, %v1888
      %v1890 = vpop.f32.mrf.mxu0
      %v1891 = vpop.f32.mrf.mxu0
      %v1892 = vpop.f32.mrf.mxu0
      %1893 = vdwg.mxu0
      %v1894 = vadd.f32 %v1787, %v1848
      %v1895 = vadd.f32 %v1788, %v1850
      %v1896 = vadd.f32 %v1789, %v1889
      %s1897 = scalar_lea.vmem %s5, 8
      %v1898 = vld [vmem:[%s1897] sm:$0x3]
      %1899 = vrot.lane.b32.xlu0 %v915, 107
      %v1900 = vpop.permute.xlu0 %1899
      %1901 = vrot.lane.b32.xlu0 %v916, 107
      %v1902 = vpop.permute.xlu0 %1901
      %1903 = vrot.lane.b32.xlu0 %v917, 107
      %v1904 = vpop.permute.xlu0 %1903
      %v1905 = vsel %vm816, %v1900, %v1902
      %v1906 = vsel %vm816, %v1902, %v1904
      %v1908 = vsel %vm952, %v1898, 0
      %v1911 = vsel %vm956, %v1905, 0
      %v1914 = vsel %vm956, %v1906, 0
      %v1917 = vsel %vm956, %v1904, 0
      %1919 = vmatprep.subr.bf16.mxu0 0
      %1920 = vmatpush1.bf16.msra.mxu0 0
      %1921 = vmatprep.subr.bf16.mxu0 0
      %1922 = vmatpush1.bf16.msra.mxu0 0
      %1923 = vmatprep.subr.bf16.mxu0 0
      %1924 = vmatpush1.bf16.msra.mxu0 0
      %1925 = vmatprep.subr.bf16.mxu0 0
      %1926 = vmatpush1.bf16.msra.mxu0 0
      %1927 = vmatprep.subr.bf16.mxu0 0
      %1928 = vmatpush1.bf16.msra.mxu0 0
      %1929 = vmatprep.subr.bf16.mxu0 0
      %1930 = vmatpush1.bf16.msra.mxu0 0
      %1931 = vmatprep.subr.bf16.mxu0 0
      %1932 = vmatpush1.bf16.msra.mxu0 0
      %1933 = vmatprep.subr.bf16.mxu0 %v1914
      %1934 = vmatpush1.bf16.msra.mxu0 %v1911
      %1935 = vmatprep.subr.bf16.mxu0 0
      %1936 = vmatpush2.bf16.msra.mxu0 0
      %1937 = vmatprep.subr.bf16.mxu0 0
      %1938 = vmatpush2.bf16.msra.mxu0 0
      %1939 = vmatprep.subr.bf16.mxu0 0
      %1940 = vmatpush2.bf16.msra.mxu0 0
      %1941 = vmatprep.subr.bf16.mxu0 0
      %1942 = vmatpush2.bf16.msra.mxu0 0
      %1943 = vmatprep.subr.bf16.mxu0 0
      %1944 = vmatpush2.bf16.msra.mxu0 0
      %1945 = vmatprep.subr.bf16.mxu0 0
      %1946 = vmatpush2.bf16.msra.mxu0 0
      %1947 = vmatprep.subr.bf16.mxu0 0
      %1948 = vmatpush2.bf16.msra.mxu0 0
      %1949 = vmatprep.subr.bf16.mxu0 0
      %1950 = vmatpush2.bf16.msra.mxu0 0
      %1951 = vmatprep.mubr.bf16.mxu0 0
      %1952 = vmatmul.mubr.bf16.gmra.mxu0 %v1908
      %v1953 = vpop.f32.mrf.mxu0
      %v1954 = vadd.f32 0.0, %v1953
      %v1955 = vpop.f32.mrf.mxu0
      %v1956 = vadd.f32 0.0, %v1955
      %v1957 = vpop.f32.mrf.mxu0
      %v1958 = vpop.f32.mrf.mxu0
      %1959 = vdwg.mxu0
      %1960 = vmatprep.subr.bf16.mxu0 0
      %1961 = vmatpush1.bf16.msra.mxu0 0
      %1962 = vmatprep.subr.bf16.mxu0 0
      %1963 = vmatpush1.bf16.msra.mxu0 0
      %1964 = vmatprep.subr.bf16.mxu0 0
      %1965 = vmatpush1.bf16.msra.mxu0 0
      %1966 = vmatprep.subr.bf16.mxu0 0
      %1967 = vmatpush1.bf16.msra.mxu0 0
      %1968 = vmatprep.subr.bf16.mxu0 0
      %1969 = vmatpush1.bf16.msra.mxu0 0
      %1970 = vmatprep.subr.bf16.mxu0 0
      %1971 = vmatpush1.bf16.msra.mxu0 0
      %1972 = vmatprep.subr.bf16.mxu0 0
      %1973 = vmatpush1.bf16.msra.mxu0 0
      %1974 = vmatprep.subr.bf16.mxu0 0
      %1975 = vmatpush1.bf16.msra.mxu0 %v1917
      %1976 = vmatprep.subr.bf16.mxu0 0
      %1977 = vmatpush2.bf16.msra.mxu0 0
      %1978 = vmatprep.subr.bf16.mxu0 0
      %1979 = vmatpush2.bf16.msra.mxu0 0
      %1980 = vmatprep.subr.bf16.mxu0 0
      %1981 = vmatpush2.bf16.msra.mxu0 0
      %1982 = vmatprep.subr.bf16.mxu0 0
      %1983 = vmatpush2.bf16.msra.mxu0 0
      %1984 = vmatprep.subr.bf16.mxu0 0
      %1985 = vmatpush2.bf16.msra.mxu0 0
      %1986 = vmatprep.subr.bf16.mxu0 0
      %1987 = vmatpush2.bf16.msra.mxu0 0
      %1988 = vmatprep.subr.bf16.mxu0 0
      %1989 = vmatpush2.bf16.msra.mxu0 0
      %1990 = vmatprep.subr.bf16.mxu0 0
      %1991 = vmatpush2.bf16.msra.mxu0 0
      %1992 = vmatprep.mubr.bf16.mxu0 0
      %1993 = vmatmul.mubr.bf16.gmra.mxu0 %v1908
      %v1994 = vpop.f32.mrf.mxu0
      %v1995 = vadd.f32 0.0, %v1994
      %v1996 = vpop.f32.mrf.mxu0
      %v1997 = vpop.f32.mrf.mxu0
      %v1998 = vpop.f32.mrf.mxu0
      %1999 = vdwg.mxu0
      %v2000 = vadd.f32 %v1894, %v1954
      %v2001 = vadd.f32 %v1895, %v1956
      %v2002 = vadd.f32 %v1896, %v1995
      %s2003 = scalar_lea.vmem %s4, 10
      %v2004 = vld [vmem:[%s2003] sm:$0x3]
      %2005 = vrot.lane.b32.xlu0 %v934, 64
      %v2006 = vpop.permute.xlu0 %2005
      %2007 = vrot.lane.b32.xlu0 %v942, 64
      %v2008 = vpop.permute.xlu0 %2007
      %2009 = vrot.lane.b32.xlu0 %v941, 64
      %v2010 = vpop.permute.xlu0 %2009
      %vm2011 = vcmask 523264
      %v2012 = vsel %vm2011, %v2006, %v2008
      %v2013 = vsel %vm2011, %v2008, %v2010
      %v2015 = vsel %vm952, %v2004, 0
      %v2018 = vsel %vm956, %v2012, 0
      %v2021 = vsel %vm956, %v2013, 0
      %v2024 = vsel %vm956, %v2010, 0
      %2026 = vmatprep.subr.bf16.mxu0 0
      %2027 = vmatpush1.bf16.msra.mxu0 0
      %2028 = vmatprep.subr.bf16.mxu0 0
      %2029 = vmatpush1.bf16.msra.mxu0 0
      %2030 = vmatprep.subr.bf16.mxu0 0
      %2031 = vmatpush1.bf16.msra.mxu0 0
      %2032 = vmatprep.subr.bf16.mxu0 0
      %2033 = vmatpush1.bf16.msra.mxu0 0
      %2034 = vmatprep.subr.bf16.mxu0 0
      %2035 = vmatpush1.bf16.msra.mxu0 0
      %2036 = vmatprep.subr.bf16.mxu0 0
      %2037 = vmatpush1.bf16.msra.mxu0 0
      %2038 = vmatprep.subr.bf16.mxu0 0
      %2039 = vmatpush1.bf16.msra.mxu0 0
      %2040 = vmatprep.subr.bf16.mxu0 %v2021
      %2041 = vmatpush1.bf16.msra.mxu0 %v2018
      %2042 = vmatprep.subr.bf16.mxu0 0
      %2043 = vmatpush2.bf16.msra.mxu0 0
      %2044 = vmatprep.subr.bf16.mxu0 0
      %2045 = vmatpush2.bf16.msra.mxu0 0
      %2046 = vmatprep.subr.bf16.mxu0 0
      %2047 = vmatpush2.bf16.msra.mxu0 0
      %2048 = vmatprep.subr.bf16.mxu0 0
      %2049 = vmatpush2.bf16.msra.mxu0 0
      %2050 = vmatprep.subr.bf16.mxu0 0
      %2051 = vmatpush2.bf16.msra.mxu0 0
      %2052 = vmatprep.subr.bf16.mxu0 0
      %2053 = vmatpush2.bf16.msra.mxu0 0
      %2054 = vmatprep.subr.bf16.mxu0 0
      %2055 = vmatpush2.bf16.msra.mxu0 0
      %2056 = vmatprep.subr.bf16.mxu0 0
      %2057 = vmatpush2.bf16.msra.mxu0 0
      %2058 = vmatprep.mubr.bf16.mxu0 0
      %2059 = vmatmul.mubr.bf16.gmra.mxu0 %v2015
      %v2060 = vpop.f32.mrf.mxu0
      %v2061 = vadd.f32 0.0, %v2060
      %v2062 = vpop.f32.mrf.mxu0
      %v2063 = vadd.f32 0.0, %v2062
      %v2064 = vpop.f32.mrf.mxu0
      %v2065 = vpop.f32.mrf.mxu0
      %2066 = vdwg.mxu0
      %2067 = vmatprep.subr.bf16.mxu0 0
      %2068 = vmatpush1.bf16.msra.mxu0 0
      %2069 = vmatprep.subr.bf16.mxu0 0
      %2070 = vmatpush1.bf16.msra.mxu0 0
      %2071 = vmatprep.subr.bf16.mxu0 0
      %2072 = vmatpush1.bf16.msra.mxu0 0
      %2073 = vmatprep.subr.bf16.mxu0 0
      %2074 = vmatpush1.bf16.msra.mxu0 0
      %2075 = vmatprep.subr.bf16.mxu0 0
      %2076 = vmatpush1.bf16.msra.mxu0 0
      %2077 = vmatprep.subr.bf16.mxu0 0
      %2078 = vmatpush1.bf16.msra.mxu0 0
      %2079 = vmatprep.subr.bf16.mxu0 0
      %2080 = vmatpush1.bf16.msra.mxu0 0
      %2081 = vmatprep.subr.bf16.mxu0 0
      %2082 = vmatpush1.bf16.msra.mxu0 %v2024
      %2083 = vmatprep.subr.bf16.mxu0 0
      %2084 = vmatpush2.bf16.msra.mxu0 0
      %2085 = vmatprep.subr.bf16.mxu0 0
      %2086 = vmatpush2.bf16.msra.mxu0 0
      %2087 = vmatprep.subr.bf16.mxu0 0
      %2088 = vmatpush2.bf16.msra.mxu0 0
      %2089 = vmatprep.subr.bf16.mxu0 0
      %2090 = vmatpush2.bf16.msra.mxu0 0
      %2091 = vmatprep.subr.bf16.mxu0 0
      %2092 = vmatpush2.bf16.msra.mxu0 0
      %2093 = vmatprep.subr.bf16.mxu0 0
      %2094 = vmatpush2.bf16.msra.mxu0 0
      %2095 = vmatprep.subr.bf16.mxu0 0
      %2096 = vmatpush2.bf16.msra.mxu0 0
      %2097 = vmatprep.subr.bf16.mxu0 0
      %2098 = vmatpush2.bf16.msra.mxu0 0
      %2099 = vmatprep.mubr.bf16.mxu0 0
      %2100 = vmatmul.mubr.bf16.gmra.mxu0 %v2015
      %v2101 = vpop.f32.mrf.mxu0
      %v2102 = vadd.f32 0.0, %v2101
      %v2103 = vpop.f32.mrf.mxu0
      %v2104 = vpop.f32.mrf.mxu0
      %v2105 = vpop.f32.mrf.mxu0
      %2106 = vdwg.mxu0
      %v2107 = vadd.f32 %v2000, %v2061
      %v2108 = vadd.f32 %v2001, %v2063
      %v2109 = vadd.f32 %v2002, %v2102
      %s2110 = scalar_lea.vmem %s5, 10
      %v2111 = vld [vmem:[%s2110] sm:$0x3]
      %2112 = vrot.lane.b32.xlu0 %v915, 106
      %v2113 = vpop.permute.xlu0 %2112
      %2114 = vrot.lane.b32.xlu0 %v916, 106
      %v2115 = vpop.permute.xlu0 %2114
      %2116 = vrot.lane.b32.xlu0 %v917, 106
      %v2117 = vpop.permute.xlu0 %2116
      %vm2118 = vcmask 867328
      %v2119 = vsel %vm2118, %v2113, %v2115
      %v2120 = vsel %vm2118, %v2115, %v2117
      %v2122 = vsel %vm952, %v2111, 0
      %v2125 = vsel %vm956, %v2119, 0
      %v2128 = vsel %vm956, %v2120, 0
      %v2131 = vsel %vm956, %v2117, 0
      %2133 = vmatprep.subr.bf16.mxu0 0
      %2134 = vmatpush1.bf16.msra.mxu0 0
      %2135 = vmatprep.subr.bf16.mxu0 0
      %2136 = vmatpush1.bf16.msra.mxu0 0
      %2137 = vmatprep.subr.bf16.mxu0 0
      %2138 = vmatpush1.bf16.msra.mxu0 0
      %2139 = vmatprep.subr.bf16.mxu0 0
      %2140 = vmatpush1.bf16.msra.mxu0 0
      %2141 = vmatprep.subr.bf16.mxu0 0
      %2142 = vmatpush1.bf16.msra.mxu0 0
      %2143 = vmatprep.subr.bf16.mxu0 0
      %2144 = vmatpush1.bf16.msra.mxu0 0
      %2145 = vmatprep.subr.bf16.mxu0 0
      %2146 = vmatpush1.bf16.msra.mxu0 0
      %2147 = vmatprep.subr.bf16.mxu0 %v2128
      %2148 = vmatpush1.bf16.msra.mxu0 %v2125
      %2149 = vmatprep.subr.bf16.mxu0 0
      %2150 = vmatpush2.bf16.msra.mxu0 0
      %2151 = vmatprep.subr.bf16.mxu0 0
      %2152 = vmatpush2.bf16.msra.mxu0 0
      %2153 = vmatprep.subr.bf16.mxu0 0
      %2154 = vmatpush2.bf16.msra.mxu0 0
      %2155 = vmatprep.subr.bf16.mxu0 0
      %2156 = vmatpush2.bf16.msra.mxu0 0
      %2157 = vmatprep.subr.bf16.mxu0 0
      %2158 = vmatpush2.bf16.msra.mxu0 0
      %2159 = vmatprep.subr.bf16.mxu0 0
      %2160 = vmatpush2.bf16.msra.mxu0 0
      %2161 = vmatprep.subr.bf16.mxu0 0
      %2162 = vmatpush2.bf16.msra.mxu0 0
      %2163 = vmatprep.subr.bf16.mxu0 0
      %2164 = vmatpush2.bf16.msra.mxu0 0
      %2165 = vmatprep.mubr.bf16.mxu0 0
      %2166 = vmatmul.mubr.bf16.gmra.mxu0 %v2122
      %v2167 = vpop.f32.mrf.mxu0
      %v2168 = vadd.f32 0.0, %v2167
      %v2169 = vpop.f32.mrf.mxu0
      %v2170 = vadd.f32 0.0, %v2169
      %v2171 = vpop.f32.mrf.mxu0
      %v2172 = vpop.f32.mrf.mxu0
      %2173 = vdwg.mxu0
      %2174 = vmatprep.subr.bf16.mxu0 0
      %2175 = vmatpush1.bf16.msra.mxu0 0
      %2176 = vmatprep.subr.bf16.mxu0 0
      %2177 = vmatpush1.bf16.msra.mxu0 0
      %2178 = vmatprep.subr.bf16.mxu0 0
      %2179 = vmatpush1.bf16.msra.mxu0 0
      %2180 = vmatprep.subr.bf16.mxu0 0
      %2181 = vmatpush1.bf16.msra.mxu0 0
      %2182 = vmatprep.subr.bf16.mxu0 0
      %2183 = vmatpush1.bf16.msra.mxu0 0
      %2184 = vmatprep.subr.bf16.mxu0 0
      %2185 = vmatpush1.bf16.msra.mxu0 0
      %2186 = vmatprep.subr.bf16.mxu0 0
      %2187 = vmatpush1.bf16.msra.mxu0 0
      %2188 = vmatprep.subr.bf16.mxu0 0
      %2189 = vmatpush1.bf16.msra.mxu0 %v2131
      %2190 = vmatprep.subr.bf16.mxu0 0
      %2191 = vmatpush2.bf16.msra.mxu0 0
      %2192 = vmatprep.subr.bf16.mxu0 0
      %2193 = vmatpush2.bf16.msra.mxu0 0
      %2194 = vmatprep.subr.bf16.mxu0 0
      %2195 = vmatpush2.bf16.msra.mxu0 0
      %2196 = vmatprep.subr.bf16.mxu0 0
      %2197 = vmatpush2.bf16.msra.mxu0 0
      %2198 = vmatprep.subr.bf16.mxu0 0
      %2199 = vmatpush2.bf16.msra.mxu0 0
      %2200 = vmatprep.subr.bf16.mxu0 0
      %2201 = vmatpush2.bf16.msra.mxu0 0
      %2202 = vmatprep.subr.bf16.mxu0 0
      %2203 = vmatpush2.bf16.msra.mxu0 0
      %2204 = vmatprep.subr.bf16.mxu0 0
      %2205 = vmatpush2.bf16.msra.mxu0 0
      %2206 = vmatprep.mubr.bf16.mxu0 0
      %2207 = vmatmul.mubr.bf16.gmra.mxu0 %v2122
      %v2208 = vpop.f32.mrf.mxu0
      %v2209 = vadd.f32 0.0, %v2208
      %v2210 = vpop.f32.mrf.mxu0
      %v2211 = vpop.f32.mrf.mxu0
      %v2212 = vpop.f32.mrf.mxu0
      %2213 = vdwg.mxu0
      %v2214 = vadd.f32 %v2107, %v2168
      %v2215 = vadd.f32 %v2108, %v2170
      %v2216 = vadd.f32 %v2109, %v2209
      %s2217 = scalar_lea.vmem %s4, 12
      %v2218 = vld [vmem:[%s2217] sm:$0x3]
      %2219 = vrot.lane.b32.xlu0 %v934, 46
      %v2220 = vpop.permute.xlu0 %2219
      %2221 = vrot.lane.b32.xlu0 %v942, 46
      %v2222 = vpop.permute.xlu0 %2221
      %2223 = vrot.lane.b32.xlu0 %v941, 46
      %v2224 = vpop.permute.xlu0 %2223
      %vm2225 = vcmask 375808
      %v2226 = vsel %vm2225, %v2220, %v2222
      %v2227 = vsel %vm2225, %v2222, %v2224
      %v2229 = vsel %vm952, %v2218, 0
      %v2232 = vsel %vm956, %v2226, 0
      %v2235 = vsel %vm956, %v2227, 0
      %v2238 = vsel %vm956, %v2224, 0
      %2240 = vmatprep.subr.bf16.mxu0 0
      %2241 = vmatpush1.bf16.msra.mxu0 0
      %2242 = vmatprep.subr.bf16.mxu0 0
      %2243 = vmatpush1.bf16.msra.mxu0 0
      %2244 = vmatprep.subr.bf16.mxu0 0
      %2245 = vmatpush1.bf16.msra.mxu0 0
      %2246 = vmatprep.subr.bf16.mxu0 0
      %2247 = vmatpush1.bf16.msra.mxu0 0
      %2248 = vmatprep.subr.bf16.mxu0 0
      %2249 = vmatpush1.bf16.msra.mxu0 0
      %2250 = vmatprep.subr.bf16.mxu0 0
      %2251 = vmatpush1.bf16.msra.mxu0 0
      %2252 = vmatprep.subr.bf16.mxu0 0
      %2253 = vmatpush1.bf16.msra.mxu0 0
      %2254 = vmatprep.subr.bf16.mxu0 %v2235
      %2255 = vmatpush1.bf16.msra.mxu0 %v2232
      %2256 = vmatprep.subr.bf16.mxu0 0
      %2257 = vmatpush2.bf16.msra.mxu0 0
      %2258 = vmatprep.subr.bf16.mxu0 0
      %2259 = vmatpush2.bf16.msra.mxu0 0
      %2260 = vmatprep.subr.bf16.mxu0 0
      %2261 = vmatpush2.bf16.msra.mxu0 0
      %2262 = vmatprep.subr.bf16.mxu0 0
      %2263 = vmatpush2.bf16.msra.mxu0 0
      %2264 = vmatprep.subr.bf16.mxu0 0
      %2265 = vmatpush2.bf16.msra.mxu0 0
      %2266 = vmatprep.subr.bf16.mxu0 0
      %2267 = vmatpush2.bf16.msra.mxu0 0
      %2268 = vmatprep.subr.bf16.mxu0 0
      %2269 = vmatpush2.bf16.msra.mxu0 0
      %2270 = vmatprep.subr.bf16.mxu0 0
      %2271 = vmatpush2.bf16.msra.mxu0 0
      %2272 = vmatprep.mubr.bf16.mxu0 0
      %2273 = vmatmul.mubr.bf16.gmra.mxu0 %v2229
      %v2274 = vpop.f32.mrf.mxu0
      %v2275 = vadd.f32 0.0, %v2274
      %v2276 = vpop.f32.mrf.mxu0
      %v2277 = vadd.f32 0.0, %v2276
      %v2278 = vpop.f32.mrf.mxu0
      %v2279 = vpop.f32.mrf.mxu0
      %2280 = vdwg.mxu0
      %2281 = vmatprep.subr.bf16.mxu0 0
      %2282 = vmatpush1.bf16.msra.mxu0 0
      %2283 = vmatprep.subr.bf16.mxu0 0
      %2284 = vmatpush1.bf16.msra.mxu0 0
      %2285 = vmatprep.subr.bf16.mxu0 0
      %2286 = vmatpush1.bf16.msra.mxu0 0
      %2287 = vmatprep.subr.bf16.mxu0 0
      %2288 = vmatpush1.bf16.msra.mxu0 0
      %2289 = vmatprep.subr.bf16.mxu0 0
      %2290 = vmatpush1.bf16.msra.mxu0 0
      %2291 = vmatprep.subr.bf16.mxu0 0
      %2292 = vmatpush1.bf16.msra.mxu0 0
      %2293 = vmatprep.subr.bf16.mxu0 0
      %2294 = vmatpush1.bf16.msra.mxu0 0
      %2295 = vmatprep.subr.bf16.mxu0 0
      %2296 = vmatpush1.bf16.msra.mxu0 %v2238
      %2297 = vmatprep.subr.bf16.mxu0 0
      %2298 = vmatpush2.bf16.msra.mxu0 0
      %2299 = vmatprep.subr.bf16.mxu0 0
      %2300 = vmatpush2.bf16.msra.mxu0 0
      %2301 = vmatprep.subr.bf16.mxu0 0
      %2302 = vmatpush2.bf16.msra.mxu0 0
      %2303 = vmatprep.subr.bf16.mxu0 0
      %2304 = vmatpush2.bf16.msra.mxu0 0
      %2305 = vmatprep.subr.bf16.mxu0 0
      %2306 = vmatpush2.bf16.msra.mxu0 0
      %2307 = vmatprep.subr.bf16.mxu0 0
      %2308 = vmatpush2.bf16.msra.mxu0 0
      %2309 = vmatprep.subr.bf16.mxu0 0
      %2310 = vmatpush2.bf16.msra.mxu0 0
      %2311 = vmatprep.subr.bf16.mxu0 0
      %2312 = vmatpush2.bf16.msra.mxu0 0
      %2313 = vmatprep.mubr.bf16.mxu0 0
      %2314 = vmatmul.mubr.bf16.gmra.mxu0 %v2229
      %v2315 = vpop.f32.mrf.mxu0
      %v2316 = vadd.f32 0.0, %v2315
      %v2317 = vpop.f32.mrf.mxu0
      %v2318 = vpop.f32.mrf.mxu0
      %v2319 = vpop.f32.mrf.mxu0
      %2320 = vdwg.mxu0
      %v2321 = vadd.f32 %v2214, %v2275
      %v2322 = vadd.f32 %v2215, %v2277
      %v2323 = vadd.f32 %v2216, %v2316
      %s2324 = scalar_lea.vmem %s5, 12
      %v2325 = vld [vmem:[%s2324] sm:$0x3]
      %2326 = vrot.lane.b32.xlu0 %v915, 88
      %v2327 = vpop.permute.xlu0 %2326
      %2328 = vrot.lane.b32.xlu0 %v916, 88
      %v2329 = vpop.permute.xlu0 %2328
      %2330 = vrot.lane.b32.xlu0 %v917, 88
      %v2331 = vpop.permute.xlu0 %2330
      %vm2332 = vcmask 719872
      %v2333 = vsel %vm2332, %v2327, %v2329
      %v2334 = vsel %vm2332, %v2329, %v2331
      %v2336 = vsel %vm952, %v2325, 0
      %v2339 = vsel %vm956, %v2333, 0
      %v2342 = vsel %vm956, %v2334, 0
      %v2345 = vsel %vm956, %v2331, 0
      %2347 = vmatprep.subr.bf16.mxu0 0
      %2348 = vmatpush1.bf16.msra.mxu0 0
      %2349 = vmatprep.subr.bf16.mxu0 0
      %2350 = vmatpush1.bf16.msra.mxu0 0
      %2351 = vmatprep.subr.bf16.mxu0 0
      %2352 = vmatpush1.bf16.msra.mxu0 0
      %2353 = vmatprep.subr.bf16.mxu0 0
      %2354 = vmatpush1.bf16.msra.mxu0 0
      %2355 = vmatprep.subr.bf16.mxu0 0
      %2356 = vmatpush1.bf16.msra.mxu0 0
      %2357 = vmatprep.subr.bf16.mxu0 0
      %2358 = vmatpush1.bf16.msra.mxu0 0
      %2359 = vmatprep.subr.bf16.mxu0 0
      %2360 = vmatpush1.bf16.msra.mxu0 0
      %2361 = vmatprep.subr.bf16.mxu0 %v2342
      %2362 = vmatpush1.bf16.msra.mxu0 %v2339
      %2363 = vmatprep.subr.bf16.mxu0 0
      %2364 = vmatpush2.bf16.msra.mxu0 0
      %2365 = vmatprep.subr.bf16.mxu0 0
      %2366 = vmatpush2.bf16.msra.mxu0 0
      %2367 = vmatprep.subr.bf16.mxu0 0
      %2368 = vmatpush2.bf16.msra.mxu0 0
      %2369 = vmatprep.subr.bf16.mxu0 0
      %2370 = vmatpush2.bf16.msra.mxu0 0
      %2371 = vmatprep.subr.bf16.mxu0 0
      %2372 = vmatpush2.bf16.msra.mxu0 0
      %2373 = vmatprep.subr.bf16.mxu0 0
      %2374 = vmatpush2.bf16.msra.mxu0 0
      %2375 = vmatprep.subr.bf16.mxu0 0
      %2376 = vmatpush2.bf16.msra.mxu0 0
      %2377 = vmatprep.subr.bf16.mxu0 0
      %2378 = vmatpush2.bf16.msra.mxu0 0
      %2379 = vmatprep.mubr.bf16.mxu0 0
      %2380 = vmatmul.mubr.bf16.gmra.mxu0 %v2336
      %v2381 = vpop.f32.mrf.mxu0
      %v2382 = vadd.f32 0.0, %v2381
      %v2383 = vpop.f32.mrf.mxu0
      %v2384 = vadd.f32 0.0, %v2383
      %v2385 = vpop.f32.mrf.mxu0
      %v2386 = vpop.f32.mrf.mxu0
      %2387 = vdwg.mxu0
      %2388 = vmatprep.subr.bf16.mxu0 0
      %2389 = vmatpush1.bf16.msra.mxu0 0
      %2390 = vmatprep.subr.bf16.mxu0 0
      %2391 = vmatpush1.bf16.msra.mxu0 0
      %2392 = vmatprep.subr.bf16.mxu0 0
      %2393 = vmatpush1.bf16.msra.mxu0 0
      %2394 = vmatprep.subr.bf16.mxu0 0
      %2395 = vmatpush1.bf16.msra.mxu0 0
      %2396 = vmatprep.subr.bf16.mxu0 0
      %2397 = vmatpush1.bf16.msra.mxu0 0
      %2398 = vmatprep.subr.bf16.mxu0 0
      %2399 = vmatpush1.bf16.msra.mxu0 0
      %2400 = vmatprep.subr.bf16.mxu0 0
      %2401 = vmatpush1.bf16.msra.mxu0 0
      %2402 = vmatprep.subr.bf16.mxu0 0
      %2403 = vmatpush1.bf16.msra.mxu0 %v2345
      %2404 = vmatprep.subr.bf16.mxu0 0
      %2405 = vmatpush2.bf16.msra.mxu0 0
      %2406 = vmatprep.subr.bf16.mxu0 0
      %2407 = vmatpush2.bf16.msra.mxu0 0
      %2408 = vmatprep.subr.bf16.mxu0 0
      %2409 = vmatpush2.bf16.msra.mxu0 0
      %2410 = vmatprep.subr.bf16.mxu0 0
      %2411 = vmatpush2.bf16.msra.mxu0 0
      %2412 = vmatprep.subr.bf16.mxu0 0
      %2413 = vmatpush2.bf16.msra.mxu0 0
      %2414 = vmatprep.subr.bf16.mxu0 0
      %2415 = vmatpush2.bf16.msra.mxu0 0
      %2416 = vmatprep.subr.bf16.mxu0 0
      %2417 = vmatpush2.bf16.msra.mxu0 0
      %2418 = vmatprep.subr.bf16.mxu0 0
      %2419 = vmatpush2.bf16.msra.mxu0 0
      %2420 = vmatprep.mubr.bf16.mxu0 0
      %2421 = vmatmul.mubr.bf16.gmra.mxu0 %v2336
      %v2422 = vpop.f32.mrf.mxu0
      %v2423 = vadd.f32 0.0, %v2422
      %v2424 = vpop.f32.mrf.mxu0
      %v2425 = vpop.f32.mrf.mxu0
      %v2426 = vpop.f32.mrf.mxu0
      %2427 = vdwg.mxu0
      %v2428 = vadd.f32 %v2321, %v2382
      %v2429 = vadd.f32 %v2322, %v2384
      %v2430 = vadd.f32 %v2323, %v2423
      %s2431 = scalar_lea.vmem %s4, 14
      %v2432 = vld [vmem:[%s2431] sm:$0x3]
      %2433 = vrot.lane.b32.xlu0 %v934, 45
      %v2434 = vpop.permute.xlu0 %2433
      %2435 = vrot.lane.b32.xlu0 %v942, 45
      %v2436 = vpop.permute.xlu0 %2435
      %2437 = vrot.lane.b32.xlu0 %v941, 45
      %v2438 = vpop.permute.xlu0 %2437
      %vm2439 = vcmask 367616
      %v2440 = vsel %vm2439, %v2434, %v2436
      %v2441 = vsel %vm2439, %v2436, %v2438
      %v2443 = vsel %vm952, %v2432, 0
      %v2446 = vsel %vm956, %v2440, 0
      %v2449 = vsel %vm956, %v2441, 0
      %v2452 = vsel %vm956, %v2438, 0
      %2454 = vmatprep.subr.bf16.mxu0 0
      %2455 = vmatpush1.bf16.msra.mxu0 0
      %2456 = vmatprep.subr.bf16.mxu0 0
      %2457 = vmatpush1.bf16.msra.mxu0 0
      %2458 = vmatprep.subr.bf16.mxu0 0
      %2459 = vmatpush1.bf16.msra.mxu0 0
      %2460 = vmatprep.subr.bf16.mxu0 0
      %2461 = vmatpush1.bf16.msra.mxu0 0
      %2462 = vmatprep.subr.bf16.mxu0 0
      %2463 = vmatpush1.bf16.msra.mxu0 0
      %2464 = vmatprep.subr.bf16.mxu0 0
      %2465 = vmatpush1.bf16.msra.mxu0 0
      %2466 = vmatprep.subr.bf16.mxu0 0
      %2467 = vmatpush1.bf16.msra.mxu0 0
      %2468 = vmatprep.subr.bf16.mxu0 %v2449
      %2469 = vmatpush1.bf16.msra.mxu0 %v2446
      %2470 = vmatprep.subr.bf16.mxu0 0
      %2471 = vmatpush2.bf16.msra.mxu0 0
      %2472 = vmatprep.subr.bf16.mxu0 0
      %2473 = vmatpush2.bf16.msra.mxu0 0
      %2474 = vmatprep.subr.bf16.mxu0 0
      %2475 = vmatpush2.bf16.msra.mxu0 0
      %2476 = vmatprep.subr.bf16.mxu0 0
      %2477 = vmatpush2.bf16.msra.mxu0 0
      %2478 = vmatprep.subr.bf16.mxu0 0
      %2479 = vmatpush2.bf16.msra.mxu0 0
      %2480 = vmatprep.subr.bf16.mxu0 0
      %2481 = vmatpush2.bf16.msra.mxu0 0
      %2482 = vmatprep.subr.bf16.mxu0 0
      %2483 = vmatpush2.bf16.msra.mxu0 0
      %2484 = vmatprep.subr.bf16.mxu0 0
      %2485 = vmatpush2.bf16.msra.mxu0 0
      %2486 = vmatprep.mubr.bf16.mxu0 0
      %2487 = vmatmul.mubr.bf16.gmra.mxu0 %v2443
      %v2488 = vpop.f32.mrf.mxu0
      %v2489 = vadd.f32 0.0, %v2488
      %v2490 = vpop.f32.mrf.mxu0
      %v2491 = vadd.f32 0.0, %v2490
      %v2492 = vpop.f32.mrf.mxu0
      %v2493 = vpop.f32.mrf.mxu0
      %2494 = vdwg.mxu0
      %2495 = vmatprep.subr.bf16.mxu0 0
      %2496 = vmatpush1.bf16.msra.mxu0 0
      %2497 = vmatprep.subr.bf16.mxu0 0
      %2498 = vmatpush1.bf16.msra.mxu0 0
      %2499 = vmatprep.subr.bf16.mxu0 0
      %2500 = vmatpush1.bf16.msra.mxu0 0
      %2501 = vmatprep.subr.bf16.mxu0 0
      %2502 = vmatpush1.bf16.msra.mxu0 0
      %2503 = vmatprep.subr.bf16.mxu0 0
      %2504 = vmatpush1.bf16.msra.mxu0 0
      %2505 = vmatprep.subr.bf16.mxu0 0
      %2506 = vmatpush1.bf16.msra.mxu0 0
      %2507 = vmatprep.subr.bf16.mxu0 0
      %2508 = vmatpush1.bf16.msra.mxu0 0
      %2509 = vmatprep.subr.bf16.mxu0 0
      %2510 = vmatpush1.bf16.msra.mxu0 %v2452
      %2511 = vmatprep.subr.bf16.mxu0 0
      %2512 = vmatpush2.bf16.msra.mxu0 0
      %2513 = vmatprep.subr.bf16.mxu0 0
      %2514 = vmatpush2.bf16.msra.mxu0 0
      %2515 = vmatprep.subr.bf16.mxu0 0
      %2516 = vmatpush2.bf16.msra.mxu0 0
      %2517 = vmatprep.subr.bf16.mxu0 0
      %2518 = vmatpush2.bf16.msra.mxu0 0
      %2519 = vmatprep.subr.bf16.mxu0 0
      %2520 = vmatpush2.bf16.msra.mxu0 0
      %2521 = vmatprep.subr.bf16.mxu0 0
      %2522 = vmatpush2.bf16.msra.mxu0 0
      %2523 = vmatprep.subr.bf16.mxu0 0
      %2524 = vmatpush2.bf16.msra.mxu0 0
      %2525 = vmatprep.subr.bf16.mxu0 0
      %2526 = vmatpush2.bf16.msra.mxu0 0
      %2527 = vmatprep.mubr.bf16.mxu0 0
      %2528 = vmatmul.mubr.bf16.gmra.mxu0 %v2443
      %v2529 = vpop.f32.mrf.mxu0
      %v2530 = vadd.f32 0.0, %v2529
      %v2531 = vpop.f32.mrf.mxu0
      %v2532 = vpop.f32.mrf.mxu0
      %v2533 = vpop.f32.mrf.mxu0
      %2534 = vdwg.mxu0
      %v2535 = vadd.f32 %v2428, %v2489
      %v2536 = vadd.f32 %v2429, %v2491
      %v2537 = vadd.f32 %v2430, %v2530
      %s2538 = scalar_lea.vmem %s5, 14
      %v2539 = vld [vmem:[%s2538] sm:$0x3]
      %2540 = vrot.lane.b32.xlu0 %v915, 87
      %v2541 = vpop.permute.xlu0 %2540
      %2542 = vrot.lane.b32.xlu0 %v916, 87
      %v2543 = vpop.permute.xlu0 %2542
      %2544 = vrot.lane.b32.xlu0 %v917, 87
      %v2545 = vpop.permute.xlu0 %2544
      %vm2546 = vcmask 711680
      %v2547 = vsel %vm2546, %v2541, %v2543
      %v2548 = vsel %vm2546, %v2543, %v2545
      %v2550 = vsel %vm952, %v2539, 0
      %v2553 = vsel %vm956, %v2547, 0
      %v2556 = vsel %vm956, %v2548, 0
      %v2559 = vsel %vm956, %v2545, 0
      %2561 = vmatprep.subr.bf16.mxu0 0
      %2562 = vmatpush1.bf16.msra.mxu0 0
      %2563 = vmatprep.subr.bf16.mxu0 0
      %2564 = vmatpush1.bf16.msra.mxu0 0
      %2565 = vmatprep.subr.bf16.mxu0 0
      %2566 = vmatpush1.bf16.msra.mxu0 0
      %2567 = vmatprep.subr.bf16.mxu0 0
      %2568 = vmatpush1.bf16.msra.mxu0 0
      %2569 = vmatprep.subr.bf16.mxu0 0
      %2570 = vmatpush1.bf16.msra.mxu0 0
      %2571 = vmatprep.subr.bf16.mxu0 0
      %2572 = vmatpush1.bf16.msra.mxu0 0
      %2573 = vmatprep.subr.bf16.mxu0 0
      %2574 = vmatpush1.bf16.msra.mxu0 0
      %2575 = vmatprep.subr.bf16.mxu0 %v2556
      %2576 = vmatpush1.bf16.msra.mxu0 %v2553
      %2577 = vmatprep.subr.bf16.mxu0 0
      %2578 = vmatpush2.bf16.msra.mxu0 0
      %2579 = vmatprep.subr.bf16.mxu0 0
      %2580 = vmatpush2.bf16.msra.mxu0 0
      %2581 = vmatprep.subr.bf16.mxu0 0
      %2582 = vmatpush2.bf16.msra.mxu0 0
      %2583 = vmatprep.subr.bf16.mxu0 0
      %2584 = vmatpush2.bf16.msra.mxu0 0
      %2585 = vmatprep.subr.bf16.mxu0 0
      %2586 = vmatpush2.bf16.msra.mxu0 0
      %2587 = vmatprep.subr.bf16.mxu0 0
      %2588 = vmatpush2.bf16.msra.mxu0 0
      %2589 = vmatprep.subr.bf16.mxu0 0
      %2590 = vmatpush2.bf16.msra.mxu0 0
      %2591 = vmatprep.subr.bf16.mxu0 0
      %2592 = vmatpush2.bf16.msra.mxu0 0
      %2593 = vmatprep.mubr.bf16.mxu0 0
      %2594 = vmatmul.mubr.bf16.gmra.mxu0 %v2550
      %v2595 = vpop.f32.mrf.mxu0
      %v2596 = vadd.f32 0.0, %v2595
      %v2597 = vpop.f32.mrf.mxu0
      %v2598 = vadd.f32 0.0, %v2597
      %v2599 = vpop.f32.mrf.mxu0
      %v2600 = vpop.f32.mrf.mxu0
      %2601 = vdwg.mxu0
      %2602 = vmatprep.subr.bf16.mxu0 0
      %2603 = vmatpush1.bf16.msra.mxu0 0
      %2604 = vmatprep.subr.bf16.mxu0 0
      %2605 = vmatpush1.bf16.msra.mxu0 0
      %2606 = vmatprep.subr.bf16.mxu0 0
      %2607 = vmatpush1.bf16.msra.mxu0 0
      %2608 = vmatprep.subr.bf16.mxu0 0
      %2609 = vmatpush1.bf16.msra.mxu0 0
      %2610 = vmatprep.subr.bf16.mxu0 0
      %2611 = vmatpush1.bf16.msra.mxu0 0
      %2612 = vmatprep.subr.bf16.mxu0 0
      %2613 = vmatpush1.bf16.msra.mxu0 0
      %2614 = vmatprep.subr.bf16.mxu0 0
      %2615 = vmatpush1.bf16.msra.mxu0 0
      %2616 = vmatprep.subr.bf16.mxu0 0
      %2617 = vmatpush1.bf16.msra.mxu0 %v2559
      %2618 = vmatprep.subr.bf16.mxu0 0
      %2619 = vmatpush2.bf16.msra.mxu0 0
      %2620 = vmatprep.subr.bf16.mxu0 0
      %2621 = vmatpush2.bf16.msra.mxu0 0
      %2622 = vmatprep.subr.bf16.mxu0 0
      %2623 = vmatpush2.bf16.msra.mxu0 0
      %2624 = vmatprep.subr.bf16.mxu0 0
      %2625 = vmatpush2.bf16.msra.mxu0 0
      %2626 = vmatprep.subr.bf16.mxu0 0
      %2627 = vmatpush2.bf16.msra.mxu0 0
      %2628 = vmatprep.subr.bf16.mxu0 0
      %2629 = vmatpush2.bf16.msra.mxu0 0
      %2630 = vmatprep.subr.bf16.mxu0 0
      %2631 = vmatpush2.bf16.msra.mxu0 0
      %2632 = vmatprep.subr.bf16.mxu0 0
      %2633 = vmatpush2.bf16.msra.mxu0 0
      %2634 = vmatprep.mubr.bf16.mxu0 0
      %2635 = vmatmul.mubr.bf16.gmra.mxu0 %v2550
      %v2636 = vpop.f32.mrf.mxu0
      %v2637 = vadd.f32 0.0, %v2636
      %v2638 = vpop.f32.mrf.mxu0
      %v2639 = vpop.f32.mrf.mxu0
      %v2640 = vpop.f32.mrf.mxu0
      %2641 = vdwg.mxu0
      %v2642 = vadd.f32 %v2535, %v2596
      %v2643 = vadd.f32 %v2536, %v2598
      %v2644 = vadd.f32 %v2537, %v2637
      %s2645 = scalar_lea.vmem %s4, 16
      %v2646 = vld [vmem:[%s2645] sm:$0x3]
      %2647 = vrot.lane.b32.xlu0 %v934, 44
      %v2648 = vpop.permute.xlu0 %2647
      %2649 = vrot.lane.b32.xlu0 %v942, 44
      %v2650 = vpop.permute.xlu0 %2649
      %2651 = vrot.lane.b32.xlu0 %v941, 44
      %v2652 = vpop.permute.xlu0 %2651
      %vm2653 = vcmask 359424
      %v2654 = vsel %vm2653, %v2648, %v2650
      %v2655 = vsel %vm2653, %v2650, %v2652
      %v2657 = vsel %vm952, %v2646, 0
      %v2660 = vsel %vm956, %v2654, 0
      %v2663 = vsel %vm956, %v2655, 0
      %v2666 = vsel %vm956, %v2652, 0
      %2668 = vmatprep.subr.bf16.mxu0 0
      %2669 = vmatpush1.bf16.msra.mxu0 0
      %2670 = vmatprep.subr.bf16.mxu0 0
      %2671 = vmatpush1.bf16.msra.mxu0 0
      %2672 = vmatprep.subr.bf16.mxu0 0
      %2673 = vmatpush1.bf16.msra.mxu0 0
      %2674 = vmatprep.subr.bf16.mxu0 0
      %2675 = vmatpush1.bf16.msra.mxu0 0
      %2676 = vmatprep.subr.bf16.mxu0 0
      %2677 = vmatpush1.bf16.msra.mxu0 0
      %2678 = vmatprep.subr.bf16.mxu0 0
      %2679 = vmatpush1.bf16.msra.mxu0 0
      %2680 = vmatprep.subr.bf16.mxu0 0
      %2681 = vmatpush1.bf16.msra.mxu0 0
      %2682 = vmatprep.subr.bf16.mxu0 %v2663
      %2683 = vmatpush1.bf16.msra.mxu0 %v2660
      %2684 = vmatprep.subr.bf16.mxu0 0
      %2685 = vmatpush2.bf16.msra.mxu0 0
      %2686 = vmatprep.subr.bf16.mxu0 0
      %2687 = vmatpush2.bf16.msra.mxu0 0
      %2688 = vmatprep.subr.bf16.mxu0 0
      %2689 = vmatpush2.bf16.msra.mxu0 0
      %2690 = vmatprep.subr.bf16.mxu0 0
      %2691 = vmatpush2.bf16.msra.mxu0 0
      %2692 = vmatprep.subr.bf16.mxu0 0
      %2693 = vmatpush2.bf16.msra.mxu0 0
      %2694 = vmatprep.subr.bf16.mxu0 0
      %2695 = vmatpush2.bf16.msra.mxu0 0
      %2696 = vmatprep.subr.bf16.mxu0 0
      %2697 = vmatpush2.bf16.msra.mxu0 0
      %2698 = vmatprep.subr.bf16.mxu0 0
      %2699 = vmatpush2.bf16.msra.mxu0 0
      %2700 = vmatprep.mubr.bf16.mxu0 0
      %2701 = vmatmul.mubr.bf16.gmra.mxu0 %v2657
      %v2702 = vpop.f32.mrf.mxu0
      %v2703 = vadd.f32 0.0, %v2702
      %v2704 = vpop.f32.mrf.mxu0
      %v2705 = vadd.f32 0.0, %v2704
      %v2706 = vpop.f32.mrf.mxu0
      %v2707 = vpop.f32.mrf.mxu0
      %2708 = vdwg.mxu0
      %2709 = vmatprep.subr.bf16.mxu0 0
      %2710 = vmatpush1.bf16.msra.mxu0 0
      %2711 = vmatprep.subr.bf16.mxu0 0
      %2712 = vmatpush1.bf16.msra.mxu0 0
      %2713 = vmatprep.subr.bf16.mxu0 0
      %2714 = vmatpush1.bf16.msra.mxu0 0
      %2715 = vmatprep.subr.bf16.mxu0 0
      %2716 = vmatpush1.bf16.msra.mxu0 0
      %2717 = vmatprep.subr.bf16.mxu0 0
      %2718 = vmatpush1.bf16.msra.mxu0 0
      %2719 = vmatprep.subr.bf16.mxu0 0
      %2720 = vmatpush1.bf16.msra.mxu0 0
      %2721 = vmatprep.subr.bf16.mxu0 0
      %2722 = vmatpush1.bf16.msra.mxu0 0
      %2723 = vmatprep.subr.bf16.mxu0 0
      %2724 = vmatpush1.bf16.msra.mxu0 %v2666
      %2725 = vmatprep.subr.bf16.mxu0 0
      %2726 = vmatpush2.bf16.msra.mxu0 0
      %2727 = vmatprep.subr.bf16.mxu0 0
      %2728 = vmatpush2.bf16.msra.mxu0 0
      %2729 = vmatprep.subr.bf16.mxu0 0
      %2730 = vmatpush2.bf16.msra.mxu0 0
      %2731 = vmatprep.subr.bf16.mxu0 0
      %2732 = vmatpush2.bf16.msra.mxu0 0
      %2733 = vmatprep.subr.bf16.mxu0 0
      %2734 = vmatpush2.bf16.msra.mxu0 0
      %2735 = vmatprep.subr.bf16.mxu0 0
      %2736 = vmatpush2.bf16.msra.mxu0 0
      %2737 = vmatprep.subr.bf16.mxu0 0
      %2738 = vmatpush2.bf16.msra.mxu0 0
      %2739 = vmatprep.subr.bf16.mxu0 0
      %2740 = vmatpush2.bf16.msra.mxu0 0
      %2741 = vmatprep.mubr.bf16.mxu0 0
      %2742 = vmatmul.mubr.bf16.gmra.mxu0 %v2657
      %v2743 = vpop.f32.mrf.mxu0
      %v2744 = vadd.f32 0.0, %v2743
      %v2745 = vpop.f32.mrf.mxu0
      %v2746 = vpop.f32.mrf.mxu0
      %v2747 = vpop.f32.mrf.mxu0
      %2748 = vdwg.mxu0
      %v2749 = vadd.f32 %v2642, %v2703
      %v2750 = vadd.f32 %v2643, %v2705
      %v2751 = vadd.f32 %v2644, %v2744
      %s2752 = scalar_lea.vmem %s5, 16
      %v2753 = vld [vmem:[%s2752] sm:$0x3]
      %2754 = vrot.lane.b32.xlu0 %v915, 86
      %v2755 = vpop.permute.xlu0 %2754
      %2756 = vrot.lane.b32.xlu0 %v916, 86
      %v2757 = vpop.permute.xlu0 %2756
      %2758 = vrot.lane.b32.xlu0 %v917, 86
      %v2759 = vpop.permute.xlu0 %2758
      %v2760 = vsel %vm949, %v2755, %v2757
      %v2761 = vsel %vm949, %v2757, %v2759
      %v2763 = vsel %vm952, %v2753, 0
      %v2766 = vsel %vm956, %v2760, 0
      %v2769 = vsel %vm956, %v2761, 0
      %v2772 = vsel %vm956, %v2759, 0
      %2774 = vmatprep.subr.bf16.mxu0 0
      %2775 = vmatpush1.bf16.msra.mxu0 0
      %2776 = vmatprep.subr.bf16.mxu0 0
      %2777 = vmatpush1.bf16.msra.mxu0 0
      %2778 = vmatprep.subr.bf16.mxu0 0
      %2779 = vmatpush1.bf16.msra.mxu0 0
      %2780 = vmatprep.subr.bf16.mxu0 0
      %2781 = vmatpush1.bf16.msra.mxu0 0
      %2782 = vmatprep.subr.bf16.mxu0 0
      %2783 = vmatpush1.bf16.msra.mxu0 0
      %2784 = vmatprep.subr.bf16.mxu0 0
      %2785 = vmatpush1.bf16.msra.mxu0 0
      %2786 = vmatprep.subr.bf16.mxu0 0
      %2787 = vmatpush1.bf16.msra.mxu0 0
      %2788 = vmatprep.subr.bf16.mxu0 %v2769
      %2789 = vmatpush1.bf16.msra.mxu0 %v2766
      %2790 = vmatprep.subr.bf16.mxu0 0
      %2791 = vmatpush2.bf16.msra.mxu0 0
      %2792 = vmatprep.subr.bf16.mxu0 0
      %2793 = vmatpush2.bf16.msra.mxu0 0
      %2794 = vmatprep.subr.bf16.mxu0 0
      %2795 = vmatpush2.bf16.msra.mxu0 0
      %2796 = vmatprep.subr.bf16.mxu0 0
      %2797 = vmatpush2.bf16.msra.mxu0 0
      %2798 = vmatprep.subr.bf16.mxu0 0
      %2799 = vmatpush2.bf16.msra.mxu0 0
      %2800 = vmatprep.subr.bf16.mxu0 0
      %2801 = vmatpush2.bf16.msra.mxu0 0
      %2802 = vmatprep.subr.bf16.mxu0 0
      %2803 = vmatpush2.bf16.msra.mxu0 0
      %2804 = vmatprep.subr.bf16.mxu0 0
      %2805 = vmatpush2.bf16.msra.mxu0 0
      %2806 = vmatprep.mubr.bf16.mxu0 0
      %2807 = vmatmul.mubr.bf16.gmra.mxu0 %v2763
      %v2808 = vpop.f32.mrf.mxu0
      %v2809 = vadd.f32 0.0, %v2808
      %v2810 = vpop.f32.mrf.mxu0
      %v2811 = vadd.f32 0.0, %v2810
      %v2812 = vpop.f32.mrf.mxu0
      %v2813 = vpop.f32.mrf.mxu0
      %2814 = vdwg.mxu0
      %2815 = vmatprep.subr.bf16.mxu0 0
      %2816 = vmatpush1.bf16.msra.mxu0 0
      %2817 = vmatprep.subr.bf16.mxu0 0
      %2818 = vmatpush1.bf16.msra.mxu0 0
      %2819 = vmatprep.subr.bf16.mxu0 0
      %2820 = vmatpush1.bf16.msra.mxu0 0
      %2821 = vmatprep.subr.bf16.mxu0 0
      %2822 = vmatpush1.bf16.msra.mxu0 0
      %2823 = vmatprep.subr.bf16.mxu0 0
      %2824 = vmatpush1.bf16.msra.mxu0 0
      %2825 = vmatprep.subr.bf16.mxu0 0
      %2826 = vmatpush1.bf16.msra.mxu0 0
      %2827 = vmatprep.subr.bf16.mxu0 0
      %2828 = vmatpush1.bf16.msra.mxu0 0
      %2829 = vmatprep.subr.bf16.mxu0 0
      %2830 = vmatpush1.bf16.msra.mxu0 %v2772
      %2831 = vmatprep.subr.bf16.mxu0 0
      %2832 = vmatpush2.bf16.msra.mxu0 0
      %2833 = vmatprep.subr.bf16.mxu0 0
      %2834 = vmatpush2.bf16.msra.mxu0 0
      %2835 = vmatprep.subr.bf16.mxu0 0
      %2836 = vmatpush2.bf16.msra.mxu0 0
      %2837 = vmatprep.subr.bf16.mxu0 0
      %2838 = vmatpush2.bf16.msra.mxu0 0
      %2839 = vmatprep.subr.bf16.mxu0 0
      %2840 = vmatpush2.bf16.msra.mxu0 0
      %2841 = vmatprep.subr.bf16.mxu0 0
      %2842 = vmatpush2.bf16.msra.mxu0 0
      %2843 = vmatprep.subr.bf16.mxu0 0
      %2844 = vmatpush2.bf16.msra.mxu0 0
      %2845 = vmatprep.subr.bf16.mxu0 0
      %2846 = vmatpush2.bf16.msra.mxu0 0
      %2847 = vmatprep.mubr.bf16.mxu0 0
      %2848 = vmatmul.mubr.bf16.gmra.mxu0 %v2763
      %v2849 = vpop.f32.mrf.mxu0
      %v2850 = vadd.f32 0.0, %v2849
      %v2851 = vpop.f32.mrf.mxu0
      %v2852 = vpop.f32.mrf.mxu0
      %v2853 = vpop.f32.mrf.mxu0
      %2854 = vdwg.mxu0
      %v2855 = vadd.f32 %v2749, %v2809
      %v2856 = vadd.f32 %v2750, %v2811
      %v2857 = vadd.f32 %v2751, %v2850
      %v2858 = vmax.f32 %v2855, 0.0
      %v2859 = vmax.f32 %v2856, 0.0
      %v2860 = vmax.f32 %v2857, 0.0
      %v2861 = vpack.c.bf16 %v2858, %v2858
      %v2862 = vpack.c.bf16 %v2859, %v2859
      %v2863 = vpack.c.bf16 %v2860, %v2860
      %v2864 = vld [vmem:[%s8] sm:$0xf]
      %2866 = vset.pattern.permute.xlu0 0
      %2867 = vperm.xlu0 %2866, %v2864
      %v2868 = vpop.permute.xlu0 %2867
      %v2870 = vld [vmem:[%s7] sm:$0x3]
      %v2872 = vsel %vm952, %v2870, 0
      %v2875 = vsel %vm956, %v2861, 0
      %v2878 = vsel %vm956, %v2862, 0
      %2880 = vmatprep.subr.bf16.mxu0 0
      %2881 = vmatpush1.bf16.msra.mxu0 0
      %2882 = vmatprep.subr.bf16.mxu0 0
      %2883 = vmatpush1.bf16.msra.mxu0 0
      %2884 = vmatprep.subr.bf16.mxu0 0
      %2885 = vmatpush1.bf16.msra.mxu0 0
      %2886 = vmatprep.subr.bf16.mxu0 0
      %2887 = vmatpush1.bf16.msra.mxu0 0
      %2888 = vmatprep.subr.bf16.mxu0 0
      %2889 = vmatpush1.bf16.msra.mxu0 0
      %2890 = vmatprep.subr.bf16.mxu0 0
      %2891 = vmatpush1.bf16.msra.mxu0 0
      %2892 = vmatprep.subr.bf16.mxu0 0
      %2893 = vmatpush1.bf16.msra.mxu0 0
      %2894 = vmatprep.subr.bf16.mxu0 %v2878
      %2895 = vmatpush1.bf16.msra.mxu0 %v2875
      %2896 = vmatprep.subr.bf16.mxu0 0
      %2897 = vmatpush2.bf16.msra.mxu0 0
      %2898 = vmatprep.subr.bf16.mxu0 0
      %2899 = vmatpush2.bf16.msra.mxu0 0
      %2900 = vmatprep.subr.bf16.mxu0 0
      %2901 = vmatpush2.bf16.msra.mxu0 0
      %2902 = vmatprep.subr.bf16.mxu0 0
      %2903 = vmatpush2.bf16.msra.mxu0 0
      %2904 = vmatprep.subr.bf16.mxu0 0
      %2905 = vmatpush2.bf16.msra.mxu0 0
      %2906 = vmatprep.subr.bf16.mxu0 0
      %2907 = vmatpush2.bf16.msra.mxu0 0
      %2908 = vmatprep.subr.bf16.mxu0 0
      %2909 = vmatpush2.bf16.msra.mxu0 0
      %2910 = vmatprep.subr.bf16.mxu0 0
      %2911 = vmatpush2.bf16.msra.mxu0 0
      %2912 = vmatprep.mubr.bf16.mxu0 0
      %2913 = vmatmul.mubr.bf16.gmra.mxu0 %v2872
      %v2914 = vpop.f32.mrf.mxu0
      %v2915 = vadd.f32 0.0, %v2914
      %v2916 = vpop.f32.mrf.mxu0
      %v2917 = vadd.f32 0.0, %v2916
      %v2918 = vpop.f32.mrf.mxu0
      %v2919 = vpop.f32.mrf.mxu0
      %2920 = vdwg.mxu0
      %v2921 = vadd.f32 %v2868, %v2915
      %v2922 = vadd.f32 %v2868, %v2917
      %s2923 = scalar_lea.vmem %s7, 2
      %v2924 = vld [vmem:[%s2923] sm:$0x3]
      %2927 = vrot.lane.b32.xlu0 %v2861, 127
      %v2928 = vpop.permute.xlu0 %2927
      %2929 = vrot.lane.b32.xlu0 %v2862, 127
      %v2930 = vpop.permute.xlu0 %2929
      %v2931 = vsel %vm602, %v2928, %v2930
      %v2933 = vsel %vm952, %v2924, 0
      %v2936 = vsel %vm956, %v2931, 0
      %v2939 = vsel %vm956, %v2930, 0
      %2941 = vmatprep.subr.bf16.mxu0 0
      %2942 = vmatpush1.bf16.msra.mxu0 0
      %2943 = vmatprep.subr.bf16.mxu0 0
      %2944 = vmatpush1.bf16.msra.mxu0 0
      %2945 = vmatprep.subr.bf16.mxu0 0
      %2946 = vmatpush1.bf16.msra.mxu0 0
      %2947 = vmatprep.subr.bf16.mxu0 0
      %2948 = vmatpush1.bf16.msra.mxu0 0
      %2949 = vmatprep.subr.bf16.mxu0 0
      %2950 = vmatpush1.bf16.msra.mxu0 0
      %2951 = vmatprep.subr.bf16.mxu0 0
      %2952 = vmatpush1.bf16.msra.mxu0 0
      %2953 = vmatprep.subr.bf16.mxu0 0
      %2954 = vmatpush1.bf16.msra.mxu0 0
      %2955 = vmatprep.subr.bf16.mxu0 %v2939
      %2956 = vmatpush1.bf16.msra.mxu0 %v2936
      %2957 = vmatprep.subr.bf16.mxu0 0
      %2958 = vmatpush2.bf16.msra.mxu0 0
      %2959 = vmatprep.subr.bf16.mxu0 0
      %2960 = vmatpush2.bf16.msra.mxu0 0
      %2961 = vmatprep.subr.bf16.mxu0 0
      %2962 = vmatpush2.bf16.msra.mxu0 0
      %2963 = vmatprep.subr.bf16.mxu0 0
      %2964 = vmatpush2.bf16.msra.mxu0 0
      %2965 = vmatprep.subr.bf16.mxu0 0
      %2966 = vmatpush2.bf16.msra.mxu0 0
      %2967 = vmatprep.subr.bf16.mxu0 0
      %2968 = vmatpush2.bf16.msra.mxu0 0
      %2969 = vmatprep.subr.bf16.mxu0 0
      %2970 = vmatpush2.bf16.msra.mxu0 0
      %2971 = vmatprep.subr.bf16.mxu0 0
      %2972 = vmatpush2.bf16.msra.mxu0 0
      %2973 = vmatprep.mubr.bf16.mxu0 0
      %2974 = vmatmul.mubr.bf16.gmra.mxu0 %v2933
      %v2975 = vpop.f32.mrf.mxu0
      %v2976 = vadd.f32 0.0, %v2975
      %v2977 = vpop.f32.mrf.mxu0
      %v2978 = vadd.f32 0.0, %v2977
      %v2979 = vpop.f32.mrf.mxu0
      %v2980 = vpop.f32.mrf.mxu0
      %2981 = vdwg.mxu0
      %v2982 = vadd.f32 %v2921, %v2976
      %v2983 = vadd.f32 %v2922, %v2978
      %s2984 = scalar_lea.vmem %s7, 4
      %v2985 = vld [vmem:[%s2984] sm:$0x3]
      %2986 = vrot.lane.b32.xlu0 %v2861, 126
      %v2987 = vpop.permute.xlu0 %2986
      %2988 = vrot.lane.b32.xlu0 %v2862, 126
      %v2989 = vpop.permute.xlu0 %2988
      %v2990 = vsel %vm1478, %v2987, %v2989
      %v2992 = vsel %vm952, %v2985, 0
      %v2995 = vsel %vm956, %v2990, 0
      %v2998 = vsel %vm956, %v2989, 0
      %3000 = vmatprep.subr.bf16.mxu0 0
      %3001 = vmatpush1.bf16.msra.mxu0 0
      %3002 = vmatprep.subr.bf16.mxu0 0
      %3003 = vmatpush1.bf16.msra.mxu0 0
      %3004 = vmatprep.subr.bf16.mxu0 0
      %3005 = vmatpush1.bf16.msra.mxu0 0
      %3006 = vmatprep.subr.bf16.mxu0 0
      %3007 = vmatpush1.bf16.msra.mxu0 0
      %3008 = vmatprep.subr.bf16.mxu0 0
      %3009 = vmatpush1.bf16.msra.mxu0 0
      %3010 = vmatprep.subr.bf16.mxu0 0
      %3011 = vmatpush1.bf16.msra.mxu0 0
      %3012 = vmatprep.subr.bf16.mxu0 0
      %3013 = vmatpush1.bf16.msra.mxu0 0
      %3014 = vmatprep.subr.bf16.mxu0 %v2998
      %3015 = vmatpush1.bf16.msra.mxu0 %v2995
      %3016 = vmatprep.subr.bf16.mxu0 0
      %3017 = vmatpush2.bf16.msra.mxu0 0
      %3018 = vmatprep.subr.bf16.mxu0 0
      %3019 = vmatpush2.bf16.msra.mxu0 0
      %3020 = vmatprep.subr.bf16.mxu0 0
      %3021 = vmatpush2.bf16.msra.mxu0 0
      %3022 = vmatprep.subr.bf16.mxu0 0
      %3023 = vmatpush2.bf16.msra.mxu0 0
      %3024 = vmatprep.subr.bf16.mxu0 0
      %3025 = vmatpush2.bf16.msra.mxu0 0
      %3026 = vmatprep.subr.bf16.mxu0 0
      %3027 = vmatpush2.bf16.msra.mxu0 0
      %3028 = vmatprep.subr.bf16.mxu0 0
      %3029 = vmatpush2.bf16.msra.mxu0 0
      %3030 = vmatprep.subr.bf16.mxu0 0
      %3031 = vmatpush2.bf16.msra.mxu0 0
      %3032 = vmatprep.mubr.bf16.mxu0 0
      %3033 = vmatmul.mubr.bf16.gmra.mxu0 %v2992
      %v3034 = vpop.f32.mrf.mxu0
      %v3035 = vadd.f32 0.0, %v3034
      %v3036 = vpop.f32.mrf.mxu0
      %v3037 = vadd.f32 0.0, %v3036
      %v3038 = vpop.f32.mrf.mxu0
      %v3039 = vpop.f32.mrf.mxu0
      %3040 = vdwg.mxu0
      %v3041 = vadd.f32 %v2982, %v3035
      %v3042 = vadd.f32 %v2983, %v3037
      %s3043 = scalar_lea.vmem %s7, 6
      %v3044 = vld [vmem:[%s3043] sm:$0x3]
      %3046 = vrot.lane.b32.xlu0 %v2861, 108
      %v3047 = vpop.permute.xlu0 %3046
      %3048 = vrot.lane.b32.xlu0 %v2862, 108
      %v3049 = vpop.permute.xlu0 %3048
      %3050 = vrot.lane.b32.xlu0 %v2863, 108
      %v3051 = vpop.permute.xlu0 %3050
      %v3052 = vsel %vm709, %v3047, %v3049
      %v3053 = vsel %vm709, %v3049, %v3051
      %v3055 = vsel %vm952, %v3044, 0
      %v3058 = vsel %vm956, %v3052, 0
      %v3061 = vsel %vm956, %v3053, 0
      %3063 = vmatprep.subr.bf16.mxu0 0
      %3064 = vmatpush1.bf16.msra.mxu0 0
      %3065 = vmatprep.subr.bf16.mxu0 0
      %3066 = vmatpush1.bf16.msra.mxu0 0
      %3067 = vmatprep.subr.bf16.mxu0 0
      %3068 = vmatpush1.bf16.msra.mxu0 0
      %3069 = vmatprep.subr.bf16.mxu0 0
      %3070 = vmatpush1.bf16.msra.mxu0 0
      %3071 = vmatprep.subr.bf16.mxu0 0
      %3072 = vmatpush1.bf16.msra.mxu0 0
      %3073 = vmatprep.subr.bf16.mxu0 0
      %3074 = vmatpush1.bf16.msra.mxu0 0
      %3075 = vmatprep.subr.bf16.mxu0 0
      %3076 = vmatpush1.bf16.msra.mxu0 0
      %3077 = vmatprep.subr.bf16.mxu0 %v3061
      %3078 = vmatpush1.bf16.msra.mxu0 %v3058
      %3079 = vmatprep.subr.bf16.mxu0 0
      %3080 = vmatpush2.bf16.msra.mxu0 0
      %3081 = vmatprep.subr.bf16.mxu0 0
      %3082 = vmatpush2.bf16.msra.mxu0 0
      %3083 = vmatprep.subr.bf16.mxu0 0
      %3084 = vmatpush2.bf16.msra.mxu0 0
      %3085 = vmatprep.subr.bf16.mxu0 0
      %3086 = vmatpush2.bf16.msra.mxu0 0
      %3087 = vmatprep.subr.bf16.mxu0 0
      %3088 = vmatpush2.bf16.msra.mxu0 0
      %3089 = vmatprep.subr.bf16.mxu0 0
      %3090 = vmatpush2.bf16.msra.mxu0 0
      %3091 = vmatprep.subr.bf16.mxu0 0
      %3092 = vmatpush2.bf16.msra.mxu0 0
      %3093 = vmatprep.subr.bf16.mxu0 0
      %3094 = vmatpush2.bf16.msra.mxu0 0
      %3095 = vmatprep.mubr.bf16.mxu0 0
      %3096 = vmatmul.mubr.bf16.gmra.mxu0 %v3055
      %v3097 = vpop.f32.mrf.mxu0
      %v3098 = vadd.f32 0.0, %v3097
      %v3099 = vpop.f32.mrf.mxu0
      %v3100 = vadd.f32 0.0, %v3099
      %v3101 = vpop.f32.mrf.mxu0
      %v3102 = vpop.f32.mrf.mxu0
      %3103 = vdwg.mxu0
      %v3104 = vadd.f32 %v3041, %v3098
      %v3105 = vadd.f32 %v3042, %v3100
      %s3106 = scalar_lea.vmem %s7, 8
      %v3107 = vld [vmem:[%s3106] sm:$0x3]
      %3108 = vrot.lane.b32.xlu0 %v2861, 107
      %v3109 = vpop.permute.xlu0 %3108
      %3110 = vrot.lane.b32.xlu0 %v2862, 107
      %v3111 = vpop.permute.xlu0 %3110
      %3112 = vrot.lane.b32.xlu0 %v2863, 107
      %v3113 = vpop.permute.xlu0 %3112
      %v3114 = vsel %vm816, %v3109, %v3111
      %v3115 = vsel %vm816, %v3111, %v3113
      %v3117 = vsel %vm952, %v3107, 0
      %v3120 = vsel %vm956, %v3114, 0
      %v3123 = vsel %vm956, %v3115, 0
      %3125 = vmatprep.subr.bf16.mxu0 0
      %3126 = vmatpush1.bf16.msra.mxu0 0
      %3127 = vmatprep.subr.bf16.mxu0 0
      %3128 = vmatpush1.bf16.msra.mxu0 0
      %3129 = vmatprep.subr.bf16.mxu0 0
      %3130 = vmatpush1.bf16.msra.mxu0 0
      %3131 = vmatprep.subr.bf16.mxu0 0
      %3132 = vmatpush1.bf16.msra.mxu0 0
      %3133 = vmatprep.subr.bf16.mxu0 0
      %3134 = vmatpush1.bf16.msra.mxu0 0
      %3135 = vmatprep.subr.bf16.mxu0 0
      %3136 = vmatpush1.bf16.msra.mxu0 0
      %3137 = vmatprep.subr.bf16.mxu0 0
      %3138 = vmatpush1.bf16.msra.mxu0 0
      %3139 = vmatprep.subr.bf16.mxu0 %v3123
      %3140 = vmatpush1.bf16.msra.mxu0 %v3120
      %3141 = vmatprep.subr.bf16.mxu0 0
      %3142 = vmatpush2.bf16.msra.mxu0 0
      %3143 = vmatprep.subr.bf16.mxu0 0
      %3144 = vmatpush2.bf16.msra.mxu0 0
      %3145 = vmatprep.subr.bf16.mxu0 0
      %3146 = vmatpush2.bf16.msra.mxu0 0
      %3147 = vmatprep.subr.bf16.mxu0 0
      %3148 = vmatpush2.bf16.msra.mxu0 0
      %3149 = vmatprep.subr.bf16.mxu0 0
      %3150 = vmatpush2.bf16.msra.mxu0 0
      %3151 = vmatprep.subr.bf16.mxu0 0
      %3152 = vmatpush2.bf16.msra.mxu0 0
      %3153 = vmatprep.subr.bf16.mxu0 0
      %3154 = vmatpush2.bf16.msra.mxu0 0
      %3155 = vmatprep.subr.bf16.mxu0 0
      %3156 = vmatpush2.bf16.msra.mxu0 0
      %3157 = vmatprep.mubr.bf16.mxu0 0
      %3158 = vmatmul.mubr.bf16.gmra.mxu0 %v3117
      %v3159 = vpop.f32.mrf.mxu0
      %v3160 = vadd.f32 0.0, %v3159
      %v3161 = vpop.f32.mrf.mxu0
      %v3162 = vadd.f32 0.0, %v3161
      %v3163 = vpop.f32.mrf.mxu0
      %v3164 = vpop.f32.mrf.mxu0
      %3165 = vdwg.mxu0
      %v3166 = vadd.f32 %v3104, %v3160
      %v3167 = vadd.f32 %v3105, %v3162
      %s3168 = scalar_lea.vmem %s7, 10
      %v3169 = vld [vmem:[%s3168] sm:$0x3]
      %3170 = vrot.lane.b32.xlu0 %v2861, 106
      %v3171 = vpop.permute.xlu0 %3170
      %3172 = vrot.lane.b32.xlu0 %v2862, 106
      %v3173 = vpop.permute.xlu0 %3172
      %3174 = vrot.lane.b32.xlu0 %v2863, 106
      %v3175 = vpop.permute.xlu0 %3174
      %v3176 = vsel %vm2118, %v3171, %v3173
      %v3177 = vsel %vm2118, %v3173, %v3175
      %v3179 = vsel %vm952, %v3169, 0
      %v3182 = vsel %vm956, %v3176, 0
      %v3185 = vsel %vm956, %v3177, 0
      %3187 = vmatprep.subr.bf16.mxu0 0
      %3188 = vmatpush1.bf16.msra.mxu0 0
      %3189 = vmatprep.subr.bf16.mxu0 0
      %3190 = vmatpush1.bf16.msra.mxu0 0
      %3191 = vmatprep.subr.bf16.mxu0 0
      %3192 = vmatpush1.bf16.msra.mxu0 0
      %3193 = vmatprep.subr.bf16.mxu0 0
      %3194 = vmatpush1.bf16.msra.mxu0 0
      %3195 = vmatprep.subr.bf16.mxu0 0
      %3196 = vmatpush1.bf16.msra.mxu0 0
      %3197 = vmatprep.subr.bf16.mxu0 0
      %3198 = vmatpush1.bf16.msra.mxu0 0
      %3199 = vmatprep.subr.bf16.mxu0 0
      %3200 = vmatpush1.bf16.msra.mxu0 0
      %3201 = vmatprep.subr.bf16.mxu0 %v3185
      %3202 = vmatpush1.bf16.msra.mxu0 %v3182
      %3203 = vmatprep.subr.bf16.mxu0 0
      %3204 = vmatpush2.bf16.msra.mxu0 0
      %3205 = vmatprep.subr.bf16.mxu0 0
      %3206 = vmatpush2.bf16.msra.mxu0 0
      %3207 = vmatprep.subr.bf16.mxu0 0
      %3208 = vmatpush2.bf16.msra.mxu0 0
      %3209 = vmatprep.subr.bf16.mxu0 0
      %3210 = vmatpush2.bf16.msra.mxu0 0
      %3211 = vmatprep.subr.bf16.mxu0 0
      %3212 = vmatpush2.bf16.msra.mxu0 0
      %3213 = vmatprep.subr.bf16.mxu0 0
      %3214 = vmatpush2.bf16.msra.mxu0 0
      %3215 = vmatprep.subr.bf16.mxu0 0
      %3216 = vmatpush2.bf16.msra.mxu0 0
      %3217 = vmatprep.subr.bf16.mxu0 0
      %3218 = vmatpush2.bf16.msra.mxu0 0
      %3219 = vmatprep.mubr.bf16.mxu0 0
      %3220 = vmatmul.mubr.bf16.gmra.mxu0 %v3179
      %v3221 = vpop.f32.mrf.mxu0
      %v3222 = vadd.f32 0.0, %v3221
      %v3223 = vpop.f32.mrf.mxu0
      %v3224 = vadd.f32 0.0, %v3223
      %v3225 = vpop.f32.mrf.mxu0
      %v3226 = vpop.f32.mrf.mxu0
      %3227 = vdwg.mxu0
      %v3228 = vadd.f32 %v3166, %v3222
      %v3229 = vadd.f32 %v3167, %v3224
      %s3230 = scalar_lea.vmem %s7, 12
      %v3231 = vld [vmem:[%s3230] sm:$0x3]
      %3232 = vrot.lane.b32.xlu0 %v2861, 88
      %v3233 = vpop.permute.xlu0 %3232
      %3234 = vrot.lane.b32.xlu0 %v2862, 88
      %v3235 = vpop.permute.xlu0 %3234
      %3236 = vrot.lane.b32.xlu0 %v2863, 88
      %v3237 = vpop.permute.xlu0 %3236
      %v3238 = vsel %vm2332, %v3233, %v3235
      %v3239 = vsel %vm2332, %v3235, %v3237
      %v3241 = vsel %vm952, %v3231, 0
      %v3244 = vsel %vm956, %v3238, 0
      %v3247 = vsel %vm956, %v3239, 0
      %3249 = vmatprep.subr.bf16.mxu0 0
      %3250 = vmatpush1.bf16.msra.mxu0 0
      %3251 = vmatprep.subr.bf16.mxu0 0
      %3252 = vmatpush1.bf16.msra.mxu0 0
      %3253 = vmatprep.subr.bf16.mxu0 0
      %3254 = vmatpush1.bf16.msra.mxu0 0
      %3255 = vmatprep.subr.bf16.mxu0 0
      %3256 = vmatpush1.bf16.msra.mxu0 0
      %3257 = vmatprep.subr.bf16.mxu0 0
      %3258 = vmatpush1.bf16.msra.mxu0 0
      %3259 = vmatprep.subr.bf16.mxu0 0
      %3260 = vmatpush1.bf16.msra.mxu0 0
      %3261 = vmatprep.subr.bf16.mxu0 0
      %3262 = vmatpush1.bf16.msra.mxu0 0
      %3263 = vmatprep.subr.bf16.mxu0 %v3247
      %3264 = vmatpush1.bf16.msra.mxu0 %v3244
      %3265 = vmatprep.subr.bf16.mxu0 0
      %3266 = vmatpush2.bf16.msra.mxu0 0
      %3267 = vmatprep.subr.bf16.mxu0 0
      %3268 = vmatpush2.bf16.msra.mxu0 0
      %3269 = vmatprep.subr.bf16.mxu0 0
      %3270 = vmatpush2.bf16.msra.mxu0 0
      %3271 = vmatprep.subr.bf16.mxu0 0
      %3272 = vmatpush2.bf16.msra.mxu0 0
      %3273 = vmatprep.subr.bf16.mxu0 0
      %3274 = vmatpush2.bf16.msra.mxu0 0
      %3275 = vmatprep.subr.bf16.mxu0 0
      %3276 = vmatpush2.bf16.msra.mxu0 0
      %3277 = vmatprep.subr.bf16.mxu0 0
      %3278 = vmatpush2.bf16.msra.mxu0 0
      %3279 = vmatprep.subr.bf16.mxu0 0
      %3280 = vmatpush2.bf16.msra.mxu0 0
      %3281 = vmatprep.mubr.bf16.mxu0 0
      %3282 = vmatmul.mubr.bf16.gmra.mxu0 %v3241
      %v3283 = vpop.f32.mrf.mxu0
      %v3284 = vadd.f32 0.0, %v3283
      %v3285 = vpop.f32.mrf.mxu0
      %v3286 = vadd.f32 0.0, %v3285
      %v3287 = vpop.f32.mrf.mxu0
      %v3288 = vpop.f32.mrf.mxu0
      %3289 = vdwg.mxu0
      %v3290 = vadd.f32 %v3228, %v3284
      %v3291 = vadd.f32 %v3229, %v3286
      %s3292 = scalar_lea.vmem %s7, 14
      %v3293 = vld [vmem:[%s3292] sm:$0x3]
      %3294 = vrot.lane.b32.xlu0 %v2861, 87
      %v3295 = vpop.permute.xlu0 %3294
      %3296 = vrot.lane.b32.xlu0 %v2862, 87
      %v3297 = vpop.permute.xlu0 %3296
      %3298 = vrot.lane.b32.xlu0 %v2863, 87
      %v3299 = vpop.permute.xlu0 %3298
      %v3300 = vsel %vm2546, %v3295, %v3297
      %v3301 = vsel %vm2546, %v3297, %v3299
      %v3303 = vsel %vm952, %v3293, 0
      %v3306 = vsel %vm956, %v3300, 0
      %v3309 = vsel %vm956, %v3301, 0
      %3311 = vmatprep.subr.bf16.mxu0 0
      %3312 = vmatpush1.bf16.msra.mxu0 0
      %3313 = vmatprep.subr.bf16.mxu0 0
      %3314 = vmatpush1.bf16.msra.mxu0 0
      %3315 = vmatprep.subr.bf16.mxu0 0
      %3316 = vmatpush1.bf16.msra.mxu0 0
      %3317 = vmatprep.subr.bf16.mxu0 0
      %3318 = vmatpush1.bf16.msra.mxu0 0
      %3319 = vmatprep.subr.bf16.mxu0 0
      %3320 = vmatpush1.bf16.msra.mxu0 0
      %3321 = vmatprep.subr.bf16.mxu0 0
      %3322 = vmatpush1.bf16.msra.mxu0 0
      %3323 = vmatprep.subr.bf16.mxu0 0
      %3324 = vmatpush1.bf16.msra.mxu0 0
      %3325 = vmatprep.subr.bf16.mxu0 %v3309
      %3326 = vmatpush1.bf16.msra.mxu0 %v3306
      %3327 = vmatprep.subr.bf16.mxu0 0
      %3328 = vmatpush2.bf16.msra.mxu0 0
      %3329 = vmatprep.subr.bf16.mxu0 0
      %3330 = vmatpush2.bf16.msra.mxu0 0
      %3331 = vmatprep.subr.bf16.mxu0 0
      %3332 = vmatpush2.bf16.msra.mxu0 0
      %3333 = vmatprep.subr.bf16.mxu0 0
      %3334 = vmatpush2.bf16.msra.mxu0 0
      %3335 = vmatprep.subr.bf16.mxu0 0
      %3336 = vmatpush2.bf16.msra.mxu0 0
      %3337 = vmatprep.subr.bf16.mxu0 0
      %3338 = vmatpush2.bf16.msra.mxu0 0
      %3339 = vmatprep.subr.bf16.mxu0 0
      %3340 = vmatpush2.bf16.msra.mxu0 0
      %3341 = vmatprep.subr.bf16.mxu0 0
      %3342 = vmatpush2.bf16.msra.mxu0 0
      %3343 = vmatprep.mubr.bf16.mxu0 0
      %3344 = vmatmul.mubr.bf16.gmra.mxu0 %v3303
      %v3345 = vpop.f32.mrf.mxu0
      %v3346 = vadd.f32 0.0, %v3345
      %v3347 = vpop.f32.mrf.mxu0
      %v3348 = vadd.f32 0.0, %v3347
      %v3349 = vpop.f32.mrf.mxu0
      %v3350 = vpop.f32.mrf.mxu0
      %3351 = vdwg.mxu0
      %v3352 = vadd.f32 %v3290, %v3346
      %v3353 = vadd.f32 %v3291, %v3348
      %s3354 = scalar_lea.vmem %s7, 16
      %v3355 = vld [vmem:[%s3354] sm:$0x3]
      %3356 = vrot.lane.b32.xlu0 %v2861, 86
      %v3357 = vpop.permute.xlu0 %3356
      %3358 = vrot.lane.b32.xlu0 %v2862, 86
      %v3359 = vpop.permute.xlu0 %3358
      %3360 = vrot.lane.b32.xlu0 %v2863, 86
      %v3361 = vpop.permute.xlu0 %3360
      %v3362 = vsel %vm949, %v3357, %v3359
      %v3363 = vsel %vm949, %v3359, %v3361
      %v3365 = vsel %vm952, %v3355, 0
      %v3368 = vsel %vm956, %v3362, 0
      %v3371 = vsel %vm956, %v3363, 0
      %3373 = vmatprep.subr.bf16.mxu0 0
      %3374 = vmatpush1.bf16.msra.mxu0 0
      %3375 = vmatprep.subr.bf16.mxu0 0
      %3376 = vmatpush1.bf16.msra.mxu0 0
      %3377 = vmatprep.subr.bf16.mxu0 0
      %3378 = vmatpush1.bf16.msra.mxu0 0
      %3379 = vmatprep.subr.bf16.mxu0 0
      %3380 = vmatpush1.bf16.msra.mxu0 0
      %3381 = vmatprep.subr.bf16.mxu0 0
      %3382 = vmatpush1.bf16.msra.mxu0 0
      %3383 = vmatprep.subr.bf16.mxu0 0
      %3384 = vmatpush1.bf16.msra.mxu0 0
      %3385 = vmatprep.subr.bf16.mxu0 0
      %3386 = vmatpush1.bf16.msra.mxu0 0
      %3387 = vmatprep.subr.bf16.mxu0 %v3371
      %3388 = vmatpush1.bf16.msra.mxu0 %v3368
      %3389 = vmatprep.subr.bf16.mxu0 0
      %3390 = vmatpush2.bf16.msra.mxu0 0
      %3391 = vmatprep.subr.bf16.mxu0 0
      %3392 = vmatpush2.bf16.msra.mxu0 0
      %3393 = vmatprep.subr.bf16.mxu0 0
      %3394 = vmatpush2.bf16.msra.mxu0 0
      %3395 = vmatprep.subr.bf16.mxu0 0
      %3396 = vmatpush2.bf16.msra.mxu0 0
      %3397 = vmatprep.subr.bf16.mxu0 0
      %3398 = vmatpush2.bf16.msra.mxu0 0
      %3399 = vmatprep.subr.bf16.mxu0 0
      %3400 = vmatpush2.bf16.msra.mxu0 0
      %3401 = vmatprep.subr.bf16.mxu0 0
      %3402 = vmatpush2.bf16.msra.mxu0 0
      %3403 = vmatprep.subr.bf16.mxu0 0
      %3404 = vmatpush2.bf16.msra.mxu0 0
      %3405 = vmatprep.mubr.bf16.mxu0 0
      %3406 = vmatmul.mubr.bf16.gmra.mxu0 %v3365
      %v3407 = vpop.f32.mrf.mxu0
      %v3408 = vadd.f32 0.0, %v3407
      %v3409 = vpop.f32.mrf.mxu0
      %v3410 = vadd.f32 0.0, %v3409
      %v3411 = vpop.f32.mrf.mxu0
      %v3412 = vpop.f32.mrf.mxu0
      %3413 = vdwg.mxu0
      %v3414 = vadd.f32 %v3352, %v3408
      %v3415 = vadd.f32 %v3353, %v3410
      %v3416 = vmax.f32 %v3414, 0.0
      %v3417 = vmax.f32 %v3415, 0.0
      %v3420 = vcombine.low %v3416, %v3417
      %vm3422 = vcmask 916484
      %vm3423 = vmor %vm3422, %vm497
      %3424 = vst.msk [vmem:[%s352] sm:$0xff] %vm3423, %v3420
      %p3425 = scmp.lt.s32.totalorder %s20, 1
      %s3426 = scalar_select %p3425, %s20, 1
      %s3427 = smul.addr %s3426, 2
      %s3428 = smul.addr %s3427, 4
      %s3429 = scalar_lea.vmem %s9, %s3428
      // Predicated region
      $region57: #{unet_up_forward.1} parent=55 // pred_check
        %p3430 = pneg %p237
      $region58: #{unet_up_forward.1} parent=55 // pred_check_branch
        %3432 = sbr.rel (%p3430) target = $region60
      $region59: #{unet_up_forward.1} parent=55 // pred_region
        _
      $region60: #{unet_up_forward.1} parent=55 // pred_fallthru
        _
    $region56: #{unet_up_forward.1} parent=5 // pred_fallthru
      _
    %p3433 = scmp.le.s32.totalorder 2, %s15
    // Predicated region
    $region61: #{unet_up_forward.1} parent=5 // pred_check
      %p3434 = pneg %p3433
    $region62: #{unet_up_forward.1} parent=5 // pred_check_branch
      %3436 = sbr.rel (%p3434) target = $region64
    $region63: #{unet_up_forward.1} parent=5 // pred_region
      %s3437 = ssub.s32 %s15, 2
      // Predicated region
      $region65: #{unet_up_forward.1} parent=63 // pred_check
        %p3438 = pneg %p243
      $region66: #{unet_up_forward.1} parent=63 // pred_check_branch
        %3440 = sbr.rel (%p3438) target = $region68
      $region67: #{unet_up_forward.1} parent=63 // pred_region
        %p3441 = scmp.lt.s32.totalorder %s21, 1
        %s3442 = scalar_select %p3441, %s21, 1
        %s3443 = smul.addr %s3442, 2
        %s3444 = smul.addr %s3443, 4
        %s3445 = scalar_lea.vmem %s9, %s3444
      $region68: #{unet_up_forward.1} parent=63 // pred_fallthru
        _
    $region64: #{unet_up_forward.1} parent=5 // pred_fallthru
      _
  $region6: #{unet_up_forward.1} parent=0 // loop_footer
    %s19 = sadd.s32 1, %s15
  $region7: #{unet_up_forward.1} parent=0 // loop_footer_branch
    %14 = sbr.rel target = $region3
  $region8: #{unet_up_forward.1} parent=0 // loop_exit
    _

</llo_original>
